<compile_context>
chip_gen: v7x
topology: tpu7x:2x2x1
jax: 0.10.0
libtpu: 0.0.40
codegen_flags: <defaults>
</compile_context>

<pallas_src>
import functools
import math

import jax
import jax.numpy as jnp
from jax import lax
from jax.experimental import pallas as pl
from jax.experimental.pallas import tpu as pltpu

_MXU_DTYPE = jnp.bfloat16      # MXU operand dtype (f32 accumulation everywhere)
_W_DTYPE = jnp.bfloat16        # storage dtype for big matmul weights
_ACT_DTYPE = jnp.bfloat16      # inter-kernel activation dtype


def _vmem_limit_bytes():
    cap = None
    try:
        info = pltpu.get_tpu_info()
        for name in ("vmem_capacity_bytes", "vmem_size_bytes", "vmem_bytes"):
            cap = getattr(info, name, None)
            if cap:
                break
    except Exception:
        cap = None
    if not cap:
        cap = 64 * 1024 * 1024          # conservative fallback (v7x physical)
    return int(cap * 0.75)              # ~96 MiB v5e/v6e, ~48 MiB v7x


_VMEM_LIMIT = _vmem_limit_bytes()
_TM = 512 if _VMEM_LIMIT >= 64 * 1024 * 1024 else 256   # row-tile target
_TN = 512                                                # col-tile target


def _pick_block(dim, target, align):
    """Largest block <= target that is a multiple of `align` and divides dim;
    falls back to the full dim (always a legal block shape)."""
    if dim <= target:
        return dim
    t = (min(target, dim) // align) * align
    while t >= align:
        if dim % t == 0:
            return t
        t -= align
    return dim


def _n_align(n):
    return 256 if n % 256 == 0 else 128


# ------------------- Fused [LayerNorm] + Linear + [residual] -----------------

def _fused_linear_kernel(x_ref, *rest, apply_ln, add_residual, eps):
    idx = 0
    if apply_ln:
        g_ref, bln_ref = rest[0], rest[1]
        idx = 2
    w_ref, b_ref = rest[idx], rest[idx + 1]
    idx += 2
    if add_residual:
        r_ref = rest[idx]
        idx += 1
    o_ref = rest[idx]

    if apply_ln:
        # Annotated-Transformer LayerNorm: unbiased std (N-1), eps added to std.
        x = x_ref[...].astype(jnp.float32)
        mean = jnp.mean(x, axis=-1, keepdims=True)
        c = x - mean
        var = jnp.sum(c * c, axis=-1, keepdims=True) / (x.shape[-1] - 1)
        xn = g_ref[...] * c / (jnp.sqrt(var) + eps) + bln_ref[...]
        x_mxu = xn.astype(_MXU_DTYPE)
    else:
        x_mxu = x_ref[...].astype(_MXU_DTYPE)

    y = jnp.dot(x_mxu, w_ref[...], preferred_element_type=jnp.float32)
    y = y + b_ref[...]
    if add_residual:
        y = y + r_ref[...].astype(jnp.float32)
    o_ref[...] = y.astype(o_ref.dtype)


def pallas_fused_linear(x2d, w, b, *, gamma=None, beta=None, residual=None,
                        eps=1e-6, out_dtype=None):
    """y = [LN(x)] @ w + b [+ residual], one pass, bf16 in/out, f32 accumulate."""
    M, K = x2d.shape
    N = w.shape[1]
    out_dtype = out_dtype or x2d.dtype
    bm = _pick_block(M, _TM, 8)
    bn = _pick_block(N, _TN, _n_align(N))
    apply_ln = gamma is not None
    add_res = residual is not None

    operands = [x2d]
    in_specs = [pl.BlockSpec((bm, K), lambda i, j: (i, 0))]
    if apply_ln:
        operands += [gamma.reshape(1, K).astype(jnp.float32),
                     beta.reshape(1, K).astype(jnp.float32)]
        in_specs += [pl.BlockSpec((1, K), lambda i, j: (0, 0)),
                     pl.BlockSpec((1, K), lambda i, j: (0, 0))]
    operands += [w, b.reshape(1, N).astype(jnp.float32)]
    in_specs += [pl.BlockSpec((K, bn), lambda i, j: (0, j)),
                 pl.BlockSpec((1, bn), lambda i, j: (0, j))]
    if add_res:
        operands.append(residual)
        in_specs.append(pl.BlockSpec((bm, bn), lambda i, j: (i, j)))

    kernel = functools.partial(_fused_linear_kernel, apply_ln=apply_ln,
                               add_residual=add_res, eps=eps)
    return pl.pallas_call(
        kernel,
        out_shape=jax.ShapeDtypeStruct((M, N), out_dtype),
        grid=(M // bm, N // bn),
        in_specs=in_specs,
        out_specs=pl.BlockSpec((bm, bn), lambda i, j: (i, j)),
        compiler_params=pltpu.CompilerParams(
            dimension_semantics=("parallel", "parallel"),
            vmem_limit_bytes=_VMEM_LIMIT),
    )(*operands)


# -------------------- Fused LayerNorm + FFN + residual ------------------------

def _ln_ffn_kernel(x_ref, g_ref, bln_ref, w1_ref, b1_ref, w2_ref, b2_ref,
                   o_ref, *, eps):
    x = x_ref[...].astype(jnp.float32)
    mean = jnp.mean(x, axis=-1, keepdims=True)
    c = x - mean
    var = jnp.sum(c * c, axis=-1, keepdims=True) / (x.shape[-1] - 1)
    xn = g_ref[...] * c / (jnp.sqrt(var) + eps) + bln_ref[...]

    h = jnp.dot(xn.astype(_MXU_DTYPE), w1_ref[...],
                preferred_element_type=jnp.float32)
    h = jnp.maximum(h + b1_ref[...], 0.0)                 # bias + ReLU in f32
    y = jnp.dot(h.astype(_MXU_DTYPE), w2_ref[...],
                preferred_element_type=jnp.float32)
    y = y + b2_ref[...] + x                               # residual (pre-LN x)
    o_ref[...] = y.astype(o_ref.dtype)


def pallas_ln_ffn(x2d, gamma, beta, w1, b1, w2, b2, *, eps=1e-6):
    M, D = x2d.shape
    F = w1.shape[1]
    bm = _pick_block(M, _TM, 8)
    return pl.pallas_call(
        functools.partial(_ln_ffn_kernel, eps=eps),
        out_shape=jax.ShapeDtypeStruct((M, D), x2d.dtype),
        grid=(M // bm,),
        in_specs=[
            pl.BlockSpec((bm, D), lambda i: (i, 0)),
            pl.BlockSpec((1, D), lambda i: (0, 0)),
            pl.BlockSpec((1, D), lambda i: (0, 0)),
            pl.BlockSpec((D, F), lambda i: (0, 0)),       # weights stay resident
            pl.BlockSpec((1, F), lambda i: (0, 0)),
            pl.BlockSpec((F, D), lambda i: (0, 0)),
            pl.BlockSpec((1, D), lambda i: (0, 0)),
        ],
        out_specs=pl.BlockSpec((bm, D), lambda i: (i, 0)),
        compiler_params=pltpu.CompilerParams(
            dimension_semantics=("parallel",),
            vmem_limit_bytes=_VMEM_LIMIT),
    )(x2d, gamma.reshape(1, D).astype(jnp.float32),
      beta.reshape(1, D).astype(jnp.float32),
      w1, b1.reshape(1, F).astype(jnp.float32),
      w2, b2.reshape(1, D).astype(jnp.float32))


# ----------------------------- Standalone LayerNorm ---------------------------
# (only used for the encoder/decoder final norms, which are not followed by a
#  matmul we control)

def _layernorm_kernel(x_ref, g_ref, b_ref, o_ref, *, eps):
    x = x_ref[...].astype(jnp.float32)
    mean = jnp.mean(x, axis=-1, keepdims=True)
    c = x - mean
    var = jnp.sum(c * c, axis=-1, keepdims=True) / (x.shape[-1] - 1)
    y = g_ref[...] * c / (jnp.sqrt(var) + eps) + b_ref[...]
    o_ref[...] = y.astype(o_ref.dtype)


def pallas_layernorm(x2d, gamma, beta, *, eps=1e-6, out_dtype=None, tm=512):
    M, D = x2d.shape
    bm = _pick_block(M, tm, 8)
    return pl.pallas_call(
        functools.partial(_layernorm_kernel, eps=eps),
        out_shape=jax.ShapeDtypeStruct((M, D), out_dtype or x2d.dtype),
        grid=(M // bm,),
        in_specs=[pl.BlockSpec((bm, D), lambda i: (i, 0)),
                  pl.BlockSpec((1, D), lambda i: (0, 0)),
                  pl.BlockSpec((1, D), lambda i: (0, 0))],
        out_specs=pl.BlockSpec((bm, D), lambda i: (i, 0)),
        compiler_params=pltpu.CompilerParams(
            dimension_semantics=("parallel",),
            vmem_limit_bytes=_VMEM_LIMIT),
    )(x2d, gamma.reshape(1, D).astype(jnp.float32),
      beta.reshape(1, D).astype(jnp.float32))


# ------------------------- Flash multi-head attention -------------------------

def _flash_attn_kernel(q_ref, k_ref, v_ref, m_ref, o_ref, m_sc, l_sc, acc_sc):
    ki = pl.program_id(3)

    @pl.when(ki == 0)
    def _():
        m_sc[...] = jnp.full(m_sc.shape, -jnp.inf, jnp.float32)
        l_sc[...] = jnp.zeros(l_sc.shape, jnp.float32)
        acc_sc[...] = jnp.zeros(acc_sc.shape, jnp.float32)

    q = q_ref[0, 0]                     # (bq, dk) bf16, 1/sqrt(dk) folded into wq
    k = k_ref[0, 0]                     # (bk, dk) bf16
    v = v_ref[0, 0]                     # (bk, dk) bf16

    # QK^T without materializing a transpose: contract the last dims.
    s = lax.dot_general(q, k, (((1,), (1,)), ((), ())),
                        preferred_element_type=jnp.float32)     # (bq, bk) f32
    keep = m_ref[0] != 0                                        # (1|bq, bk)
    s = jnp.where(keep, s, -1e9)                                # masked_fill(==0)

    m_prev = m_sc[...]
    m_new = jnp.maximum(m_prev, jnp.max(s, axis=-1, keepdims=True))
    alpha = jnp.exp(m_prev - m_new)
    p = jnp.exp(s - m_new)
    l_sc[...] = alpha * l_sc[...] + jnp.sum(p, axis=-1, keepdims=True)
    acc_sc[...] = alpha * acc_sc[...] + lax.dot_general(
        p.astype(v.dtype), v, (((1,), (0,)), ((), ())),
        preferred_element_type=jnp.float32)
    m_sc[...] = m_new

    @pl.when(ki == pl.num_programs(3) - 1)
    def _():
        inv = pl.reciprocal(l_sc[...], approx=True)
        o_ref[0, 0] = (acc_sc[...] * inv).astype(o_ref.dtype)


def pallas_mha(q, k, v, mask):
    """q/k/v: (B, H, T, dk) bf16 head-major; mask: (B, 1|Tq, Tk) int8.
    Returns (B, H, Tq, dk) bf16."""
    B, H, Tq, dk = q.shape
    Tk = k.shape[2]
    Tm = mask.shape[1]
    bq = _pick_block(Tq, 256, 8)
    bk = _pick_block(Tk, 512, 128)
    mask_tiled = Tm != 1

    if mask_tiled:
        mask_spec = pl.BlockSpec((1, bq, bk), lambda b, h, qi, ki: (b, qi, ki))
    else:
        mask_spec = pl.BlockSpec((1, 1, bk), lambda b, h, qi, ki: (b, 0, ki))

    return pl.pallas_call(
        _flash_attn_kernel,
        out_shape=jax.ShapeDtypeStruct((B, H, Tq, dk), _ACT_DTYPE),
        grid=(B, H, Tq // bq, Tk // bk),
        in_specs=[
            pl.BlockSpec((1, 1, bq, dk), lambda b, h, qi, ki: (b, h, qi, 0)),
            pl.BlockSpec((1, 1, bk, dk), lambda b, h, qi, ki: (b, h, ki, 0)),
            pl.BlockSpec((1, 1, bk, dk), lambda b, h, qi, ki: (b, h, ki, 0)),
            mask_spec,
        ],
        out_specs=pl.BlockSpec((1, 1, bq, dk), lambda b, h, qi, ki: (b, h, qi, 0)),
        scratch_shapes=[pltpu.VMEM((bq, 1), jnp.float32),
                        pltpu.VMEM((bq, 1), jnp.float32),
                        pltpu.VMEM((bq, dk), jnp.float32)],
        compiler_params=pltpu.CompilerParams(
            dimension_semantics=("parallel", "parallel", "parallel", "arbitrary"),
            vmem_limit_bytes=_VMEM_LIMIT),
    )(q, k, v, mask)


# --------------------------- Parameter construction ---------------------------

def _xavier_uniform(key, shape):
    fan_in, fan_out = shape[0], shape[1]
    limit = math.sqrt(6.0 / (fan_in + fan_out))
    return jax.random.uniform(key, shape, jnp.float32, -limit, limit)


def init_transformer_params(key, src_vocab, tgt_vocab, n_layers, d_model, d_ff,
                            heads):
    keys = iter(jax.random.split(key, 4096))
    dk = d_model // heads
    qscale = 1.0 / math.sqrt(dk)        # folded into the Q projection

    def ln():
        return {"g": jnp.ones((d_model,), jnp.float32),
                "b": jnp.zeros((d_model,), jnp.float32)}

    def ff():
        return {"w1": _xavier_uniform(next(keys), (d_model, d_ff)).astype(_W_DTYPE),
                "b1": jnp.zeros((d_ff,), jnp.float32),
                "w2": _xavier_uniform(next(keys), (d_ff, d_model)).astype(_W_DTYPE),
                "b2": jnp.zeros((d_model,), jnp.float32)}

    def self_attn():
        wq = _xavier_uniform(next(keys), (d_model, d_model)) * qscale
        wk = _xavier_uniform(next(keys), (d_model, d_model))
        wv = _xavier_uniform(next(keys), (d_model, d_model))
        wo = _xavier_uniform(next(keys), (d_model, d_model))
        return {"wqkv": jnp.concatenate([wq, wk, wv], axis=1).astype(_W_DTYPE),
                "bqkv": jnp.zeros((3 * d_model,), jnp.float32),
                "wo": wo.astype(_W_DTYPE),
                "bo": jnp.zeros((d_model,), jnp.float32)}

    def cross_attn():
        wq = _xavier_uniform(next(keys), (d_model, d_model)) * qscale
        wk = _xavier_uniform(next(keys), (d_model, d_model))
        wv = _xavier_uniform(next(keys), (d_model, d_model))
        wo = _xavier_uniform(next(keys), (d_model, d_model))
        return {"wq": wq.astype(_W_DTYPE),
                "bq": jnp.zeros((d_model,), jnp.float32),
                "wkv": jnp.concatenate([wk, wv], axis=1).astype(_W_DTYPE),
                "bkv": jnp.zeros((2 * d_model,), jnp.float32),
                "wo": wo.astype(_W_DTYPE),
                "bo": jnp.zeros((d_model,), jnp.float32)}

    enc_layers = [{"self_attn": self_attn(), "ff": ff(), "ln1": ln(), "ln2": ln()}
                  for _ in range(n_layers)]
    dec_layers = [{"self_attn": self_attn(), "src_attn": cross_attn(), "ff": ff(),
                   "ln1": ln(), "ln2": ln(), "ln3": ln()} for _ in range(n_layers)]
    return {
        "src_emb": _xavier_uniform(next(keys), (src_vocab, d_model)),
        "tgt_emb": _xavier_uniform(next(keys), (tgt_vocab, d_model)),
        "enc_layers": enc_layers, "enc_norm": ln(),
        "dec_layers": dec_layers, "dec_norm": ln(),
    }


def positional_encoding(max_len, d_model):
    pos = jnp.arange(max_len, dtype=jnp.float32)[:, None]
    div = jnp.exp(jnp.arange(0, d_model, 2, dtype=jnp.float32)
                  * (-math.log(10000.0) / d_model))
    pe = jnp.zeros((max_len, d_model), jnp.float32)
    pe = pe.at[:, 0::2].set(jnp.sin(pos * div))
    pe = pe.at[:, 1::2].set(jnp.cos(pos * div))
    return pe


# -------------------------------- Model (glue) --------------------------------

def _layernorm3d(p, x, out_dtype=None):
    B, T, D = x.shape
    return pallas_layernorm(x.reshape(-1, D), p["g"], p["b"],
                            out_dtype=out_dtype).reshape(B, T, D)


def _attn_sublayer(ap, lnp, x, mask, heads):
    """x + wo(MHA(LN(x), LN(x), LN(x), mask))   (self-attention, pre-LN)."""
    B, T, D = x.shape
    H, dk = heads, D // heads
    x2d = x.reshape(B * T, D)
    # LN fused into the fused QKV projection.
    qkv = pallas_fused_linear(x2d, ap["wqkv"], ap["bqkv"],
                              gamma=lnp["g"], beta=lnp["b"])            # (BT, 3D)
    qkv = jnp.transpose(qkv.reshape(B, T, 3, H, dk), (2, 0, 3, 1, 4))   # (3,B,H,T,dk)
    o = pallas_mha(qkv[0], qkv[1], qkv[2], mask)                        # (B,H,T,dk)
    o2d = jnp.transpose(o, (0, 2, 1, 3)).reshape(B * T, D)
    # Residual add fused into the output projection epilogue.
    y = pallas_fused_linear(o2d, ap["wo"], ap["bo"], residual=x2d)
    return y.reshape(B, T, D)


def _cross_attn_sublayer(ap, lnp, x, memory, mask, heads):
    """x + wo(MHA(LN(x), memory, memory, mask))   (cross-attention, pre-LN)."""
    B, Tq, D = x.shape
    Tk = memory.shape[1]
    H, dk = heads, D // heads
    x2d = x.reshape(B * Tq, D)
    q = pallas_fused_linear(x2d, ap["wq"], ap["bq"],
                            gamma=lnp["g"], beta=lnp["b"])              # (BTq, D)
    q = jnp.transpose(q.reshape(B, Tq, H, dk), (0, 2, 1, 3))            # (B,H,Tq,dk)
    kv = pallas_fused_linear(memory.reshape(B * Tk, D), ap["wkv"], ap["bkv"])
    kv = jnp.transpose(kv.reshape(B, Tk, 2, H, dk), (2, 0, 3, 1, 4))    # (2,B,H,Tk,dk)
    o = pallas_mha(q, kv[0], kv[1], mask)
    o2d = jnp.transpose(o, (0, 2, 1, 3)).reshape(B * Tq, D)
    y = pallas_fused_linear(o2d, ap["wo"], ap["bo"], residual=x2d)
    return y.reshape(B, Tq, D)


def _ffn_sublayer(fp, lnp, x):
    """x + ff2(relu(ff1(LN(x))))  — all in one kernel (hidden stays in VMEM)."""
    B, T, D = x.shape
    y = pallas_ln_ffn(x.reshape(-1, D), lnp["g"], lnp["b"],
                      fp["w1"], fp["b1"], fp["w2"], fp["b2"])
    return y.reshape(B, T, D)


def _encoder_layer(p, x, mask, heads):
    x = _attn_sublayer(p["self_attn"], p["ln1"], x, mask, heads)
    x = _ffn_sublayer(p["ff"], p["ln2"], x)
    return x


def _decoder_layer(p, x, memory, src_mask, tgt_mask, heads):
    x = _attn_sublayer(p["self_attn"], p["ln1"], x, tgt_mask, heads)
    x = _cross_attn_sublayer(p["src_attn"], p["ln2"], x, memory, src_mask, heads)
    x = _ffn_sublayer(p["ff"], p["ln3"], x)
    return x


def transformer_forward(params, src, tgt, src_mask, tgt_mask, pe, *, d_model, heads):
    # Masks stay un-broadcast over heads; int8 to minimize DMA; compared ==0 in
    # the attention kernel (masked_fill(mask == 0, -1e9) semantics).
    src_mask = (src_mask != 0).astype(jnp.int8)
    tgt_mask = (tgt_mask != 0).astype(jnp.int8)

    # Embedding gather + scale + positional encoding are cheap JAX glue.
    # TODO(synk): dropout omitted everywhere (module run in eval mode).
    src_x = (jnp.take(params["src_emb"], src, axis=0) * math.sqrt(d_model)
             + pe[None, :src.shape[1], :]).astype(_ACT_DTYPE)
    tgt_x = (jnp.take(params["tgt_emb"], tgt, axis=0) * math.sqrt(d_model)
             + pe[None, :tgt.shape[1], :]).astype(_ACT_DTYPE)

    x = src_x
    for lp in params["enc_layers"]:
        x = _encoder_layer(lp, x, src_mask, heads)
    memory = _layernorm3d(params["enc_norm"], x, out_dtype=_ACT_DTYPE)

    y = tgt_x
    for lp in params["dec_layers"]:
        y = _decoder_layer(lp, y, memory, src_mask, tgt_mask, heads)
    # generator=None -> identity; return final norm in f32.
    return _layernorm3d(params["dec_norm"], y, out_dtype=jnp.float32)


# ----------------------------------- main --------------------------------------

if __name__ == "__main__":
    src_vocab, tgt_vocab = 16, 16
    n_layers, d_model, d_ff, heads = 2, 128, 256, 4
    B, S_src, S_tgt = 2, 8, 8

    key = jax.random.PRNGKey(0)
    kp, ks, kt = jax.random.split(key, 3)

    params = init_transformer_params(kp, src_vocab, tgt_vocab, n_layers,
                                     d_model, d_ff, heads)
    pe = positional_encoding(64, d_model)

    src = jax.random.randint(ks, (B, S_src), 0, src_vocab)
    tgt = jax.random.randint(kt, (B, S_tgt), 0, tgt_vocab)
    src_mask = jnp.ones((B, 1, S_src), jnp.float32)
    tgt_mask = jnp.broadcast_to(
        jnp.tril(jnp.ones((S_tgt, S_tgt), jnp.float32))[None], (B, S_tgt, S_tgt))

    fwd = jax.jit(functools.partial(transformer_forward,
                                    d_model=d_model, heads=heads))
    out = fwd(params, src, tgt, src_mask, tgt_mask, pe)
    out = jax.block_until_ready(out)

    assert out.shape == (B, S_tgt, d_model)
    assert bool(jnp.all(jnp.isfinite(out)))
    print("KERNEL_OK")
</pallas_src>

<mosaic_0001>
module attributes {stable_mosaic.version = 11 : i64} {
  func.func @_fused_linear_kernel(%arg0: i32, %arg1: i32, %arg2: memref<16x128xbf16, #tpu.memory_space<vmem>>, %arg3: memref<1x128xf32, #tpu.memory_space<vmem>>, %arg4: memref<1x128xf32, #tpu.memory_space<vmem>>, %arg5: memref<128x384xbf16, #tpu.memory_space<vmem>>, %arg6: memref<1x384xf32, #tpu.memory_space<vmem>>, %arg7: memref<16x384xbf16, #tpu.memory_space<vmem>>) attributes {dimension_semantics = [#tpu.dimension_semantics<parallel>, #tpu.dimension_semantics<parallel>], iteration_bounds = array<i64: 1, 1>, scalar_prefetch = 0 : i64, scratch_operands = 0 : i64, tpu.core_type = #tpu.core_type<tc>, window_params = [{transform_indices = @transform_0, window_bounds = array<i64: 16, 128>}, {pipeline_mode = #tpu.pipeline_mode<synchronous>, transform_indices = @transform_1, window_bounds = array<i64: 1, 128>}, {pipeline_mode = #tpu.pipeline_mode<synchronous>, transform_indices = @transform_2, window_bounds = array<i64: 1, 128>}, {transform_indices = @transform_3, window_bounds = array<i64: 128, 384>}, {transform_indices = @transform_4, window_bounds = array<i64: 1, 384>}, {transform_indices = @transform_5, window_bounds = array<i64: 16, 384>}]} {
    %c0 = arith.constant 0 : index
    %c0_0 = arith.constant 0 : index
    %0 = vector.load %arg2[%c0, %c0_0] : memref<16x128xbf16, #tpu.memory_space<vmem>>, vector<16x128xbf16>
    %1 = arith.extf %0 : vector<16x128xbf16> to vector<16x128xf32>
    %cst = arith.constant dense<0.000000e+00> : vector<16xf32>
    %2 = vector.multi_reduction <add>, %1, %cst [1] : vector<16x128xf32> to vector<16xf32>
    %3 = vector.shape_cast %2 : vector<16xf32> to vector<16x1xf32>
    %cst_1 = arith.constant 1.280000e+02 : f32
    %4 = vector.broadcast %cst_1 : f32 to vector<16x1xf32>
    %5 = arith.divf %3, %4 : vector<16x1xf32>
    %6 = vector.broadcast %5 : vector<16x1xf32> to vector<16x128xf32>
    %7 = arith.subf %1, %6 : vector<16x128xf32>
    %8 = arith.mulf %7, %7 : vector<16x128xf32>
    %cst_2 = arith.constant dense<0.000000e+00> : vector<16xf32>
    %9 = vector.multi_reduction <add>, %8, %cst_2 [1] : vector<16x128xf32> to vector<16xf32>
    %10 = vector.shape_cast %9 : vector<16xf32> to vector<16x1xf32>
    %cst_3 = arith.constant 1.270000e+02 : f32
    %11 = vector.broadcast %cst_3 : f32 to vector<16x1xf32>
    %12 = arith.divf %10, %11 : vector<16x1xf32>
    %c0_4 = arith.constant 0 : index
    %c0_5 = arith.constant 0 : index
    %13 = vector.load %arg3[%c0_4, %c0_5] : memref<1x128xf32, #tpu.memory_space<vmem>>, vector<1x128xf32>
    %14 = vector.broadcast %13 : vector<1x128xf32> to vector<16x128xf32>
    %15 = arith.mulf %14, %7 : vector<16x128xf32>
    %16 = math.sqrt %12 : vector<16x1xf32>
    %cst_6 = arith.constant 9.99999997E-7 : f32
    %17 = vector.broadcast %cst_6 : f32 to vector<16x1xf32>
    %18 = arith.addf %16, %17 : vector<16x1xf32>
    %19 = vector.broadcast %18 : vector<16x1xf32> to vector<16x128xf32>
    %20 = arith.divf %15, %19 : vector<16x128xf32>
    %c0_7 = arith.constant 0 : index
    %c0_8 = arith.constant 0 : index
    %21 = vector.load %arg4[%c0_7, %c0_8] : memref<1x128xf32, #tpu.memory_space<vmem>>, vector<1x128xf32>
    %22 = vector.broadcast %21 : vector<1x128xf32> to vector<16x128xf32>
    %23 = arith.addf %20, %22 : vector<16x128xf32>
    %24 = arith.truncf %23 : vector<16x128xf32> to vector<16x128xbf16>
    %c0_9 = arith.constant 0 : index
    %c0_10 = arith.constant 0 : index
    %25 = vector.load %arg5[%c0_9, %c0_10] : memref<128x384xbf16, #tpu.memory_space<vmem>>, vector<128x384xbf16>
    %cst_11 = arith.constant dense<0.000000e+00> : vector<16x384xf32>
    %26 = tpu.matmul %24, %25, %cst_11 {dimension_numbers = #tpu.dot_dimension_numbers<[1], [0], [0], [1], [0, 0, 1, 1], [], []>} : vector<16x128xbf16>, vector<128x384xbf16>, vector<16x384xf32> -> vector<16x384xf32>
    %c0_12 = arith.constant 0 : index
    %c0_13 = arith.constant 0 : index
    %27 = vector.load %arg6[%c0_12, %c0_13] : memref<1x384xf32, #tpu.memory_space<vmem>>, vector<1x384xf32>
    %28 = vector.broadcast %27 : vector<1x384xf32> to vector<16x384xf32>
    %29 = arith.addf %26, %28 : vector<16x384xf32>
    %30 = arith.truncf %29 : vector<16x384xf32> to vector<16x384xbf16>
    %c0_14 = arith.constant 0 : index
    %c0_15 = arith.constant 0 : index
    %31 = vector.load %arg7[%c0_14, %c0_15] : memref<16x384xbf16, #tpu.memory_space<vmem>>, vector<16x384xbf16>
    tpu.vector_store %arg7[%c0_14, %c0_15], %30 {strides = array<i32>} : memref<16x384xbf16, #tpu.memory_space<vmem>>, vector<16x384xbf16>,
    return
  }
  func.func @transform_0(%arg0: i32, %arg1: i32) -> (i32, i32) {
    %c0_i32 = arith.constant 0 : i32
    %c0_i32_0 = arith.constant 0 : i32
    return %arg0, %c0_i32 : i32, i32
  }
  func.func @transform_1(%arg0: i32, %arg1: i32) -> (i32, i32) {
    %c0_i32 = arith.constant 0 : i32
    %c0_i32_0 = arith.constant 0 : i32
    %c0_i32_1 = arith.constant 0 : i32
    return %c0_i32, %c0_i32_0 : i32, i32
  }
  func.func @transform_2(%arg0: i32, %arg1: i32) -> (i32, i32) {
    %c0_i32 = arith.constant 0 : i32
    %c0_i32_0 = arith.constant 0 : i32
    %c0_i32_1 = arith.constant 0 : i32
    return %c0_i32, %c0_i32_0 : i32, i32
  }
  func.func @transform_3(%arg0: i32, %arg1: i32) -> (i32, i32) {
    %c0_i32 = arith.constant 0 : i32
    %c0_i32_0 = arith.constant 0 : i32
    return %c0_i32, %arg1 : i32, i32
  }
  func.func @transform_4(%arg0: i32, %arg1: i32) -> (i32, i32) {
    %c0_i32 = arith.constant 0 : i32
    %c0_i32_0 = arith.constant 0 : i32
    return %c0_i32, %arg1 : i32, i32
  }
  func.func @transform_5(%arg0: i32, %arg1: i32) -> (i32, i32) {
    %c0_i32 = arith.constant 0 : i32
    return %arg0, %arg1 : i32, i32
  }
}

module attributes {stable_mosaic.version = 11 : i64} {
  func.func @_flash_attn_kernel(%arg0: i32, %arg1: i32, %arg2: i32, %arg3: i32, %arg4: memref<1x1x8x32xbf16, #tpu.memory_space<vmem>>, %arg5: memref<1x1x8x32xbf16, #tpu.memory_space<vmem>>, %arg6: memref<1x1x8x32xbf16, #tpu.memory_space<vmem>>, %arg7: memref<1x8x8xi8, #tpu.memory_space<vmem>>, %arg8: memref<1x1x8x32xbf16, #tpu.memory_space<vmem>>, %arg9: memref<8x1xf32, #tpu.memory_space<vmem>>, %arg10: memref<8x1xf32, #tpu.memory_space<vmem>>, %arg11: memref<8x32xf32, #tpu.memory_space<vmem>>) attributes {dimension_semantics = [#tpu.dimension_semantics<parallel>, #tpu.dimension_semantics<parallel>, #tpu.dimension_semantics<parallel>, #tpu.dimension_semantics<arbitrary>], iteration_bounds = array<i64: 2, 4, 1, 1>, scalar_prefetch = 0 : i64, scratch_operands = 3 : i64, tpu.core_type = #tpu.core_type<tc>, window_params = [{transform_indices = @transform_0, window_bounds = array<i64: 1, 1, 8, 32>}, {transform_indices = @transform_1, window_bounds = array<i64: 1, 1, 8, 32>}, {transform_indices = @transform_2, window_bounds = array<i64: 1, 1, 8, 32>}, {transform_indices = @transform_3, window_bounds = array<i64: 1, 8, 8>}, {transform_indices = @transform_4, window_bounds = array<i64: 1, 1, 8, 32>}]} {
    %c0_i32 = arith.constant 0 : i32
    %0 = arith.cmpi eq, %arg3, %c0_i32 : i32
    %1 = arith.extui %0 : i1 to i32
    %c0_i32_0 = arith.constant 0 : i32
    %2 = arith.cmpi ne, %1, %c0_i32_0 : i32
    scf.if %2 {
      %cst_33 = arith.constant 0xFF800000 : f32
      %42 = vector.broadcast %cst_33 : f32 to vector<8x1xf32>
      %c0_34 = arith.constant 0 : index
      %c0_35 = arith.constant 0 : index
      %43 = vector.load %arg9[%c0_34, %c0_35] : memref<8x1xf32, #tpu.memory_space<vmem>>, vector<8x1xf32>
      tpu.vector_store %arg9[%c0_34, %c0_35], %42 {strides = array<i32>} : memref<8x1xf32, #tpu.memory_space<vmem>>, vector<8x1xf32>,
      %cst_36 = arith.constant 0.000000e+00 : f32
      %44 = vector.broadcast %cst_36 : f32 to vector<8x1xf32>
      %c0_37 = arith.constant 0 : index
      %c0_38 = arith.constant 0 : index
      %45 = vector.load %arg10[%c0_37, %c0_38] : memref<8x1xf32, #tpu.memory_space<vmem>>, vector<8x1xf32>
      tpu.vector_store %arg10[%c0_37, %c0_38], %44 {strides = array<i32>} : memref<8x1xf32, #tpu.memory_space<vmem>>, vector<8x1xf32>,
      %cst_39 = arith.constant 0.000000e+00 : f32
      %46 = vector.broadcast %cst_39 : f32 to vector<8x32xf32>
      %c0_40 = arith.constant 0 : index
      %c0_41 = arith.constant 0 : index
      %47 = vector.load %arg11[%c0_40, %c0_41] : memref<8x32xf32, #tpu.memory_space<vmem>>, vector<8x32xf32>
      tpu.vector_store %arg11[%c0_40, %c0_41], %46 {strides = array<i32>} : memref<8x32xf32, #tpu.memory_space<vmem>>, vector<8x32xf32>,
    } else {
    }
    %c0 = arith.constant 0 : index
    %c0_1 = arith.constant 0 : index
    %c0_2 = arith.constant 0 : index
    %c0_3 = arith.constant 0 : index
    %3 = vector.load %arg4[%c0, %c0_1, %c0_2, %c0_3] : memref<1x1x8x32xbf16, #tpu.memory_space<vmem>>, vector<1x1x8x32xbf16>
    %4 = vector.shape_cast %3 : vector<1x1x8x32xbf16> to vector<8x32xbf16>
    %c0_4 = arith.constant 0 : index
    %c0_5 = arith.constant 0 : index
    %c0_6 = arith.constant 0 : index
    %c0_7 = arith.constant 0 : index
    %5 = vector.load %arg5[%c0_4, %c0_5, %c0_6, %c0_7] : memref<1x1x8x32xbf16, #tpu.memory_space<vmem>>, vector<1x1x8x32xbf16>
    %6 = vector.shape_cast %5 : vector<1x1x8x32xbf16> to vector<8x32xbf16>
    %c0_8 = arith.constant 0 : index
    %c0_9 = arith.constant 0 : index
    %c0_10 = arith.constant 0 : index
    %c0_11 = arith.constant 0 : index
    %7 = vector.load %arg6[%c0_8, %c0_9, %c0_10, %c0_11] : memref<1x1x8x32xbf16, #tpu.memory_space<vmem>>, vector<1x1x8x32xbf16>
    %8 = vector.shape_cast %7 : vector<1x1x8x32xbf16> to vector<8x32xbf16>
    %cst = arith.constant dense<0.000000e+00> : vector<8x8xf32>
    %9 = tpu.matmul %4, %6, %cst {dimension_numbers = #tpu.dot_dimension_numbers<[1], [1], [0], [0], [0, 0, 1, 0], [], []>} : vector<8x32xbf16>, vector<8x32xbf16>, vector<8x8xf32> -> vector<8x8xf32>
    %c0_12 = arith.constant 0 : index
    %c0_13 = arith.constant 0 : index
    %c0_14 = arith.constant 0 : index
    %10 = vector.load %arg7[%c0_12, %c0_13, %c0_14] : memref<1x8x8xi8, #tpu.memory_space<vmem>>, vector<1x8x8xi8>
    %11 = vector.shape_cast %10 : vector<1x8x8xi8> to vector<8x8xi8>
    %c0_i8 = arith.constant 0 : i8
    %12 = vector.broadcast %c0_i8 : i8 to vector<8x8xi8>
    %13 = arith.cmpi ne, %11, %12 : vector<8x8xi8>
    %cst_15 = arith.constant -1.000000e+09 : f32
    %14 = vector.broadcast %cst_15 : f32 to vector<8x8xf32>
    %15 = arith.select %13, %9, %14 : vector<8x8xi1>, vector<8x8xf32>
    %c0_16 = arith.constant 0 : index
    %c0_17 = arith.constant 0 : index
    %16 = vector.load %arg9[%c0_16, %c0_17] : memref<8x1xf32, #tpu.memory_space<vmem>>, vector<8x1xf32>
    %cst_18 = arith.constant dense<0xFF800000> : vector<8xf32>
    %17 = vector.multi_reduction <maximumf>, %15, %cst_18 [1] : vector<8x8xf32> to vector<8xf32>
    %18 = vector.shape_cast %17 : vector<8xf32> to vector<8x1xf32>
    %19 = arith.maximumf %16, %18 : vector<8x1xf32>
    %20 = arith.subf %16, %19 : vector<8x1xf32>
    %21 = math.exp %20 : vector<8x1xf32>
    %22 = vector.broadcast %19 : vector<8x1xf32> to vector<8x8xf32>
    %23 = arith.subf %15, %22 : vector<8x8xf32>
    %24 = math.exp %23 : vector<8x8xf32>
    %c0_19 = arith.constant 0 : index
    %c0_20 = arith.constant 0 : index
    %25 = vector.load %arg10[%c0_19, %c0_20] : memref<8x1xf32, #tpu.memory_space<vmem>>, vector<8x1xf32>
    %26 = arith.mulf %21, %25 : vector<8x1xf32>
    %cst_21 = arith.constant dense<0.000000e+00> : vector<8xf32>
    %27 = vector.multi_reduction <add>, %24, %cst_21 [1] : vector<8x8xf32> to vector<8xf32>
    %28 = vector.shape_cast %27 : vector<8xf32> to vector<8x1xf32>
    %29 = arith.addf %26, %28 : vector<8x1xf32>
    %c0_22 = arith.constant 0 : index
    %c0_23 = arith.constant 0 : index
    %30 = vector.load %arg10[%c0_22, %c0_23] : memref<8x1xf32, #tpu.memory_space<vmem>>, vector<8x1xf32>
    tpu.vector_store %arg10[%c0_22, %c0_23], %29 {strides = array<i32>} : memref<8x1xf32, #tpu.memory_space<vmem>>, vector<8x1xf32>,
    %c0_24 = arith.constant 0 : index
    %c0_25 = arith.constant 0 : index
    %31 = vector.load %arg11[%c0_24, %c0_25] : memref<8x32xf32, #tpu.memory_space<vmem>>, vector<8x32xf32>
    %32 = vector.broadcast %21 : vector<8x1xf32> to vector<8x32xf32>
    %33 = arith.mulf %32, %31 : vector<8x32xf32>
    %34 = arith.truncf %24 : vector<8x8xf32> to vector<8x8xbf16>
    %cst_26 = arith.constant dense<0.000000e+00> : vector<8x32xf32>
    %35 = tpu.matmul %34, %8, %cst_26 {dimension_numbers = #tpu.dot_dimension_numbers<[1], [0], [0], [1], [0, 0, 1, 1], [], []>} : vector<8x8xbf16>, vector<8x32xbf16>, vector<8x32xf32> -> vector<8x32xf32>
    %36 = arith.addf %33, %35 : vector<8x32xf32>
    %c0_27 = arith.constant 0 : index
    %c0_28 = arith.constant 0 : index
    %37 = vector.load %arg11[%c0_27, %c0_28] : memref<8x32xf32, #tpu.memory_space<vmem>>, vector<8x32xf32>
    tpu.vector_store %arg11[%c0_27, %c0_28], %36 {strides = array<i32>} : memref<8x32xf32, #tpu.memory_space<vmem>>, vector<8x32xf32>,
    %c0_29 = arith.constant 0 : index
    %c0_30 = arith.constant 0 : index
    %38 = vector.load %arg9[%c0_29, %c0_30] : memref<8x1xf32, #tpu.memory_space<vmem>>, vector<8x1xf32>
    tpu.vector_store %arg9[%c0_29, %c0_30], %19 {strides = array<i32>} : memref<8x1xf32, #tpu.memory_space<vmem>>, vector<8x1xf32>,
    %c0_i32_31 = arith.constant 0 : i32
    %39 = arith.cmpi eq, %arg3, %c0_i32_31 : i32
    %40 = arith.extui %39 : i1 to i32
    %c0_i32_32 = arith.constant 0 : i32
    %41 = arith.cmpi ne, %40, %c0_i32_32 : i32
    scf.if %41 {
      %c0_33 = arith.constant 0 : index
      %c0_34 = arith.constant 0 : index
      %42 = vector.load %arg10[%c0_33, %c0_34] : memref<8x1xf32, #tpu.memory_space<vmem>>, vector<8x1xf32>
      %43 = tpu.reciprocal %42 {approx = true} : vector<8x1xf32> -> vector<8x1xf32>
      %c0_35 = arith.constant 0 : index
      %c0_36 = arith.constant 0 : index
      %44 = vector.load %arg11[%c0_35, %c0_36] : memref<8x32xf32, #tpu.memory_space<vmem>>, vector<8x32xf32>
      %45 = vector.broadcast %43 : vector<8x1xf32> to vector<8x32xf32>
      %46 = arith.mulf %44, %45 : vector<8x32xf32>
      %47 = arith.truncf %46 : vector<8x32xf32> to vector<8x32xbf16>
      %c0_37 = arith.constant 0 : index
      %c0_38 = arith.constant 0 : index
      %c0_39 = arith.constant 0 : index
      %c0_40 = arith.constant 0 : index
      %48 = vector.load %arg8[%c0_37, %c0_38, %c0_39, %c0_40] : memref<1x1x8x32xbf16, #tpu.memory_space<vmem>>, vector<1x1x8x32xbf16>
      %49 = vector.shape_cast %48 : vector<1x1x8x32xbf16> to vector<8x32xbf16>
      %50 = vector.shape_cast %47 : vector<8x32xbf16> to vector<1x1x8x32xbf16>
      tpu.vector_store %arg8[%c0_37, %c0_38, %c0_39, %c0_40], %50 {strides = array<i32>} : memref<1x1x8x32xbf16, #tpu.memory_space<vmem>>, vector<1x1x8x32xbf16>,
    } else {
    }
    return
  }
  func.func @transform_0(%arg0: i32, %arg1: i32, %arg2: i32, %arg3: i32) -> (i32, i32, i32, i32) {
    %c0_i32 = arith.constant 0 : i32
    %c0_i32_0 = arith.constant 0 : i32
    return %arg0, %arg1, %arg2, %c0_i32 : i32, i32, i32, i32
  }
  func.func @transform_1(%arg0: i32, %arg1: i32, %arg2: i32, %arg3: i32) -> (i32, i32, i32, i32) {
    %c0_i32 = arith.constant 0 : i32
    %c0_i32_0 = arith.constant 0 : i32
    return %arg0, %arg1, %arg3, %c0_i32 : i32, i32, i32, i32
  }
  func.func @transform_2(%arg0: i32, %arg1: i32, %arg2: i32, %arg3: i32) -> (i32, i32, i32, i32) {
    %c0_i32 = arith.constant 0 : i32
    %c0_i32_0 = arith.constant 0 : i32
    return %arg0, %arg1, %arg3, %c0_i32 : i32, i32, i32, i32
  }
  func.func @transform_3(%arg0: i32, %arg1: i32, %arg2: i32, %arg3: i32) -> (i32, i32, i32) {
    %c0_i32 = arith.constant 0 : i32
    return %arg0, %arg2, %arg3 : i32, i32, i32
  }
  func.func @transform_4(%arg0: i32, %arg1: i32, %arg2: i32, %arg3: i32) -> (i32, i32, i32, i32) {
    %c0_i32 = arith.constant 0 : i32
    %c0_i32_0 = arith.constant 0 : i32
    return %arg0, %arg1, %arg2, %c0_i32 : i32, i32, i32, i32
  }
}

module attributes {stable_mosaic.version = 11 : i64} {
  func.func @_fused_linear_kernel(%arg0: i32, %arg1: i32, %arg2: memref<16x128xbf16, #tpu.memory_space<vmem>>, %arg3: memref<128x128xbf16, #tpu.memory_space<vmem>>, %arg4: memref<1x128xf32, #tpu.memory_space<vmem>>, %arg5: memref<16x128xbf16, #tpu.memory_space<vmem>>, %arg6: memref<16x128xbf16, #tpu.memory_space<vmem>>) attributes {dimension_semantics = [#tpu.dimension_semantics<parallel>, #tpu.dimension_semantics<parallel>], iteration_bounds = array<i64: 1, 1>, scalar_prefetch = 0 : i64, scratch_operands = 0 : i64, tpu.core_type = #tpu.core_type<tc>, window_params = [{transform_indices = @transform_0, window_bounds = array<i64: 16, 128>}, {transform_indices = @transform_1, window_bounds = array<i64: 128, 128>}, {transform_indices = @transform_2, window_bounds = array<i64: 1, 128>}, {transform_indices = @transform_3, window_bounds = array<i64: 16, 128>}, {transform_indices = @transform_4, window_bounds = array<i64: 16, 128>}]} {
    %c0 = arith.constant 0 : index
    %c0_0 = arith.constant 0 : index
    %0 = vector.load %arg2[%c0, %c0_0] : memref<16x128xbf16, #tpu.memory_space<vmem>>, vector<16x128xbf16>
    %c0_1 = arith.constant 0 : index
    %c0_2 = arith.constant 0 : index
    %1 = vector.load %arg3[%c0_1, %c0_2] : memref<128x128xbf16, #tpu.memory_space<vmem>>, vector<128x128xbf16>
    %cst = arith.constant dense<0.000000e+00> : vector<16x128xf32>
    %2 = tpu.matmul %0, %1, %cst {dimension_numbers = #tpu.dot_dimension_numbers<[1], [0], [0], [1], [0, 0, 1, 1], [], []>} : vector<16x128xbf16>, vector<128x128xbf16>, vector<16x128xf32> -> vector<16x128xf32>
    %c0_3 = arith.constant 0 : index
    %c0_4 = arith.constant 0 : index
    %3 = vector.load %arg4[%c0_3, %c0_4] : memref<1x128xf32, #tpu.memory_space<vmem>>, vector<1x128xf32>
    %4 = vector.broadcast %3 : vector<1x128xf32> to vector<16x128xf32>
    %5 = arith.addf %2, %4 : vector<16x128xf32>
    %c0_5 = arith.constant 0 : index
    %c0_6 = arith.constant 0 : index
    %6 = vector.load %arg5[%c0_5, %c0_6] : memref<16x128xbf16, #tpu.memory_space<vmem>>, vector<16x128xbf16>
    %7 = arith.extf %6 : vector<16x128xbf16> to vector<16x128xf32>
    %8 = arith.addf %5, %7 : vector<16x128xf32>
    %9 = arith.truncf %8 : vector<16x128xf32> to vector<16x128xbf16>
    %c0_7 = arith.constant 0 : index
    %c0_8 = arith.constant 0 : index
    %10 = vector.load %arg6[%c0_7, %c0_8] : memref<16x128xbf16, #tpu.memory_space<vmem>>, vector<16x128xbf16>
    tpu.vector_store %arg6[%c0_7, %c0_8], %9 {strides = array<i32>} : memref<16x128xbf16, #tpu.memory_space<vmem>>, vector<16x128xbf16>,
    return
  }
  func.func @transform_0(%arg0: i32, %arg1: i32) -> (i32, i32) {
    %c0_i32 = arith.constant 0 : i32
    %c0_i32_0 = arith.constant 0 : i32
    return %arg0, %c0_i32 : i32, i32
  }
  func.func @transform_1(%arg0: i32, %arg1: i32) -> (i32, i32) {
    %c0_i32 = arith.constant 0 : i32
    %c0_i32_0 = arith.constant 0 : i32
    return %c0_i32, %arg1 : i32, i32
  }
  func.func @transform_2(%arg0: i32, %arg1: i32) -> (i32, i32) {
    %c0_i32 = arith.constant 0 : i32
    %c0_i32_0 = arith.constant 0 : i32
    return %c0_i32, %arg1 : i32, i32
  }
  func.func @transform_3(%arg0: i32, %arg1: i32) -> (i32, i32) {
    %c0_i32 = arith.constant 0 : i32
    return %arg0, %arg1 : i32, i32
  }
  func.func @transform_4(%arg0: i32, %arg1: i32) -> (i32, i32) {
    %c0_i32 = arith.constant 0 : i32
    return %arg0, %arg1 : i32, i32
  }
}

module attributes {stable_mosaic.version = 11 : i64} {
  func.func @_fused_linear_kernel(%arg0: i32, %arg1: i32, %arg2: memref<16x128xbf16, #tpu.memory_space<vmem>>, %arg3: memref<1x128xf32, #tpu.memory_space<vmem>>, %arg4: memref<1x128xf32, #tpu.memory_space<vmem>>, %arg5: memref<128x128xbf16, #tpu.memory_space<vmem>>, %arg6: memref<1x128xf32, #tpu.memory_space<vmem>>, %arg7: memref<16x128xbf16, #tpu.memory_space<vmem>>) attributes {dimension_semantics = [#tpu.dimension_semantics<parallel>, #tpu.dimension_semantics<parallel>], iteration_bounds = array<i64: 1, 1>, scalar_prefetch = 0 : i64, scratch_operands = 0 : i64, tpu.core_type = #tpu.core_type<tc>, window_params = [{transform_indices = @transform_0, window_bounds = array<i64: 16, 128>}, {pipeline_mode = #tpu.pipeline_mode<synchronous>, transform_indices = @transform_1, window_bounds = array<i64: 1, 128>}, {pipeline_mode = #tpu.pipeline_mode<synchronous>, transform_indices = @transform_2, window_bounds = array<i64: 1, 128>}, {transform_indices = @transform_3, window_bounds = array<i64: 128, 128>}, {transform_indices = @transform_4, window_bounds = array<i64: 1, 128>}, {transform_indices = @transform_5, window_bounds = array<i64: 16, 128>}]} {
    %c0 = arith.constant 0 : index
    %c0_0 = arith.constant 0 : index
    %0 = vector.load %arg2[%c0, %c0_0] : memref<16x128xbf16, #tpu.memory_space<vmem>>, vector<16x128xbf16>
    %1 = arith.extf %0 : vector<16x128xbf16> to vector<16x128xf32>
    %cst = arith.constant dense<0.000000e+00> : vector<16xf32>
    %2 = vector.multi_reduction <add>, %1, %cst [1] : vector<16x128xf32> to vector<16xf32>
    %3 = vector.shape_cast %2 : vector<16xf32> to vector<16x1xf32>
    %cst_1 = arith.constant 1.280000e+02 : f32
    %4 = vector.broadcast %cst_1 : f32 to vector<16x1xf32>
    %5 = arith.divf %3, %4 : vector<16x1xf32>
    %6 = vector.broadcast %5 : vector<16x1xf32> to vector<16x128xf32>
    %7 = arith.subf %1, %6 : vector<16x128xf32>
    %8 = arith.mulf %7, %7 : vector<16x128xf32>
    %cst_2 = arith.constant dense<0.000000e+00> : vector<16xf32>
    %9 = vector.multi_reduction <add>, %8, %cst_2 [1] : vector<16x128xf32> to vector<16xf32>
    %10 = vector.shape_cast %9 : vector<16xf32> to vector<16x1xf32>
    %cst_3 = arith.constant 1.270000e+02 : f32
    %11 = vector.broadcast %cst_3 : f32 to vector<16x1xf32>
    %12 = arith.divf %10, %11 : vector<16x1xf32>
    %c0_4 = arith.constant 0 : index
    %c0_5 = arith.constant 0 : index
    %13 = vector.load %arg3[%c0_4, %c0_5] : memref<1x128xf32, #tpu.memory_space<vmem>>, vector<1x128xf32>
    %14 = vector.broadcast %13 : vector<1x128xf32> to vector<16x128xf32>
    %15 = arith.mulf %14, %7 : vector<16x128xf32>
    %16 = math.sqrt %12 : vector<16x1xf32>
    %cst_6 = arith.constant 9.99999997E-7 : f32
    %17 = vector.broadcast %cst_6 : f32 to vector<16x1xf32>
    %18 = arith.addf %16, %17 : vector<16x1xf32>
    %19 = vector.broadcast %18 : vector<16x1xf32> to vector<16x128xf32>
    %20 = arith.divf %15, %19 : vector<16x128xf32>
    %c0_7 = arith.constant 0 : index
    %c0_8 = arith.constant 0 : index
    %21 = vector.load %arg4[%c0_7, %c0_8] : memref<1x128xf32, #tpu.memory_space<vmem>>, vector<1x128xf32>
    %22 = vector.broadcast %21 : vector<1x128xf32> to vector<16x128xf32>
    %23 = arith.addf %20, %22 : vector<16x128xf32>
    %24 = arith.truncf %23 : vector<16x128xf32> to vector<16x128xbf16>
    %c0_9 = arith.constant 0 : index
    %c0_10 = arith.constant 0 : index
    %25 = vector.load %arg5[%c0_9, %c0_10] : memref<128x128xbf16, #tpu.memory_space<vmem>>, vector<128x128xbf16>
    %cst_11 = arith.constant dense<0.000000e+00> : vector<16x128xf32>
    %26 = tpu.matmul %24, %25, %cst_11 {dimension_numbers = #tpu.dot_dimension_numbers<[1], [0], [0], [1], [0, 0, 1, 1], [], []>} : vector<16x128xbf16>, vector<128x128xbf16>, vector<16x128xf32> -> vector<16x128xf32>
    %c0_12 = arith.constant 0 : index
    %c0_13 = arith.constant 0 : index
    %27 = vector.load %arg6[%c0_12, %c0_13] : memref<1x128xf32, #tpu.memory_space<vmem>>, vector<1x128xf32>
    %28 = vector.broadcast %27 : vector<1x128xf32> to vector<16x128xf32>
    %29 = arith.addf %26, %28 : vector<16x128xf32>
    %30 = arith.truncf %29 : vector<16x128xf32> to vector<16x128xbf16>
    %c0_14 = arith.constant 0 : index
    %c0_15 = arith.constant 0 : index
    %31 = vector.load %arg7[%c0_14, %c0_15] : memref<16x128xbf16, #tpu.memory_space<vmem>>, vector<16x128xbf16>
    tpu.vector_store %arg7[%c0_14, %c0_15], %30 {strides = array<i32>} : memref<16x128xbf16, #tpu.memory_space<vmem>>, vector<16x128xbf16>,
    return
  }
  func.func @transform_0(%arg0: i32, %arg1: i32) -> (i32, i32) {
    %c0_i32 = arith.constant 0 : i32
    %c0_i32_0 = arith.constant 0 : i32
    return %arg0, %c0_i32 : i32, i32
  }
  func.func @transform_1(%arg0: i32, %arg1: i32) -> (i32, i32) {
    %c0_i32 = arith.constant 0 : i32
    %c0_i32_0 = arith.constant 0 : i32
    %c0_i32_1 = arith.constant 0 : i32
    return %c0_i32, %c0_i32_0 : i32, i32
  }
  func.func @transform_2(%arg0: i32, %arg1: i32) -> (i32, i32) {
    %c0_i32 = arith.constant 0 : i32
    %c0_i32_0 = arith.constant 0 : i32
    %c0_i32_1 = arith.constant 0 : i32
    return %c0_i32, %c0_i32_0 : i32, i32
  }
  func.func @transform_3(%arg0: i32, %arg1: i32) -> (i32, i32) {
    %c0_i32 = arith.constant 0 : i32
    %c0_i32_0 = arith.constant 0 : i32
    return %c0_i32, %arg1 : i32, i32
  }
  func.func @transform_4(%arg0: i32, %arg1: i32) -> (i32, i32) {
    %c0_i32 = arith.constant 0 : i32
    %c0_i32_0 = arith.constant 0 : i32
    return %c0_i32, %arg1 : i32, i32
  }
  func.func @transform_5(%arg0: i32, %arg1: i32) -> (i32, i32) {
    %c0_i32 = arith.constant 0 : i32
    return %arg0, %arg1 : i32, i32
  }
}

module attributes {stable_mosaic.version = 11 : i64} {
  func.func @_flash_attn_kernel(%arg0: i32, %arg1: i32, %arg2: i32, %arg3: i32, %arg4: memref<1x1x8x32xbf16, #tpu.memory_space<vmem>>, %arg5: memref<1x1x8x32xbf16, #tpu.memory_space<vmem>>, %arg6: memref<1x1x8x32xbf16, #tpu.memory_space<vmem>>, %arg7: memref<1x1x8xi8, #tpu.memory_space<vmem>>, %arg8: memref<1x1x8x32xbf16, #tpu.memory_space<vmem>>, %arg9: memref<8x1xf32, #tpu.memory_space<vmem>>, %arg10: memref<8x1xf32, #tpu.memory_space<vmem>>, %arg11: memref<8x32xf32, #tpu.memory_space<vmem>>) attributes {dimension_semantics = [#tpu.dimension_semantics<parallel>, #tpu.dimension_semantics<parallel>, #tpu.dimension_semantics<parallel>, #tpu.dimension_semantics<arbitrary>], iteration_bounds = array<i64: 2, 4, 1, 1>, scalar_prefetch = 0 : i64, scratch_operands = 3 : i64, tpu.core_type = #tpu.core_type<tc>, window_params = [{transform_indices = @transform_0, window_bounds = array<i64: 1, 1, 8, 32>}, {transform_indices = @transform_1, window_bounds = array<i64: 1, 1, 8, 32>}, {transform_indices = @transform_2, window_bounds = array<i64: 1, 1, 8, 32>}, {transform_indices = @transform_3, window_bounds = array<i64: 1, 1, 8>}, {transform_indices = @transform_4, window_bounds = array<i64: 1, 1, 8, 32>}]} {
    %c0_i32 = arith.constant 0 : i32
    %0 = arith.cmpi eq, %arg3, %c0_i32 : i32
    %1 = arith.extui %0 : i1 to i32
    %c0_i32_0 = arith.constant 0 : i32
    %2 = arith.cmpi ne, %1, %c0_i32_0 : i32
    scf.if %2 {
      %cst_33 = arith.constant 0xFF800000 : f32
      %44 = vector.broadcast %cst_33 : f32 to vector<8x1xf32>
      %c0_34 = arith.constant 0 : index
      %c0_35 = arith.constant 0 : index
      %45 = vector.load %arg9[%c0_34, %c0_35] : memref<8x1xf32, #tpu.memory_space<vmem>>, vector<8x1xf32>
      tpu.vector_store %arg9[%c0_34, %c0_35], %44 {strides = array<i32>} : memref<8x1xf32, #tpu.memory_space<vmem>>, vector<8x1xf32>,
      %cst_36 = arith.constant 0.000000e+00 : f32
      %46 = vector.broadcast %cst_36 : f32 to vector<8x1xf32>
      %c0_37 = arith.constant 0 : index
      %c0_38 = arith.constant 0 : index
      %47 = vector.load %arg10[%c0_37, %c0_38] : memref<8x1xf32, #tpu.memory_space<vmem>>, vector<8x1xf32>
      tpu.vector_store %arg10[%c0_37, %c0_38], %46 {strides = array<i32>} : memref<8x1xf32, #tpu.memory_space<vmem>>, vector<8x1xf32>,
      %cst_39 = arith.constant 0.000000e+00 : f32
      %48 = vector.broadcast %cst_39 : f32 to vector<8x32xf32>
      %c0_40 = arith.constant 0 : index
      %c0_41 = arith.constant 0 : index
      %49 = vector.load %arg11[%c0_40, %c0_41] : memref<8x32xf32, #tpu.memory_space<vmem>>, vector<8x32xf32>
      tpu.vector_store %arg11[%c0_40, %c0_41], %48 {strides = array<i32>} : memref<8x32xf32, #tpu.memory_space<vmem>>, vector<8x32xf32>,
    } else {
    }
    %c0 = arith.constant 0 : index
    %c0_1 = arith.constant 0 : index
    %c0_2 = arith.constant 0 : index
    %c0_3 = arith.constant 0 : index
    %3 = vector.load %arg4[%c0, %c0_1, %c0_2, %c0_3] : memref<1x1x8x32xbf16, #tpu.memory_space<vmem>>, vector<1x1x8x32xbf16>
    %4 = vector.shape_cast %3 : vector<1x1x8x32xbf16> to vector<8x32xbf16>
    %c0_4 = arith.constant 0 : index
    %c0_5 = arith.constant 0 : index
    %c0_6 = arith.constant 0 : index
    %c0_7 = arith.constant 0 : index
    %5 = vector.load %arg5[%c0_4, %c0_5, %c0_6, %c0_7] : memref<1x1x8x32xbf16, #tpu.memory_space<vmem>>, vector<1x1x8x32xbf16>
    %6 = vector.shape_cast %5 : vector<1x1x8x32xbf16> to vector<8x32xbf16>
    %c0_8 = arith.constant 0 : index
    %c0_9 = arith.constant 0 : index
    %c0_10 = arith.constant 0 : index
    %c0_11 = arith.constant 0 : index
    %7 = vector.load %arg6[%c0_8, %c0_9, %c0_10, %c0_11] : memref<1x1x8x32xbf16, #tpu.memory_space<vmem>>, vector<1x1x8x32xbf16>
    %8 = vector.shape_cast %7 : vector<1x1x8x32xbf16> to vector<8x32xbf16>
    %cst = arith.constant dense<0.000000e+00> : vector<8x8xf32>
    %9 = tpu.matmul %4, %6, %cst {dimension_numbers = #tpu.dot_dimension_numbers<[1], [1], [0], [0], [0, 0, 1, 0], [], []>} : vector<8x32xbf16>, vector<8x32xbf16>, vector<8x8xf32> -> vector<8x8xf32>
    %c0_12 = arith.constant 0 : index
    %c0_13 = arith.constant 0 : index
    %c0_14 = arith.constant 0 : index
    %10 = vector.load %arg7[%c0_12, %c0_13, %c0_14] : memref<1x1x8xi8, #tpu.memory_space<vmem>>, vector<1x1x8xi8>
    %11 = vector.shape_cast %10 : vector<1x1x8xi8> to vector<1x8xi8>
    %c0_i8 = arith.constant 0 : i8
    %12 = vector.broadcast %c0_i8 : i8 to vector<1x8xi8>
    %13 = arith.cmpi ne, %11, %12 : vector<1x8xi8>
    %cst_15 = arith.constant -1.000000e+09 : f32
    %14 = vector.shape_cast %13 : vector<1x8xi1> to vector<1x8xi1>
    %15 = vector.broadcast %14 : vector<1x8xi1> to vector<8x8xi1>
    %16 = vector.broadcast %cst_15 : f32 to vector<8x8xf32>
    %17 = arith.select %15, %9, %16 : vector<8x8xi1>, vector<8x8xf32>
    %c0_16 = arith.constant 0 : index
    %c0_17 = arith.constant 0 : index
    %18 = vector.load %arg9[%c0_16, %c0_17] : memref<8x1xf32, #tpu.memory_space<vmem>>, vector<8x1xf32>
    %cst_18 = arith.constant dense<0xFF800000> : vector<8xf32>
    %19 = vector.multi_reduction <maximumf>, %17, %cst_18 [1] : vector<8x8xf32> to vector<8xf32>
    %20 = vector.shape_cast %19 : vector<8xf32> to vector<8x1xf32>
    %21 = arith.maximumf %18, %20 : vector<8x1xf32>
    %22 = arith.subf %18, %21 : vector<8x1xf32>
    %23 = math.exp %22 : vector<8x1xf32>
    %24 = vector.broadcast %21 : vector<8x1xf32> to vector<8x8xf32>
    %25 = arith.subf %17, %24 : vector<8x8xf32>
    %26 = math.exp %25 : vector<8x8xf32>
    %c0_19 = arith.constant 0 : index
    %c0_20 = arith.constant 0 : index
    %27 = vector.load %arg10[%c0_19, %c0_20] : memref<8x1xf32, #tpu.memory_space<vmem>>, vector<8x1xf32>
    %28 = arith.mulf %23, %27 : vector<8x1xf32>
    %cst_21 = arith.constant dense<0.000000e+00> : vector<8xf32>
    %29 = vector.multi_reduction <add>, %26, %cst_21 [1] : vector<8x8xf32> to vector<8xf32>
    %30 = vector.shape_cast %29 : vector<8xf32> to vector<8x1xf32>
    %31 = arith.addf %28, %30 : vector<8x1xf32>
    %c0_22 = arith.constant 0 : index
    %c0_23 = arith.constant 0 : index
    %32 = vector.load %arg10[%c0_22, %c0_23] : memref<8x1xf32, #tpu.memory_space<vmem>>, vector<8x1xf32>
    tpu.vector_store %arg10[%c0_22, %c0_23], %31 {strides = array<i32>} : memref<8x1xf32, #tpu.memory_space<vmem>>, vector<8x1xf32>,
    %c0_24 = arith.constant 0 : index
    %c0_25 = arith.constant 0 : index
    %33 = vector.load %arg11[%c0_24, %c0_25] : memref<8x32xf32, #tpu.memory_space<vmem>>, vector<8x32xf32>
    %34 = vector.broadcast %23 : vector<8x1xf32> to vector<8x32xf32>
    %35 = arith.mulf %34, %33 : vector<8x32xf32>
    %36 = arith.truncf %26 : vector<8x8xf32> to vector<8x8xbf16>
    %cst_26 = arith.constant dense<0.000000e+00> : vector<8x32xf32>
    %37 = tpu.matmul %36, %8, %cst_26 {dimension_numbers = #tpu.dot_dimension_numbers<[1], [0], [0], [1], [0, 0, 1, 1], [], []>} : vector<8x8xbf16>, vector<8x32xbf16>, vector<8x32xf32> -> vector<8x32xf32>
    %38 = arith.addf %35, %37 : vector<8x32xf32>
    %c0_27 = arith.constant 0 : index
    %c0_28 = arith.constant 0 : index
    %39 = vector.load %arg11[%c0_27, %c0_28] : memref<8x32xf32, #tpu.memory_space<vmem>>, vector<8x32xf32>
    tpu.vector_store %arg11[%c0_27, %c0_28], %38 {strides = array<i32>} : memref<8x32xf32, #tpu.memory_space<vmem>>, vector<8x32xf32>,
    %c0_29 = arith.constant 0 : index
    %c0_30 = arith.constant 0 : index
    %40 = vector.load %arg9[%c0_29, %c0_30] : memref<8x1xf32, #tpu.memory_space<vmem>>, vector<8x1xf32>
    tpu.vector_store %arg9[%c0_29, %c0_30], %21 {strides = array<i32>} : memref<8x1xf32, #tpu.memory_space<vmem>>, vector<8x1xf32>,
    %c0_i32_31 = arith.constant 0 : i32
    %41 = arith.cmpi eq, %arg3, %c0_i32_31 : i32
    %42 = arith.extui %41 : i1 to i32
    %c0_i32_32 = arith.constant 0 : i32
    %43 = arith.cmpi ne, %42, %c0_i32_32 : i32
    scf.if %43 {
      %c0_33 = arith.constant 0 : index
      %c0_34 = arith.constant 0 : index
      %44 = vector.load %arg10[%c0_33, %c0_34] : memref<8x1xf32, #tpu.memory_space<vmem>>, vector<8x1xf32>
      %45 = tpu.reciprocal %44 {approx = true} : vector<8x1xf32> -> vector<8x1xf32>
      %c0_35 = arith.constant 0 : index
      %c0_36 = arith.constant 0 : index
      %46 = vector.load %arg11[%c0_35, %c0_36] : memref<8x32xf32, #tpu.memory_space<vmem>>, vector<8x32xf32>
      %47 = vector.broadcast %45 : vector<8x1xf32> to vector<8x32xf32>
      %48 = arith.mulf %46, %47 : vector<8x32xf32>
      %49 = arith.truncf %48 : vector<8x32xf32> to vector<8x32xbf16>
      %c0_37 = arith.constant 0 : index
      %c0_38 = arith.constant 0 : index
      %c0_39 = arith.constant 0 : index
      %c0_40 = arith.constant 0 : index
      %50 = vector.load %arg8[%c0_37, %c0_38, %c0_39, %c0_40] : memref<1x1x8x32xbf16, #tpu.memory_space<vmem>>, vector<1x1x8x32xbf16>
      %51 = vector.shape_cast %50 : vector<1x1x8x32xbf16> to vector<8x32xbf16>
      %52 = vector.shape_cast %49 : vector<8x32xbf16> to vector<1x1x8x32xbf16>
      tpu.vector_store %arg8[%c0_37, %c0_38, %c0_39, %c0_40], %52 {strides = array<i32>} : memref<1x1x8x32xbf16, #tpu.memory_space<vmem>>, vector<1x1x8x32xbf16>,
    } else {
    }
    return
  }
  func.func @transform_0(%arg0: i32, %arg1: i32, %arg2: i32, %arg3: i32) -> (i32, i32, i32, i32) {
    %c0_i32 = arith.constant 0 : i32
    %c0_i32_0 = arith.constant 0 : i32
    return %arg0, %arg1, %arg2, %c0_i32 : i32, i32, i32, i32
  }
  func.func @transform_1(%arg0: i32, %arg1: i32, %arg2: i32, %arg3: i32) -> (i32, i32, i32, i32) {
    %c0_i32 = arith.constant 0 : i32
    %c0_i32_0 = arith.constant 0 : i32
    return %arg0, %arg1, %arg3, %c0_i32 : i32, i32, i32, i32
  }
  func.func @transform_2(%arg0: i32, %arg1: i32, %arg2: i32, %arg3: i32) -> (i32, i32, i32, i32) {
    %c0_i32 = arith.constant 0 : i32
    %c0_i32_0 = arith.constant 0 : i32
    return %arg0, %arg1, %arg3, %c0_i32 : i32, i32, i32, i32
  }
  func.func @transform_3(%arg0: i32, %arg1: i32, %arg2: i32, %arg3: i32) -> (i32, i32, i32) {
    %c0_i32 = arith.constant 0 : i32
    %c0_i32_0 = arith.constant 0 : i32
    return %arg0, %c0_i32, %arg3 : i32, i32, i32
  }
  func.func @transform_4(%arg0: i32, %arg1: i32, %arg2: i32, %arg3: i32) -> (i32, i32, i32, i32) {
    %c0_i32 = arith.constant 0 : i32
    %c0_i32_0 = arith.constant 0 : i32
    return %arg0, %arg1, %arg2, %c0_i32 : i32, i32, i32, i32
  }
}

module attributes {stable_mosaic.version = 11 : i64} {
  func.func @_layernorm_kernel(%arg0: i32, %arg1: memref<16x128xbf16, #tpu.memory_space<vmem>>, %arg2: memref<1x128xf32, #tpu.memory_space<vmem>>, %arg3: memref<1x128xf32, #tpu.memory_space<vmem>>, %arg4: memref<16x128xbf16, #tpu.memory_space<vmem>>) attributes {dimension_semantics = [#tpu.dimension_semantics<parallel>], iteration_bounds = array<i64: 1>, scalar_prefetch = 0 : i64, scratch_operands = 0 : i64, tpu.core_type = #tpu.core_type<tc>, window_params = [{transform_indices = @transform_0, window_bounds = array<i64: 16, 128>}, {pipeline_mode = #tpu.pipeline_mode<synchronous>, transform_indices = @transform_1, window_bounds = array<i64: 1, 128>}, {pipeline_mode = #tpu.pipeline_mode<synchronous>, transform_indices = @transform_2, window_bounds = array<i64: 1, 128>}, {transform_indices = @transform_3, window_bounds = array<i64: 16, 128>}]} {
    %c0 = arith.constant 0 : index
    %c0_0 = arith.constant 0 : index
    %0 = vector.load %arg1[%c0, %c0_0] : memref<16x128xbf16, #tpu.memory_space<vmem>>, vector<16x128xbf16>
    %1 = arith.extf %0 : vector<16x128xbf16> to vector<16x128xf32>
    %cst = arith.constant dense<0.000000e+00> : vector<16xf32>
    %2 = vector.multi_reduction <add>, %1, %cst [1] : vector<16x128xf32> to vector<16xf32>
    %3 = vector.shape_cast %2 : vector<16xf32> to vector<16x1xf32>
    %cst_1 = arith.constant 1.280000e+02 : f32
    %4 = vector.broadcast %cst_1 : f32 to vector<16x1xf32>
    %5 = arith.divf %3, %4 : vector<16x1xf32>
    %6 = vector.broadcast %5 : vector<16x1xf32> to vector<16x128xf32>
    %7 = arith.subf %1, %6 : vector<16x128xf32>
    %8 = arith.mulf %7, %7 : vector<16x128xf32>
    %cst_2 = arith.constant dense<0.000000e+00> : vector<16xf32>
    %9 = vector.multi_reduction <add>, %8, %cst_2 [1] : vector<16x128xf32> to vector<16xf32>
    %10 = vector.shape_cast %9 : vector<16xf32> to vector<16x1xf32>
    %cst_3 = arith.constant 1.270000e+02 : f32
    %11 = vector.broadcast %cst_3 : f32 to vector<16x1xf32>
    %12 = arith.divf %10, %11 : vector<16x1xf32>
    %c0_4 = arith.constant 0 : index
    %c0_5 = arith.constant 0 : index
    %13 = vector.load %arg2[%c0_4, %c0_5] : memref<1x128xf32, #tpu.memory_space<vmem>>, vector<1x128xf32>
    %14 = vector.broadcast %13 : vector<1x128xf32> to vector<16x128xf32>
    %15 = arith.mulf %14, %7 : vector<16x128xf32>
    %16 = math.sqrt %12 : vector<16x1xf32>
    %cst_6 = arith.constant 9.99999997E-7 : f32
    %17 = vector.broadcast %cst_6 : f32 to vector<16x1xf32>
    %18 = arith.addf %16, %17 : vector<16x1xf32>
    %19 = vector.broadcast %18 : vector<16x1xf32> to vector<16x128xf32>
    %20 = arith.divf %15, %19 : vector<16x128xf32>
    %c0_7 = arith.constant 0 : index
    %c0_8 = arith.constant 0 : index
    %21 = vector.load %arg3[%c0_7, %c0_8] : memref<1x128xf32, #tpu.memory_space<vmem>>, vector<1x128xf32>
    %22 = vector.broadcast %21 : vector<1x128xf32> to vector<16x128xf32>
    %23 = arith.addf %20, %22 : vector<16x128xf32>
    %24 = arith.truncf %23 : vector<16x128xf32> to vector<16x128xbf16>
    %c0_9 = arith.constant 0 : index
    %c0_10 = arith.constant 0 : index
    %25 = vector.load %arg4[%c0_9, %c0_10] : memref<16x128xbf16, #tpu.memory_space<vmem>>, vector<16x128xbf16>
    tpu.vector_store %arg4[%c0_9, %c0_10], %24 {strides = array<i32>} : memref<16x128xbf16, #tpu.memory_space<vmem>>, vector<16x128xbf16>,
    return
  }
  func.func @transform_0(%arg0: i32) -> (i32, i32) {
    %c0_i32 = arith.constant 0 : i32
    %c0_i32_0 = arith.constant 0 : i32
    return %arg0, %c0_i32 : i32, i32
  }
  func.func @transform_1(%arg0: i32) -> (i32, i32) {
    %c0_i32 = arith.constant 0 : i32
    %c0_i32_0 = arith.constant 0 : i32
    %c0_i32_1 = arith.constant 0 : i32
    return %c0_i32, %c0_i32_0 : i32, i32
  }
  func.func @transform_2(%arg0: i32) -> (i32, i32) {
    %c0_i32 = arith.constant 0 : i32
    %c0_i32_0 = arith.constant 0 : i32
    %c0_i32_1 = arith.constant 0 : i32
    return %c0_i32, %c0_i32_0 : i32, i32
  }
  func.func @transform_3(%arg0: i32) -> (i32, i32) {
    %c0_i32 = arith.constant 0 : i32
    %c0_i32_0 = arith.constant 0 : i32
    return %arg0, %c0_i32 : i32, i32
  }
}

module attributes {stable_mosaic.version = 11 : i64} {
  func.func @_ln_ffn_kernel(%arg0: i32, %arg1: memref<16x128xbf16, #tpu.memory_space<vmem>>, %arg2: memref<1x128xf32, #tpu.memory_space<vmem>>, %arg3: memref<1x128xf32, #tpu.memory_space<vmem>>, %arg4: memref<128x256xbf16, #tpu.memory_space<vmem>>, %arg5: memref<1x256xf32, #tpu.memory_space<vmem>>, %arg6: memref<256x128xbf16, #tpu.memory_space<vmem>>, %arg7: memref<1x128xf32, #tpu.memory_space<vmem>>, %arg8: memref<16x128xbf16, #tpu.memory_space<vmem>>) attributes {dimension_semantics = [#tpu.dimension_semantics<parallel>], iteration_bounds = array<i64: 1>, scalar_prefetch = 0 : i64, scratch_operands = 0 : i64, tpu.core_type = #tpu.core_type<tc>, window_params = [{transform_indices = @transform_0, window_bounds = array<i64: 16, 128>}, {pipeline_mode = #tpu.pipeline_mode<synchronous>, transform_indices = @transform_1, window_bounds = array<i64: 1, 128>}, {pipeline_mode = #tpu.pipeline_mode<synchronous>, transform_indices = @transform_2, window_bounds = array<i64: 1, 128>}, {pipeline_mode = #tpu.pipeline_mode<synchronous>, transform_indices = @transform_3, window_bounds = array<i64: 128, 256>}, {pipeline_mode = #tpu.pipeline_mode<synchronous>, transform_indices = @transform_4, window_bounds = array<i64: 1, 256>}, {pipeline_mode = #tpu.pipeline_mode<synchronous>, transform_indices = @transform_5, window_bounds = array<i64: 256, 128>}, {pipeline_mode = #tpu.pipeline_mode<synchronous>, transform_indices = @transform_6, window_bounds = array<i64: 1, 128>}, {transform_indices = @transform_7, window_bounds = array<i64: 16, 128>}]} {
    %c0 = arith.constant 0 : index
    %c0_0 = arith.constant 0 : index
    %0 = vector.load %arg1[%c0, %c0_0] : memref<16x128xbf16, #tpu.memory_space<vmem>>, vector<16x128xbf16>
    %1 = arith.extf %0 : vector<16x128xbf16> to vector<16x128xf32>
    %cst = arith.constant dense<0.000000e+00> : vector<16xf32>
    %2 = vector.multi_reduction <add>, %1, %cst [1] : vector<16x128xf32> to vector<16xf32>
    %3 = vector.shape_cast %2 : vector<16xf32> to vector<16x1xf32>
    %cst_1 = arith.constant 1.280000e+02 : f32
    %4 = vector.broadcast %cst_1 : f32 to vector<16x1xf32>
    %5 = arith.divf %3, %4 : vector<16x1xf32>
    %6 = vector.broadcast %5 : vector<16x1xf32> to vector<16x128xf32>
    %7 = arith.subf %1, %6 : vector<16x128xf32>
    %8 = arith.mulf %7, %7 : vector<16x128xf32>
    %cst_2 = arith.constant dense<0.000000e+00> : vector<16xf32>
    %9 = vector.multi_reduction <add>, %8, %cst_2 [1] : vector<16x128xf32> to vector<16xf32>
    %10 = vector.shape_cast %9 : vector<16xf32> to vector<16x1xf32>
    %cst_3 = arith.constant 1.270000e+02 : f32
    %11 = vector.broadcast %cst_3 : f32 to vector<16x1xf32>
    %12 = arith.divf %10, %11 : vector<16x1xf32>
    %c0_4 = arith.constant 0 : index
    %c0_5 = arith.constant 0 : index
    %13 = vector.load %arg2[%c0_4, %c0_5] : memref<1x128xf32, #tpu.memory_space<vmem>>, vector<1x128xf32>
    %14 = vector.broadcast %13 : vector<1x128xf32> to vector<16x128xf32>
    %15 = arith.mulf %14, %7 : vector<16x128xf32>
    %16 = math.sqrt %12 : vector<16x1xf32>
    %cst_6 = arith.constant 9.99999997E-7 : f32
    %17 = vector.broadcast %cst_6 : f32 to vector<16x1xf32>
    %18 = arith.addf %16, %17 : vector<16x1xf32>
    %19 = vector.broadcast %18 : vector<16x1xf32> to vector<16x128xf32>
    %20 = arith.divf %15, %19 : vector<16x128xf32>
    %c0_7 = arith.constant 0 : index
    %c0_8 = arith.constant 0 : index
    %21 = vector.load %arg3[%c0_7, %c0_8] : memref<1x128xf32, #tpu.memory_space<vmem>>, vector<1x128xf32>
    %22 = vector.broadcast %21 : vector<1x128xf32> to vector<16x128xf32>
    %23 = arith.addf %20, %22 : vector<16x128xf32>
    %24 = arith.truncf %23 : vector<16x128xf32> to vector<16x128xbf16>
    %c0_9 = arith.constant 0 : index
    %c0_10 = arith.constant 0 : index
    %25 = vector.load %arg4[%c0_9, %c0_10] : memref<128x256xbf16, #tpu.memory_space<vmem>>, vector<128x256xbf16>
    %cst_11 = arith.constant dense<0.000000e+00> : vector<16x256xf32>
    %26 = tpu.matmul %24, %25, %cst_11 {dimension_numbers = #tpu.dot_dimension_numbers<[1], [0], [0], [1], [0, 0, 1, 1], [], []>} : vector<16x128xbf16>, vector<128x256xbf16>, vector<16x256xf32> -> vector<16x256xf32>
    %c0_12 = arith.constant 0 : index
    %c0_13 = arith.constant 0 : index
    %27 = vector.load %arg5[%c0_12, %c0_13] : memref<1x256xf32, #tpu.memory_space<vmem>>, vector<1x256xf32>
    %28 = vector.broadcast %27 : vector<1x256xf32> to vector<16x256xf32>
    %29 = arith.addf %26, %28 : vector<16x256xf32>
    %cst_14 = arith.constant 0.000000e+00 : f32
    %30 = vector.broadcast %cst_14 : f32 to vector<16x256xf32>
    %31 = arith.maximumf %29, %30 : vector<16x256xf32>
    %32 = arith.truncf %31 : vector<16x256xf32> to vector<16x256xbf16>
    %c0_15 = arith.constant 0 : index
    %c0_16 = arith.constant 0 : index
    %33 = vector.load %arg6[%c0_15, %c0_16] : memref<256x128xbf16, #tpu.memory_space<vmem>>, vector<256x128xbf16>
    %cst_17 = arith.constant dense<0.000000e+00> : vector<16x128xf32>
    %34 = tpu.matmul %32, %33, %cst_17 {dimension_numbers = #tpu.dot_dimension_numbers<[1], [0], [0], [1], [0, 0, 1, 1], [], []>} : vector<16x256xbf16>, vector<256x128xbf16>, vector<16x128xf32> -> vector<16x128xf32>
    %c0_18 = arith.constant 0 : index
    %c0_19 = arith.constant 0 : index
    %35 = vector.load %arg7[%c0_18, %c0_19] : memref<1x128xf32, #tpu.memory_space<vmem>>, vector<1x128xf32>
    %36 = vector.broadcast %35 : vector<1x128xf32> to vector<16x128xf32>
    %37 = arith.addf %34, %36 : vector<16x128xf32>
    %38 = arith.addf %37, %1 : vector<16x128xf32>
    %39 = arith.truncf %38 : vector<16x128xf32> to vector<16x128xbf16>
    %c0_20 = arith.constant 0 : index
    %c0_21 = arith.constant 0 : index
    %40 = vector.load %arg8[%c0_20, %c0_21] : memref<16x128xbf16, #tpu.memory_space<vmem>>, vector<16x128xbf16>
    tpu.vector_store %arg8[%c0_20, %c0_21], %39 {strides = array<i32>} : memref<16x128xbf16, #tpu.memory_space<vmem>>, vector<16x128xbf16>,
    return
  }
  func.func @transform_0(%arg0: i32) -> (i32, i32) {
    %c0_i32 = arith.constant 0 : i32
    %c0_i32_0 = arith.constant 0 : i32
    return %arg0, %c0_i32 : i32, i32
  }
  func.func @transform_1(%arg0: i32) -> (i32, i32) {
    %c0_i32 = arith.constant 0 : i32
    %c0_i32_0 = arith.constant 0 : i32
    %c0_i32_1 = arith.constant 0 : i32
    return %c0_i32, %c0_i32_0 : i32, i32
  }
  func.func @transform_2(%arg0: i32) -> (i32, i32) {
    %c0_i32 = arith.constant 0 : i32
    %c0_i32_0 = arith.constant 0 : i32
    %c0_i32_1 = arith.constant 0 : i32
    return %c0_i32, %c0_i32_0 : i32, i32
  }
  func.func @transform_3(%arg0: i32) -> (i32, i32) {
    %c0_i32 = arith.constant 0 : i32
    %c0_i32_0 = arith.constant 0 : i32
    %c0_i32_1 = arith.constant 0 : i32
    return %c0_i32, %c0_i32_0 : i32, i32
  }
  func.func @transform_4(%arg0: i32) -> (i32, i32) {
    %c0_i32 = arith.constant 0 : i32
    %c0_i32_0 = arith.constant 0 : i32
    %c0_i32_1 = arith.constant 0 : i32
    return %c0_i32, %c0_i32_0 : i32, i32
  }
  func.func @transform_5(%arg0: i32) -> (i32, i32) {
    %c0_i32 = arith.constant 0 : i32
    %c0_i32_0 = arith.constant 0 : i32
    %c0_i32_1 = arith.constant 0 : i32
    return %c0_i32, %c0_i32_0 : i32, i32
  }
  func.func @transform_6(%arg0: i32) -> (i32, i32) {
    %c0_i32 = arith.constant 0 : i32
    %c0_i32_0 = arith.constant 0 : i32
    %c0_i32_1 = arith.constant 0 : i32
    return %c0_i32, %c0_i32_0 : i32, i32
  }
  func.func @transform_7(%arg0: i32) -> (i32, i32) {
    %c0_i32 = arith.constant 0 : i32
    %c0_i32_0 = arith.constant 0 : i32
    return %arg0, %c0_i32 : i32, i32
  }
}

module attributes {stable_mosaic.version = 11 : i64} {
  func.func @_fused_linear_kernel(%arg0: i32, %arg1: i32, %arg2: memref<16x128xbf16, #tpu.memory_space<vmem>>, %arg3: memref<128x256xbf16, #tpu.memory_space<vmem>>, %arg4: memref<1x256xf32, #tpu.memory_space<vmem>>, %arg5: memref<16x256xbf16, #tpu.memory_space<vmem>>) attributes {dimension_semantics = [#tpu.dimension_semantics<parallel>, #tpu.dimension_semantics<parallel>], iteration_bounds = array<i64: 1, 1>, scalar_prefetch = 0 : i64, scratch_operands = 0 : i64, tpu.core_type = #tpu.core_type<tc>, window_params = [{transform_indices = @transform_0, window_bounds = array<i64: 16, 128>}, {transform_indices = @transform_1, window_bounds = array<i64: 128, 256>}, {transform_indices = @transform_2, window_bounds = array<i64: 1, 256>}, {transform_indices = @transform_3, window_bounds = array<i64: 16, 256>}]} {
    %c0 = arith.constant 0 : index
    %c0_0 = arith.constant 0 : index
    %0 = vector.load %arg2[%c0, %c0_0] : memref<16x128xbf16, #tpu.memory_space<vmem>>, vector<16x128xbf16>
    %c0_1 = arith.constant 0 : index
    %c0_2 = arith.constant 0 : index
    %1 = vector.load %arg3[%c0_1, %c0_2] : memref<128x256xbf16, #tpu.memory_space<vmem>>, vector<128x256xbf16>
    %cst = arith.constant dense<0.000000e+00> : vector<16x256xf32>
    %2 = tpu.matmul %0, %1, %cst {dimension_numbers = #tpu.dot_dimension_numbers<[1], [0], [0], [1], [0, 0, 1, 1], [], []>} : vector<16x128xbf16>, vector<128x256xbf16>, vector<16x256xf32> -> vector<16x256xf32>
    %c0_3 = arith.constant 0 : index
    %c0_4 = arith.constant 0 : index
    %3 = vector.load %arg4[%c0_3, %c0_4] : memref<1x256xf32, #tpu.memory_space<vmem>>, vector<1x256xf32>
    %4 = vector.broadcast %3 : vector<1x256xf32> to vector<16x256xf32>
    %5 = arith.addf %2, %4 : vector<16x256xf32>
    %6 = arith.truncf %5 : vector<16x256xf32> to vector<16x256xbf16>
    %c0_5 = arith.constant 0 : index
    %c0_6 = arith.constant 0 : index
    %7 = vector.load %arg5[%c0_5, %c0_6] : memref<16x256xbf16, #tpu.memory_space<vmem>>, vector<16x256xbf16>
    tpu.vector_store %arg5[%c0_5, %c0_6], %6 {strides = array<i32>} : memref<16x256xbf16, #tpu.memory_space<vmem>>, vector<16x256xbf16>,
    return
  }
  func.func @transform_0(%arg0: i32, %arg1: i32) -> (i32, i32) {
    %c0_i32 = arith.constant 0 : i32
    %c0_i32_0 = arith.constant 0 : i32
    return %arg0, %c0_i32 : i32, i32
  }
  func.func @transform_1(%arg0: i32, %arg1: i32) -> (i32, i32) {
    %c0_i32 = arith.constant 0 : i32
    %c0_i32_0 = arith.constant 0 : i32
    return %c0_i32, %arg1 : i32, i32
  }
  func.func @transform_2(%arg0: i32, %arg1: i32) -> (i32, i32) {
    %c0_i32 = arith.constant 0 : i32
    %c0_i32_0 = arith.constant 0 : i32
    return %c0_i32, %arg1 : i32, i32
  }
  func.func @transform_3(%arg0: i32, %arg1: i32) -> (i32, i32) {
    %c0_i32 = arith.constant 0 : i32
    return %arg0, %arg1 : i32, i32
  }
}

module attributes {stable_mosaic.version = 11 : i64} {
  func.func @_layernorm_kernel(%arg0: i32, %arg1: memref<16x128xbf16, #tpu.memory_space<vmem>>, %arg2: memref<1x128xf32, #tpu.memory_space<vmem>>, %arg3: memref<1x128xf32, #tpu.memory_space<vmem>>, %arg4: memref<16x128xf32, #tpu.memory_space<vmem>>) attributes {dimension_semantics = [#tpu.dimension_semantics<parallel>], iteration_bounds = array<i64: 1>, scalar_prefetch = 0 : i64, scratch_operands = 0 : i64, tpu.core_type = #tpu.core_type<tc>, window_params = [{transform_indices = @transform_0, window_bounds = array<i64: 16, 128>}, {pipeline_mode = #tpu.pipeline_mode<synchronous>, transform_indices = @transform_1, window_bounds = array<i64: 1, 128>}, {pipeline_mode = #tpu.pipeline_mode<synchronous>, transform_indices = @transform_2, window_bounds = array<i64: 1, 128>}, {transform_indices = @transform_3, window_bounds = array<i64: 16, 128>}]} {
    %c0 = arith.constant 0 : index
    %c0_0 = arith.constant 0 : index
    %0 = vector.load %arg1[%c0, %c0_0] : memref<16x128xbf16, #tpu.memory_space<vmem>>, vector<16x128xbf16>
    %1 = arith.extf %0 : vector<16x128xbf16> to vector<16x128xf32>
    %cst = arith.constant dense<0.000000e+00> : vector<16xf32>
    %2 = vector.multi_reduction <add>, %1, %cst [1] : vector<16x128xf32> to vector<16xf32>
    %3 = vector.shape_cast %2 : vector<16xf32> to vector<16x1xf32>
    %cst_1 = arith.constant 1.280000e+02 : f32
    %4 = vector.broadcast %cst_1 : f32 to vector<16x1xf32>
    %5 = arith.divf %3, %4 : vector<16x1xf32>
    %6 = vector.broadcast %5 : vector<16x1xf32> to vector<16x128xf32>
    %7 = arith.subf %1, %6 : vector<16x128xf32>
    %8 = arith.mulf %7, %7 : vector<16x128xf32>
    %cst_2 = arith.constant dense<0.000000e+00> : vector<16xf32>
    %9 = vector.multi_reduction <add>, %8, %cst_2 [1] : vector<16x128xf32> to vector<16xf32>
    %10 = vector.shape_cast %9 : vector<16xf32> to vector<16x1xf32>
    %cst_3 = arith.constant 1.270000e+02 : f32
    %11 = vector.broadcast %cst_3 : f32 to vector<16x1xf32>
    %12 = arith.divf %10, %11 : vector<16x1xf32>
    %c0_4 = arith.constant 0 : index
    %c0_5 = arith.constant 0 : index
    %13 = vector.load %arg2[%c0_4, %c0_5] : memref<1x128xf32, #tpu.memory_space<vmem>>, vector<1x128xf32>
    %14 = vector.broadcast %13 : vector<1x128xf32> to vector<16x128xf32>
    %15 = arith.mulf %14, %7 : vector<16x128xf32>
    %16 = math.sqrt %12 : vector<16x1xf32>
    %cst_6 = arith.constant 9.99999997E-7 : f32
    %17 = vector.broadcast %cst_6 : f32 to vector<16x1xf32>
    %18 = arith.addf %16, %17 : vector<16x1xf32>
    %19 = vector.broadcast %18 : vector<16x1xf32> to vector<16x128xf32>
    %20 = arith.divf %15, %19 : vector<16x128xf32>
    %c0_7 = arith.constant 0 : index
    %c0_8 = arith.constant 0 : index
    %21 = vector.load %arg3[%c0_7, %c0_8] : memref<1x128xf32, #tpu.memory_space<vmem>>, vector<1x128xf32>
    %22 = vector.broadcast %21 : vector<1x128xf32> to vector<16x128xf32>
    %23 = arith.addf %20, %22 : vector<16x128xf32>
    %c0_9 = arith.constant 0 : index
    %c0_10 = arith.constant 0 : index
    %24 = vector.load %arg4[%c0_9, %c0_10] : memref<16x128xf32, #tpu.memory_space<vmem>>, vector<16x128xf32>
    tpu.vector_store %arg4[%c0_9, %c0_10], %23 {strides = array<i32>} : memref<16x128xf32, #tpu.memory_space<vmem>>, vector<16x128xf32>,
    return
  }
  func.func @transform_0(%arg0: i32) -> (i32, i32) {
    %c0_i32 = arith.constant 0 : i32
    %c0_i32_0 = arith.constant 0 : i32
    return %arg0, %c0_i32 : i32, i32
  }
  func.func @transform_1(%arg0: i32) -> (i32, i32) {
    %c0_i32 = arith.constant 0 : i32
    %c0_i32_0 = arith.constant 0 : i32
    %c0_i32_1 = arith.constant 0 : i32
    return %c0_i32, %c0_i32_0 : i32, i32
  }
  func.func @transform_2(%arg0: i32) -> (i32, i32) {
    %c0_i32 = arith.constant 0 : i32
    %c0_i32_0 = arith.constant 0 : i32
    %c0_i32_1 = arith.constant 0 : i32
    return %c0_i32, %c0_i32_0 : i32, i32
  }
  func.func @transform_3(%arg0: i32) -> (i32, i32) {
    %c0_i32 = arith.constant 0 : i32
    %c0_i32_0 = arith.constant 0 : i32
    return %arg0, %c0_i32 : i32, i32
  }
}

</mosaic_0001>

<llo_original>
// kernel: transformer_forward.37
$region0: #{transformer_forward.37}
  #allocation0 [shape = 'u32[]', space=smem, size = 0x4, offset = 0x4, fixed_abs, tag = 'smem constant byte address 0x4 - core index']
  #allocation1 [shape = 'u32[144,128]{1,0:T(1,128)}', space=vmem, size = 0x12000, scoped, tag = 'internal scratch']
  %s0 = inlined_call_operand.vmem [shape: bf16[16,128], index: 0, kind: input, shape index: {}]
  %s1 = inlined_call_operand.vmem [shape: bf16[128,128], index: 1, kind: input, shape index: {}]
  %s2 = inlined_call_operand.vmem [shape: f32[1,128], index: 2, kind: input, shape index: {}]
  %s3 = inlined_call_operand.vmem [shape: bf16[16,128], index: 3, kind: input, shape index: {}]
  %s4 = inlined_call_operand.vmem [shape: bf16[16,128], index: 4, kind: output, shape index: {}]
  %s5 = sld [smem:[#allocation0]]
  $region26: #{transformer_forward.37} parent=0
    _
  %s7 = ssub.s32 1, %s5
  %s8 = scalar_select 0, %s7, %s5
  // Predicated region
  $region2: #{transformer_forward.37} parent=0 // pred_check
    _
  $region3: #{transformer_forward.37} parent=0 // pred_check_branch
    %10 = sbr.rel (0) target = $region5
  $region4: #{transformer_forward.37} parent=0 // pred_region
    _
  $region5: #{transformer_forward.37} parent=0 // pred_fallthru
    _
  // Predicated region
  $region6: #{transformer_forward.37} parent=0 // pred_check
    _
  $region7: #{transformer_forward.37} parent=0 // pred_check_branch
    %12 = sbr.rel (0) target = $region9
  $region8: #{transformer_forward.37} parent=0 // pred_region
    _
  $region9: #{transformer_forward.37} parent=0 // pred_fallthru
    _
  // Predicated region
  $region10: #{transformer_forward.37} parent=0 // pred_check
    _
  $region11: #{transformer_forward.37} parent=0 // pred_check_branch
    %14 = sbr.rel (0) target = $region13
  $region12: #{transformer_forward.37} parent=0 // pred_region
    _
  $region13: #{transformer_forward.37} parent=0 // pred_fallthru
    _
  // Predicated region
  $region14: #{transformer_forward.37} parent=0 // pred_check
    _
  $region15: #{transformer_forward.37} parent=0 // pred_check_branch
    %16 = sbr.rel (0) target = $region17
  $region16: #{transformer_forward.37} parent=0 // pred_region
    _
  $region17: #{transformer_forward.37} parent=0 // pred_fallthru
    _
  %v18 = vld [vmem:[%s0] sm:$0xf]
  %v19 = vld [vmem:[%s0 + $0x4] sm:$0xf]
  %v20 = vld [vmem:[%s1] sm:$0xf]
  %v21 = vld [vmem:[%s1 + $0x4] sm:$0xf]
  %v22 = vld [vmem:[%s1 + $0x8] sm:$0xf]
  %v23 = vld [vmem:[%s1 + $0xc] sm:$0xf]
  %v24 = vld [vmem:[%s1 + $0x10] sm:$0xf]
  %v25 = vld [vmem:[%s1 + $0x14] sm:$0xf]
  %v26 = vld [vmem:[%s1 + $0x18] sm:$0xf]
  %v27 = vld [vmem:[%s1 + $0x1c] sm:$0xf]
  %v28 = vld [vmem:[%s1 + $0x20] sm:$0xf]
  %v29 = vld [vmem:[%s1 + $0x24] sm:$0xf]
  %v30 = vld [vmem:[%s1 + $0x28] sm:$0xf]
  %v31 = vld [vmem:[%s1 + $0x2c] sm:$0xf]
  %v32 = vld [vmem:[%s1 + $0x30] sm:$0xf]
  %v33 = vld [vmem:[%s1 + $0x34] sm:$0xf]
  %v34 = vld [vmem:[%s1 + $0x38] sm:$0xf]
  %v35 = vld [vmem:[%s1 + $0x3c] sm:$0xf]
  %v36 = vld [vmem:[%s2] sm:$0x1]
  %v38 = vlaneseq
  %v39 = vshrl.u32 %v38, 7
  %v40 = vsub.s32 0, %v39
  %v41 = vrot.slane %v36, %v40
  %v45 = vunpack.c.l.b16 %v18
  %v46 = vunpack.c.l.b16 %v19
  %v47 = vpack.c.b16 %v46, %v45
  %v65 = vunpack.c.l.b16 %v20
  %v66 = vunpack.c.l.b16 %v21
  %v67 = vunpack.c.l.b16 %v22
  %v68 = vunpack.c.l.b16 %v23
  %v69 = vunpack.c.l.b16 %v24
  %v70 = vunpack.c.l.b16 %v25
  %v71 = vunpack.c.l.b16 %v26
  %v72 = vunpack.c.l.b16 %v27
  %v73 = vunpack.c.l.b16 %v28
  %v74 = vunpack.c.l.b16 %v29
  %v75 = vunpack.c.l.b16 %v30
  %v76 = vunpack.c.l.b16 %v31
  %v77 = vunpack.c.l.b16 %v32
  %v78 = vunpack.c.l.b16 %v33
  %v79 = vunpack.c.l.b16 %v34
  %v80 = vunpack.c.l.b16 %v35
  %v81 = vpack.c.b16 %v66, %v65
  %v82 = vpack.c.b16 %v68, %v67
  %v83 = vpack.c.b16 %v70, %v69
  %v84 = vpack.c.b16 %v72, %v71
  %v85 = vpack.c.b16 %v74, %v73
  %v86 = vpack.c.b16 %v76, %v75
  %v87 = vpack.c.b16 %v78, %v77
  %v88 = vpack.c.b16 %v80, %v79
  %97 = vmatprep.subr.bf16.mxu0 0
  %98 = vmatpush1.bf16.msra.mxu0 %v81
  %99 = vmatprep.subr.bf16.mxu0 0
  %100 = vmatpush1.bf16.msra.mxu0 %v82
  %101 = vmatprep.subr.bf16.mxu0 0
  %102 = vmatpush1.bf16.msra.mxu0 %v83
  %103 = vmatprep.subr.bf16.mxu0 0
  %104 = vmatpush1.bf16.msra.mxu0 %v84
  %105 = vmatprep.subr.bf16.mxu0 0
  %106 = vmatpush1.bf16.msra.mxu0 %v85
  %107 = vmatprep.subr.bf16.mxu0 0
  %108 = vmatpush1.bf16.msra.mxu0 %v86
  %109 = vmatprep.subr.bf16.mxu0 0
  %110 = vmatpush1.bf16.msra.mxu0 %v87
  %111 = vmatprep.subr.bf16.mxu0 0
  %112 = vmatpush1.bf16.msra.mxu0 %v88
  %113 = vmatprep.subr.bf16.mxu0 0
  %114 = vmatpush1.bf16.msra.mxu0 0
  %115 = vmatprep.subr.bf16.mxu0 0
  %116 = vmatpush1.bf16.msra.mxu0 0
  %117 = vmatprep.subr.bf16.mxu0 0
  %118 = vmatpush1.bf16.msra.mxu0 0
  %119 = vmatprep.subr.bf16.mxu0 0
  %120 = vmatpush1.bf16.msra.mxu0 0
  %121 = vmatprep.subr.bf16.mxu0 0
  %122 = vmatpush1.bf16.msra.mxu0 0
  %123 = vmatprep.subr.bf16.mxu0 0
  %124 = vmatpush1.bf16.msra.mxu0 0
  %125 = vmatprep.subr.bf16.mxu0 0
  %126 = vmatpush1.bf16.msra.mxu0 0
  %127 = vmatprep.subr.bf16.mxu0 0
  %128 = vmatpush1.bf16.msra.mxu0 0
  %129 = vmatprep.mubr.bf16.mxu0 0
  %130 = vmatmul.mubr.bf16.gmra.mrb[0].mxu0 %v47
  %v131 = vpop.f32.mrb[0].mxu0
  %v132 = vadd.f32 %v41, %v131
  %v133 = vpop.f32.mrb[0].mxu0
  %v134 = vpop.f32.mrb[0].mxu0
  %v135 = vadd.f32 %v41, %v134
  %v136 = vpop.f32.mrb[0].mxu0
  %137 = vdwg.mxu0
  %v138 = vld [vmem:[%s3] sm:$0xf]
  %v139 = vld [vmem:[%s3 + $0x4] sm:$0xf]
  %v140 = vunpack.c.l.bf16 %v138
  %v141 = vunpack.c.l.bf16 %v139
  %v142 = vadd.f32 %v132, %v140
  %v143 = vadd.f32 %v135, %v141
  %v144 = vpack.c.bf16 %v143, %v142
  %v146 = vunpack.c.l.b16 %v144
  %v147 = vunpack.c.h.b16 %v144
  %v148 = vpack.c.b16 %v146, %v146
  %v149 = vpack.c.b16 %v147, %v147
  %152 = vst [vmem:[%s4] sm:$0xf] %v148
  %153 = vst [vmem:[%s4 + $0x4] sm:$0xf] %v149
  // Predicated region
  $region18: #{transformer_forward.37} parent=0 // pred_check
    _
  $region19: #{transformer_forward.37} parent=0 // pred_check_branch
    %155 = sbr.rel (0) target = $region21
  $region20: #{transformer_forward.37} parent=0 // pred_region
    _
  $region21: #{transformer_forward.37} parent=0 // pred_fallthru
    _
  // Predicated region
  $region22: #{transformer_forward.37} parent=0 // pred_check
    _
  $region23: #{transformer_forward.37} parent=0 // pred_check_branch
    %157 = sbr.rel (0) target = $region25
  $region24: #{transformer_forward.37} parent=0 // pred_region
    _
  $region25: #{transformer_forward.37} parent=0 // pred_fallthru
    _

// kernel: transformer_forward.35
$region0: #{transformer_forward.35}
  #allocation0 [shape = 'u32[]', space=smem, size = 0x4, offset = 0x4, fixed_abs, tag = 'smem constant byte address 0x4 - core index']
  #allocation1 [shape = 'u32[144,128]{1,0:T(1,128)}', space=vmem, size = 0x12000, scoped, tag = 'internal scratch']
  %s0 = inlined_call_operand.vmem [shape: bf16[16,128], index: 0, kind: input, shape index: {}]
  %s1 = inlined_call_operand.vmem [shape: f32[1,128], index: 1, kind: input, shape index: {}]
  %s2 = inlined_call_operand.vmem [shape: f32[1,128], index: 2, kind: input, shape index: {}]
  %s3 = inlined_call_operand.vmem [shape: bf16[128,384], index: 3, kind: input, shape index: {}]
  %s4 = inlined_call_operand.vmem [shape: f32[1,384], index: 4, kind: input, shape index: {}]
  %s5 = inlined_call_operand.vmem [shape: bf16[16,384], index: 5, kind: output, shape index: {}]
  %s6 = sld [smem:[#allocation0]]
  $region30: #{transformer_forward.35} parent=0
    _
  %s8 = ssub.s32 1, %s6
  %s9 = scalar_select 0, %s8, %s6
  // Predicated region
  $region2: #{transformer_forward.35} parent=0 // pred_check
    _
  $region3: #{transformer_forward.35} parent=0 // pred_check_branch
    %11 = sbr.rel (0) target = $region5
  $region4: #{transformer_forward.35} parent=0 // pred_region
    _
  $region5: #{transformer_forward.35} parent=0 // pred_fallthru
    _
  // Predicated region
  $region6: #{transformer_forward.35} parent=0 // pred_check
    _
  $region7: #{transformer_forward.35} parent=0 // pred_check_branch
    %13 = sbr.rel (0) target = $region9
  $region8: #{transformer_forward.35} parent=0 // pred_region
    _
  $region9: #{transformer_forward.35} parent=0 // pred_fallthru
    _
  // Predicated region
  $region10: #{transformer_forward.35} parent=0 // pred_check
    _
  $region11: #{transformer_forward.35} parent=0 // pred_check_branch
    %15 = sbr.rel (0) target = $region13
  $region12: #{transformer_forward.35} parent=0 // pred_region
    _
  $region13: #{transformer_forward.35} parent=0 // pred_fallthru
    _
  // Predicated region
  $region14: #{transformer_forward.35} parent=0 // pred_check
    _
  $region15: #{transformer_forward.35} parent=0 // pred_check_branch
    %17 = sbr.rel (0) target = $region17
  $region16: #{transformer_forward.35} parent=0 // pred_region
    _
  $region17: #{transformer_forward.35} parent=0 // pred_fallthru
    _
  // Predicated region
  $region18: #{transformer_forward.35} parent=0 // pred_check
    _
  $region19: #{transformer_forward.35} parent=0 // pred_check_branch
    %19 = sbr.rel (0) target = $region21
  $region20: #{transformer_forward.35} parent=0 // pred_region
    _
  $region21: #{transformer_forward.35} parent=0 // pred_fallthru
    _
  %v21 = vld [vmem:[%s0] sm:$0xf]
  %v22 = vld [vmem:[%s0 + $0x4] sm:$0xf]
  %v23 = vunpack.c.l.bf16 %v21
  %v24 = vunpack.c.l.bf16 %v22
  %25 = vadd.xlane.f32.xlu0 %v23
  %v26 = vpop.xlane.xlu0 %25
  %27 = vadd.xlane.f32.xlu0 %v24
  %v28 = vpop.xlane.xlu0 %27
  %v29 = vrcp.pop 128.0
  %v30 = vmul.f32 %v26, %v29
  %v31 = vmul.f32 %v28, %v29
  %v32 = vsub.f32 %v23, %v30
  %v33 = vsub.f32 %v24, %v31
  %v34 = vmul.f32 %v32, %v32
  %v35 = vmul.f32 %v33, %v33
  %36 = vadd.xlane.f32.xlu0 %v34
  %v37 = vpop.xlane.xlu0 %36
  %38 = vadd.xlane.f32.xlu0 %v35
  %v39 = vpop.xlane.xlu0 %38
  %v40 = vrcp.pop 127.0
  %v41 = vmul.f32 %v37, %v40
  %v42 = vmul.f32 %v39, %v40
  %v43 = vld [vmem:[%s1] sm:$0x1]
  %v45 = vlaneseq
  %v46 = vshrl.u32 %v45, 7
  %v47 = vsub.s32 0, %v46
  %v48 = vrot.slane %v43, %v47
  %v50 = vmul.f32 %v48, %v32
  %v51 = vmul.f32 %v48, %v33
  %v52 = vrsqrt.pop %v41
  %v53 = vmul.f32 %v41, %v52
  %vm54 = vcmp.eq.f32.partialorder %v41, inf
  %v55 = vsel %vm54, %v41, %v53
  %vm56 = vcmp.eq.f32.partialorder %v41, 0.0
  %v57 = vand.u32 %v41, 2147483648
  %v58 = vsel %vm56, %v57, %v55
  %v59 = vrsqrt.pop %v42
  %v60 = vmul.f32 %v42, %v59
  %vm61 = vcmp.eq.f32.partialorder %v42, inf
  %v62 = vsel %vm61, %v42, %v60
  %vm63 = vcmp.eq.f32.partialorder %v42, 0.0
  %v64 = vand.u32 %v42, 2147483648
  %v65 = vsel %vm63, %v64, %v62
  %v66 = vadd.f32 %v58, 1e-06
  %v67 = vadd.f32 %v65, 1e-06
  %v68 = vrcp.pop %v66
  %v69 = vmul.f32 %v50, %v68
  %v70 = vrcp.pop %v67
  %v71 = vmul.f32 %v51, %v70
  %v72 = vld [vmem:[%s2] sm:$0x1]
  %v74 = vlaneseq
  %v75 = vshrl.u32 %v74, 7
  %v76 = vsub.s32 0, %v75
  %v77 = vrot.slane %v72, %v76
  %v79 = vadd.f32 %v69, %v77
  %v80 = vadd.f32 %v71, %v77
  %v81 = vpack.c.bf16 %v80, %v79
  %v82 = vld [vmem:[%s3] sm:$0xff]
  %v83 = vld [vmem:[%s3 + $0x8] sm:$0xf]
  %v84 = vld [vmem:[%s3 + $0xc] sm:$0xff]
  %v85 = vld [vmem:[%s3 + $0x14] sm:$0xf]
  %v86 = vld [vmem:[%s3 + $0x18] sm:$0xff]
  %v87 = vld [vmem:[%s3 + $0x20] sm:$0xf]
  %v88 = vld [vmem:[%s3 + $0x24] sm:$0xff]
  %v89 = vld [vmem:[%s3 + $0x2c] sm:$0xf]
  %v90 = vld [vmem:[%s3 + $0x30] sm:$0xff]
  %v91 = vld [vmem:[%s3 + $0x38] sm:$0xf]
  %v92 = vld [vmem:[%s3 + $0x3c] sm:$0xff]
  %v93 = vld [vmem:[%s3 + $0x44] sm:$0xf]
  %v94 = vld [vmem:[%s3 + $0x48] sm:$0xff]
  %v95 = vld [vmem:[%s3 + $0x50] sm:$0xf]
  %v96 = vld [vmem:[%s3 + $0x54] sm:$0xff]
  %v97 = vld [vmem:[%s3 + $0x5c] sm:$0xf]
  %v98 = vld [vmem:[%s3 + $0x60] sm:$0xff]
  %v99 = vld [vmem:[%s3 + $0x68] sm:$0xf]
  %v100 = vld [vmem:[%s3 + $0x6c] sm:$0xff]
  %v101 = vld [vmem:[%s3 + $0x74] sm:$0xf]
  %v102 = vld [vmem:[%s3 + $0x78] sm:$0xff]
  %v103 = vld [vmem:[%s3 + $0x80] sm:$0xf]
  %v104 = vld [vmem:[%s3 + $0x84] sm:$0xff]
  %v105 = vld [vmem:[%s3 + $0x8c] sm:$0xf]
  %v106 = vld [vmem:[%s3 + $0x90] sm:$0xff]
  %v107 = vld [vmem:[%s3 + $0x98] sm:$0xf]
  %v108 = vld [vmem:[%s3 + $0x9c] sm:$0xff]
  %v109 = vld [vmem:[%s3 + $0xa4] sm:$0xf]
  %v110 = vld [vmem:[%s3 + $0xa8] sm:$0xff]
  %v111 = vld [vmem:[%s3 + $0xb0] sm:$0xf]
  %v112 = vld [vmem:[%s3 + $0xb4] sm:$0xff]
  %v113 = vld [vmem:[%s3 + $0xbc] sm:$0xf]
  %v114 = vld [vmem:[%s4] sm:$0x7]
  %v116 = vlaneseq
  %v117 = vshrl.u32 %v116, 7
  %v118 = vsub.s32 0, %v117
  %v119 = vrot.slane %v114, %v118
  %v120 = vlaneseq
  %v121 = vshrl.u32 %v120, 7
  %v122 = vsub.s32 1, %v121
  %v123 = vrot.slane %v114, %v122
  %v124 = vlaneseq
  %v125 = vshrl.u32 %v124, 7
  %v126 = vsub.s32 2, %v125
  %v127 = vrot.slane %v114, %v126
  %v163 = vunpack.c.l.b16 %v82
  %v164 = vunpack.c.h.b16 %v82
  %v165 = vunpack.c.l.b16 %v83
  %v166 = vunpack.c.l.b16 %v84
  %v167 = vunpack.c.h.b16 %v84
  %v168 = vunpack.c.l.b16 %v85
  %v169 = vunpack.c.l.b16 %v86
  %v170 = vunpack.c.h.b16 %v86
  %v171 = vunpack.c.l.b16 %v87
  %v172 = vunpack.c.l.b16 %v88
  %v173 = vunpack.c.h.b16 %v88
  %v174 = vunpack.c.l.b16 %v89
  %v175 = vunpack.c.l.b16 %v90
  %v176 = vunpack.c.h.b16 %v90
  %v177 = vunpack.c.l.b16 %v91
  %v178 = vunpack.c.l.b16 %v92
  %v179 = vunpack.c.h.b16 %v92
  %v180 = vunpack.c.l.b16 %v93
  %v181 = vunpack.c.l.b16 %v94
  %v182 = vunpack.c.h.b16 %v94
  %v183 = vunpack.c.l.b16 %v95
  %v184 = vunpack.c.l.b16 %v96
  %v185 = vunpack.c.h.b16 %v96
  %v186 = vunpack.c.l.b16 %v97
  %v187 = vunpack.c.l.b16 %v98
  %v188 = vunpack.c.h.b16 %v98
  %v189 = vunpack.c.l.b16 %v99
  %v190 = vunpack.c.l.b16 %v100
  %v191 = vunpack.c.h.b16 %v100
  %v192 = vunpack.c.l.b16 %v101
  %v193 = vunpack.c.l.b16 %v102
  %v194 = vunpack.c.h.b16 %v102
  %v195 = vunpack.c.l.b16 %v103
  %v196 = vunpack.c.l.b16 %v104
  %v197 = vunpack.c.h.b16 %v104
  %v198 = vunpack.c.l.b16 %v105
  %v199 = vunpack.c.l.b16 %v106
  %v200 = vunpack.c.h.b16 %v106
  %v201 = vunpack.c.l.b16 %v107
  %v202 = vunpack.c.l.b16 %v108
  %v203 = vunpack.c.h.b16 %v108
  %v204 = vunpack.c.l.b16 %v109
  %v205 = vunpack.c.l.b16 %v110
  %v206 = vunpack.c.h.b16 %v110
  %v207 = vunpack.c.l.b16 %v111
  %v208 = vunpack.c.l.b16 %v112
  %v209 = vunpack.c.h.b16 %v112
  %v210 = vunpack.c.l.b16 %v113
  %v211 = vpack.c.b16 %v166, %v163
  %v212 = vpack.c.b16 %v167, %v164
  %v213 = vpack.c.b16 %v168, %v165
  %v214 = vpack.c.b16 %v172, %v169
  %v215 = vpack.c.b16 %v173, %v170
  %v216 = vpack.c.b16 %v174, %v171
  %v217 = vpack.c.b16 %v178, %v175
  %v218 = vpack.c.b16 %v179, %v176
  %v219 = vpack.c.b16 %v180, %v177
  %v220 = vpack.c.b16 %v184, %v181
  %v221 = vpack.c.b16 %v185, %v182
  %v222 = vpack.c.b16 %v186, %v183
  %v223 = vpack.c.b16 %v190, %v187
  %v224 = vpack.c.b16 %v191, %v188
  %v225 = vpack.c.b16 %v192, %v189
  %v226 = vpack.c.b16 %v196, %v193
  %v227 = vpack.c.b16 %v197, %v194
  %v228 = vpack.c.b16 %v198, %v195
  %v229 = vpack.c.b16 %v202, %v199
  %v230 = vpack.c.b16 %v203, %v200
  %v231 = vpack.c.b16 %v204, %v201
  %v232 = vpack.c.b16 %v208, %v205
  %v233 = vpack.c.b16 %v209, %v206
  %v234 = vpack.c.b16 %v210, %v207
  %259 = vmatprep.subr.bf16.mxu0 %v212
  %260 = vmatpush1.bf16.msra.mxu0 %v211
  %261 = vmatprep.subr.bf16.mxu0 %v215
  %262 = vmatpush1.bf16.msra.mxu0 %v214
  %263 = vmatprep.subr.bf16.mxu0 %v218
  %264 = vmatpush1.bf16.msra.mxu0 %v217
  %265 = vmatprep.subr.bf16.mxu0 %v221
  %266 = vmatpush1.bf16.msra.mxu0 %v220
  %267 = vmatprep.subr.bf16.mxu0 %v224
  %268 = vmatpush1.bf16.msra.mxu0 %v223
  %269 = vmatprep.subr.bf16.mxu0 %v227
  %270 = vmatpush1.bf16.msra.mxu0 %v226
  %271 = vmatprep.subr.bf16.mxu0 %v230
  %272 = vmatpush1.bf16.msra.mxu0 %v229
  %273 = vmatprep.subr.bf16.mxu0 %v233
  %274 = vmatpush1.bf16.msra.mxu0 %v232
  %275 = vmatprep.subr.bf16.mxu0 0
  %276 = vmatpush1.bf16.msra.mxu0 0
  %277 = vmatprep.subr.bf16.mxu0 0
  %278 = vmatpush1.bf16.msra.mxu0 0
  %279 = vmatprep.subr.bf16.mxu0 0
  %280 = vmatpush1.bf16.msra.mxu0 0
  %281 = vmatprep.subr.bf16.mxu0 0
  %282 = vmatpush1.bf16.msra.mxu0 0
  %283 = vmatprep.subr.bf16.mxu0 0
  %284 = vmatpush1.bf16.msra.mxu0 0
  %285 = vmatprep.subr.bf16.mxu0 0
  %286 = vmatpush1.bf16.msra.mxu0 0
  %287 = vmatprep.subr.bf16.mxu0 0
  %288 = vmatpush1.bf16.msra.mxu0 0
  %289 = vmatprep.subr.bf16.mxu0 0
  %290 = vmatpush1.bf16.msra.mxu0 0
  %291 = vmatprep.mubr.bf16.mxu0 0
  %292 = vmatmul.mubr.bf16.gmra.mrb[0].mxu0 %v81
  %v293 = vpop.f32.mrb[0].mxu0
  %v294 = vadd.f32 %v119, %v293
  %v295 = vpop.f32.mrb[0].mxu0
  %v296 = vadd.f32 %v123, %v295
  %v297 = vpop.f32.mrb[0].mxu0
  %v298 = vadd.f32 %v119, %v297
  %v299 = vpop.f32.mrb[0].mxu0
  %v300 = vadd.f32 %v123, %v299
  %301 = vdwg.mxu0
  %302 = vmatprep.subr.bf16.mxu0 0
  %303 = vmatpush1.bf16.msra.mxu0 %v213
  %304 = vmatprep.subr.bf16.mxu0 0
  %305 = vmatpush1.bf16.msra.mxu0 %v216
  %306 = vmatprep.subr.bf16.mxu0 0
  %307 = vmatpush1.bf16.msra.mxu0 %v219
  %308 = vmatprep.subr.bf16.mxu0 0
  %309 = vmatpush1.bf16.msra.mxu0 %v222
  %310 = vmatprep.subr.bf16.mxu0 0
  %311 = vmatpush1.bf16.msra.mxu0 %v225
  %312 = vmatprep.subr.bf16.mxu0 0
  %313 = vmatpush1.bf16.msra.mxu0 %v228
  %314 = vmatprep.subr.bf16.mxu0 0
  %315 = vmatpush1.bf16.msra.mxu0 %v231
  %316 = vmatprep.subr.bf16.mxu0 0
  %317 = vmatpush1.bf16.msra.mxu0 %v234
  %318 = vmatprep.subr.bf16.mxu0 0
  %319 = vmatpush1.bf16.msra.mxu0 0
  %320 = vmatprep.subr.bf16.mxu0 0
  %321 = vmatpush1.bf16.msra.mxu0 0
  %322 = vmatprep.subr.bf16.mxu0 0
  %323 = vmatpush1.bf16.msra.mxu0 0
  %324 = vmatprep.subr.bf16.mxu0 0
  %325 = vmatpush1.bf16.msra.mxu0 0
  %326 = vmatprep.subr.bf16.mxu0 0
  %327 = vmatpush1.bf16.msra.mxu0 0
  %328 = vmatprep.subr.bf16.mxu0 0
  %329 = vmatpush1.bf16.msra.mxu0 0
  %330 = vmatprep.subr.bf16.mxu0 0
  %331 = vmatpush1.bf16.msra.mxu0 0
  %332 = vmatprep.subr.bf16.mxu0 0
  %333 = vmatpush1.bf16.msra.mxu0 0
  %334 = vmatprep.mubr.bf16.mxu0 0
  %335 = vmatmul.mubr.bf16.gmra.mrb[0].mxu0 %v81
  %v336 = vpop.f32.mrb[0].mxu0
  %v337 = vadd.f32 %v127, %v336
  %v338 = vpop.f32.mrb[0].mxu0
  %v339 = vpop.f32.mrb[0].mxu0
  %v340 = vadd.f32 %v127, %v339
  %v341 = vpop.f32.mrb[0].mxu0
  %342 = vdwg.mxu0
  %v343 = vpack.c.bf16 %v298, %v294
  %v344 = vpack.c.bf16 %v300, %v296
  %v345 = vpack.c.bf16 %v340, %v337
  %v349 = vunpack.c.l.b16 %v343
  %v350 = vunpack.c.l.b16 %v344
  %v351 = vunpack.c.l.b16 %v345
  %v352 = vunpack.c.h.b16 %v343
  %v353 = vunpack.c.h.b16 %v344
  %v354 = vunpack.c.h.b16 %v345
  %v355 = vpack.c.b16 %v350, %v349
  %v356 = vpack.c.b16 %v351, %v351
  %v357 = vpack.c.b16 %v353, %v352
  %v358 = vpack.c.b16 %v354, %v354
  %363 = vst [vmem:[%s5] sm:$0xff] %v355
  %364 = vst [vmem:[%s5 + $0x8] sm:$0xf] %v356
  %365 = vst [vmem:[%s5 + $0xc] sm:$0xff] %v357
  %366 = vst [vmem:[%s5 + $0x14] sm:$0xf] %v358
  // Predicated region
  $region22: #{transformer_forward.35} parent=0 // pred_check
    _
  $region23: #{transformer_forward.35} parent=0 // pred_check_branch
    %368 = sbr.rel (0) target = $region25
  $region24: #{transformer_forward.35} parent=0 // pred_region
    _
  $region25: #{transformer_forward.35} parent=0 // pred_fallthru
    _
  // Predicated region
  $region26: #{transformer_forward.35} parent=0 // pred_check
    _
  $region27: #{transformer_forward.35} parent=0 // pred_check_branch
    %370 = sbr.rel (0) target = $region29
  $region28: #{transformer_forward.35} parent=0 // pred_region
    _
  $region29: #{transformer_forward.35} parent=0 // pred_fallthru
    _

// kernel: transformer_forward.36
$region0: #{transformer_forward.36}
  #allocation0 [shape = 'u32[]', space=smem, size = 0x4, offset = 0x4, fixed_abs, tag = 'smem constant byte address 0x4 - core index']
  #allocation1 [shape = 'u32[144,128]{1,0:T(1,128)}', space=vmem, size = 0x12000, scoped, tag = 'internal scratch']
  #allocation2 [shape = 'f32[8,1]{1,0:T(8,128)}', space=vmem, size = 0x1000, scoped, tag = 'scratch operand']
  #allocation3 [shape = 'f32[8,1]{1,0:T(8,128)}', space=vmem, size = 0x1000, scoped, tag = 'scratch operand']
  #allocation4 [shape = 'f32[8,32]{1,0:T(8,128)}', space=vmem, size = 0x1000, scoped, tag = 'scratch operand']
  %s0 = inlined_call_operand.vmem [shape: bf16[2,4,8,32], index: 0, kind: input, shape index: {}]
  %s1 = inlined_call_operand.vmem [shape: bf16[2,4,8,32], index: 1, kind: input, shape index: {}]
  %s2 = inlined_call_operand.vmem [shape: bf16[2,4,8,32], index: 2, kind: input, shape index: {}]
  %s3 = inlined_call_operand.vmem [shape: s8[2,8,8], index: 3, kind: input, shape index: {}]
  %s4 = inlined_call_operand.vmem [shape: bf16[2,4,8,32], index: 4, kind: output, shape index: {}]
  %s5 = sld [smem:[#allocation0]]
  $region57: #{transformer_forward.36} parent=0
    _
  %s7 = ssub.s32 1, %s5
  %s8 = scalar_select 0, %s7, %s5
  loop: start=0, step=1, limit=10
  $region2: #{transformer_forward.36} parent=0 // loop_pre_header
    _
  $region3: #{transformer_forward.36} parent=0 // loop_header
    %s10 = sphi 0, %s14
    %p11 = scmp.ge.s32.totalorder %s10, 10
    %s17 = sphi 0, %s43
    %s18 = sphi 0, %s39
    %s19 = sphi 0, %s35
    %s20 = sphi 0, %s31
    %s21 = sphi 0, %s17
    %s22 = sphi 0, %s18
    %s23 = sphi 0, %s19
    %s24 = sphi 0, %s20
    %s25 = sphi 0, %s21
    %s26 = sphi 0, %s22
    %s27 = sphi 0, %s23
    %s28 = sphi 0, %s24
    %s50 = sphi 0, %s52
    %s53 = sphi 0, %s50
    %s54 = sphi 0, %s53
    %s70 = sphi 0, %s54
    %s80 = sphi 0, %s82
    %s83 = sphi 0, %s80
    %s84 = sphi 0, %s83
    %s100 = sphi 0, %s84
    %s110 = sphi 0, %s112
    %s113 = sphi 0, %s110
    %s114 = sphi 0, %s113
    %s130 = sphi 0, %s114
    %s140 = sphi 0, %s142
    %s143 = sphi 0, %s140
    %s144 = sphi 0, %s143
    %s160 = sphi 0, %s144
    %s170 = sphi 0, %s172
    %s173 = sphi 0, %s170
    %s174 = sphi 0, %s173
    %s190 = sphi 0, %s174
  $region4: #{transformer_forward.36} parent=0 // loop_header_branch
    %13 = sbr.rel (%p11) target = $region8
  $region5: #{transformer_forward.36} parent=0 // loop_body
    %s15 = ssub.s32 %s10, 1
    %s16 = ssub.s32 %s10, 2
    %s29 = sadd.s32 1, %s20
    %p30 = scmp.ge.s32.totalorder %s29, 1
    %s31 = scalar_select %p30, 0, %s29
    %s32 = sadd.s32 1, %s19
    %s33 = scalar_select %p30, %s32, %s19
    %p34 = scmp.ge.s32.totalorder %s33, 1
    %s35 = scalar_select %p34, 0, %s33
    %s36 = sadd.s32 1, %s18
    %s37 = scalar_select %p34, %s36, %s18
    %p38 = scmp.ge.s32.totalorder %s37, 4
    %s39 = scalar_select %p38, 0, %s37
    %s40 = sadd.s32 1, %s17
    %s41 = scalar_select %p38, %s40, %s17
    %p42 = scmp.ge.s32.totalorder %s41, 2
    %s43 = scalar_select %p42, 0, %s41
    %s44 = ssub.s32 %s17, %s43
    %s45 = ssub.s32 %s18, %s39
    %s46 = sor.u32 %s44, %s45
    %s47 = ssub.s32 %s19, %s35
    %s48 = sor.u32 %s46, %s47
    %p49 = scmp.eq.s32.totalorder %s48, 0
    %s51 = sadd.s32 %s50, 1
    %s52 = scalar_select %p49, %s50, %s51
    %p55 = pneg %p49
    %p56 = scmp.eq.s32.totalorder %s10, 7
    %p57 = por %p55, %p56
    %p58 = scmp.ne.s32.totalorder %s50, %s53
    %p59 = scmp.eq.s32.totalorder %s10, 0
    %p60 = por %p58, %p59
    %p61 = scmp.ne.s32.totalorder %s50, %s53
    %p62 = scmp.eq.s32.totalorder %s15, 7
    %p63 = por %p61, %p62
    %p64 = scmp.ne.s32.totalorder %s53, %s54
    %p65 = scmp.eq.s32.totalorder %s15, 0
    %p66 = por %p64, %p65
    %p67 = scmp.ne.s32.totalorder %s53, %s54
    %p68 = scmp.eq.s32.totalorder %s16, 7
    %p69 = por %p67, %p68
    %p71 = scmp.ne.s32.totalorder %s54, %s70
    %p72 = scmp.eq.s32.totalorder %s16, 0
    %p73 = por %p71, %p72
    %s74 = ssub.s32 %s17, %s43
    %s75 = ssub.s32 %s18, %s39
    %s76 = sor.u32 %s74, %s75
    %s77 = ssub.s32 %s20, %s31
    %s78 = sor.u32 %s76, %s77
    %p79 = scmp.eq.s32.totalorder %s78, 0
    %s81 = sadd.s32 %s80, 1
    %s82 = scalar_select %p79, %s80, %s81
    %p85 = pneg %p79
    %p86 = scmp.eq.s32.totalorder %s10, 7
    %p87 = por %p85, %p86
    %p88 = scmp.ne.s32.totalorder %s80, %s83
    %p89 = scmp.eq.s32.totalorder %s10, 0
    %p90 = por %p88, %p89
    %p91 = scmp.ne.s32.totalorder %s80, %s83
    %p92 = scmp.eq.s32.totalorder %s15, 7
    %p93 = por %p91, %p92
    %p94 = scmp.ne.s32.totalorder %s83, %s84
    %p95 = scmp.eq.s32.totalorder %s15, 0
    %p96 = por %p94, %p95
    %p97 = scmp.ne.s32.totalorder %s83, %s84
    %p98 = scmp.eq.s32.totalorder %s16, 7
    %p99 = por %p97, %p98
    %p101 = scmp.ne.s32.totalorder %s84, %s100
    %p102 = scmp.eq.s32.totalorder %s16, 0
    %p103 = por %p101, %p102
    %s104 = ssub.s32 %s17, %s43
    %s105 = ssub.s32 %s18, %s39
    %s106 = sor.u32 %s104, %s105
    %s107 = ssub.s32 %s20, %s31
    %s108 = sor.u32 %s106, %s107
    %p109 = scmp.eq.s32.totalorder %s108, 0
    %s111 = sadd.s32 %s110, 1
    %s112 = scalar_select %p109, %s110, %s111
    %p115 = pneg %p109
    %p116 = scmp.eq.s32.totalorder %s10, 7
    %p117 = por %p115, %p116
    %p118 = scmp.ne.s32.totalorder %s110, %s113
    %p119 = scmp.eq.s32.totalorder %s10, 0
    %p120 = por %p118, %p119
    %p121 = scmp.ne.s32.totalorder %s110, %s113
    %p122 = scmp.eq.s32.totalorder %s15, 7
    %p123 = por %p121, %p122
    %p124 = scmp.ne.s32.totalorder %s113, %s114
    %p125 = scmp.eq.s32.totalorder %s15, 0
    %p126 = por %p124, %p125
    %p127 = scmp.ne.s32.totalorder %s113, %s114
    %p128 = scmp.eq.s32.totalorder %s16, 7
    %p129 = por %p127, %p128
    %p131 = scmp.ne.s32.totalorder %s114, %s130
    %p132 = scmp.eq.s32.totalorder %s16, 0
    %p133 = por %p131, %p132
    %s134 = ssub.s32 %s17, %s43
    %s135 = ssub.s32 %s19, %s35
    %s136 = sor.u32 %s134, %s135
    %s137 = ssub.s32 %s20, %s31
    %s138 = sor.u32 %s136, %s137
    %p139 = scmp.eq.s32.totalorder %s138, 0
    %s141 = sadd.s32 %s140, 1
    %s142 = scalar_select %p139, %s140, %s141
    %p145 = pneg %p139
    %p146 = scmp.eq.s32.totalorder %s10, 7
    %p147 = por %p145, %p146
    %p148 = scmp.ne.s32.totalorder %s140, %s143
    %p149 = scmp.eq.s32.totalorder %s10, 0
    %p150 = por %p148, %p149
    %p151 = scmp.ne.s32.totalorder %s140, %s143
    %p152 = scmp.eq.s32.totalorder %s15, 7
    %p153 = por %p151, %p152
    %p154 = scmp.ne.s32.totalorder %s143, %s144
    %p155 = scmp.eq.s32.totalorder %s15, 0
    %p156 = por %p154, %p155
    %p157 = scmp.ne.s32.totalorder %s143, %s144
    %p158 = scmp.eq.s32.totalorder %s16, 7
    %p159 = por %p157, %p158
    %p161 = scmp.ne.s32.totalorder %s144, %s160
    %p162 = scmp.eq.s32.totalorder %s16, 0
    %p163 = por %p161, %p162
    %s164 = ssub.s32 %s17, %s43
    %s165 = ssub.s32 %s18, %s39
    %s166 = sor.u32 %s164, %s165
    %s167 = ssub.s32 %s19, %s35
    %s168 = sor.u32 %s166, %s167
    %p169 = scmp.eq.s32.totalorder %s168, 0
    %s171 = sadd.s32 %s170, 1
    %s172 = scalar_select %p169, %s170, %s171
    %p175 = pneg %p169
    %p176 = scmp.eq.s32.totalorder %s10, 7
    %p177 = por %p175, %p176
    %p178 = scmp.ne.s32.totalorder %s170, %s173
    %p179 = scmp.eq.s32.totalorder %s10, 0
    %p180 = por %p178, %p179
    %p181 = scmp.ne.s32.totalorder %s170, %s173
    %p182 = scmp.eq.s32.totalorder %s15, 7
    %p183 = por %p181, %p182
    %p184 = scmp.ne.s32.totalorder %s173, %s174
    %p185 = scmp.eq.s32.totalorder %s15, 0
    %p186 = por %p184, %p185
    %p187 = scmp.ne.s32.totalorder %s173, %s174
    %p188 = scmp.eq.s32.totalorder %s16, 7
    %p189 = por %p187, %p188
    %p191 = scmp.ne.s32.totalorder %s174, %s190
    %p192 = scmp.eq.s32.totalorder %s16, 0
    %p193 = por %p191, %p192
    %p194 = scmp.le.s32.totalorder 1, %s10
    %p195 = scmp.lt.s32.totalorder %s10, 9
    %p196 = pnand %p194, %p195
    %p197 = pneg %p196
    // Predicated region
    $region9: #{transformer_forward.36} parent=5 // pred_check
      _
    $region10: #{transformer_forward.36} parent=5 // pred_check_branch
      %199 = sbr.rel (%p196) target = $region12
    $region11: #{transformer_forward.36} parent=5 // pred_region
      %s200 = ssub.s32 %s10, 1
    $region12: #{transformer_forward.36} parent=5 // pred_fallthru
      _
    %p201 = scmp.lt.s32.totalorder %s10, 8
    // Predicated region
    $region13: #{transformer_forward.36} parent=5 // pred_check
      %p202 = pneg %p201
    $region14: #{transformer_forward.36} parent=5 // pred_check_branch
      %204 = sbr.rel (%p202) target = $region16
    $region15: #{transformer_forward.36} parent=5 // pred_region
      // Predicated region
      $region17: #{transformer_forward.36} parent=15 // pred_check
        %p205 = pneg %p60
      $region18: #{transformer_forward.36} parent=15 // pred_check_branch
        %207 = sbr.rel (%p205) target = $region20
      $region19: #{transformer_forward.36} parent=15 // pred_region
        %p208 = scmp.lt.s32.totalorder %s17, 1
        %s209 = scalar_select %p208, %s17, 1
        %p210 = scmp.lt.s32.totalorder %s18, 3
        %s211 = scalar_select %p210, %s18, 3
        %p212 = scmp.lt.s32.totalorder %s19, 0
        %s213 = scalar_select %p212, %s19, 0
        %s214 = sadd.s32 %s213, %s211
        %s215 = smul.addr %s209, 4
        %s216 = sadd.s32 %s214, %s215
        %s217 = smul.addr %s216, 4
        %s218 = scalar_lea.vmem %s0, %s217
      $region20: #{transformer_forward.36} parent=15 // pred_fallthru
        _
      // Predicated region
      $region21: #{transformer_forward.36} parent=15 // pred_check
        %p219 = pneg %p90
      $region22: #{transformer_forward.36} parent=15 // pred_check_branch
        %221 = sbr.rel (%p219) target = $region24
      $region23: #{transformer_forward.36} parent=15 // pred_region
        %p222 = scmp.lt.s32.totalorder %s17, 1
        %s223 = scalar_select %p222, %s17, 1
        %p224 = scmp.lt.s32.totalorder %s18, 3
        %s225 = scalar_select %p224, %s18, 3
        %p226 = scmp.lt.s32.totalorder %s20, 0
        %s227 = scalar_select %p226, %s20, 0
        %s228 = sadd.s32 %s227, %s225
        %s229 = smul.addr %s223, 4
        %s230 = sadd.s32 %s228, %s229
        %s231 = smul.addr %s230, 4
        %s232 = scalar_lea.vmem %s1, %s231
      $region24: #{transformer_forward.36} parent=15 // pred_fallthru
        _
      // Predicated region
      $region25: #{transformer_forward.36} parent=15 // pred_check
        %p233 = pneg %p120
      $region26: #{transformer_forward.36} parent=15 // pred_check_branch
        %235 = sbr.rel (%p233) target = $region28
      $region27: #{transformer_forward.36} parent=15 // pred_region
        %p236 = scmp.lt.s32.totalorder %s17, 1
        %s237 = scalar_select %p236, %s17, 1
        %p238 = scmp.lt.s32.totalorder %s18, 3
        %s239 = scalar_select %p238, %s18, 3
        %p240 = scmp.lt.s32.totalorder %s20, 0
        %s241 = scalar_select %p240, %s20, 0
        %s242 = sadd.s32 %s241, %s239
        %s243 = smul.addr %s237, 4
        %s244 = sadd.s32 %s242, %s243
        %s245 = smul.addr %s244, 4
        %s246 = scalar_lea.vmem %s2, %s245
      $region28: #{transformer_forward.36} parent=15 // pred_fallthru
        _
      // Predicated region
      $region29: #{transformer_forward.36} parent=15 // pred_check
        %p247 = pneg %p150
      $region30: #{transformer_forward.36} parent=15 // pred_check_branch
        %249 = sbr.rel (%p247) target = $region32
      $region31: #{transformer_forward.36} parent=15 // pred_region
        %p250 = scmp.lt.s32.totalorder %s17, 1
        %s251 = scalar_select %p250, %s17, 1
        %p252 = scmp.lt.s32.totalorder %s19, 0
        %s253 = scalar_select %p252, %s19, 0
        %p254 = scmp.lt.s32.totalorder %s20, 0
        %s255 = scalar_select %p254, %s20, 0
        %s256 = sadd.s32 %s255, %s253
        %s257 = sadd.s32 %s256, %s251
        %s258 = smul.addr %s257, 2
        %s259 = scalar_lea.vmem %s3, %s258
      $region32: #{transformer_forward.36} parent=15 // pred_fallthru
        _
    $region16: #{transformer_forward.36} parent=5 // pred_fallthru
      _
    %p260 = scmp.le.s32.totalorder 1, %s10
    %p261 = scmp.lt.s32.totalorder %s10, 9
    %p262 = pnand %p260, %p261
    %p263 = pneg %p262
    // Predicated region
    $region33: #{transformer_forward.36} parent=5 // pred_check
      _
    $region34: #{transformer_forward.36} parent=5 // pred_check_branch
      %265 = sbr.rel (%p262) target = $region36
    $region35: #{transformer_forward.36} parent=5 // pred_region
      %s266 = ssub.s32 %s10, 1
      %p267 = scmp.lt.s32.totalorder %s21, 1
      %s268 = scalar_select %p267, %s21, 1
      %p269 = scmp.lt.s32.totalorder %s22, 3
      %s270 = scalar_select %p269, %s22, 3
      %p271 = scmp.lt.s32.totalorder %s23, 0
      %s272 = scalar_select %p271, %s23, 0
      %s273 = sadd.s32 %s272, %s270
      %s274 = smul.addr %s268, 4
      %s275 = sadd.s32 %s273, %s274
      %s276 = smul.addr %s275, 4
      %s277 = scalar_lea.vmem %s0, %s276
      %p278 = pneg %p66
      %p279 = pneg %p63
      %p280 = scmp.lt.s32.totalorder %s21, 1
      %s281 = scalar_select %p280, %s21, 1
      %p282 = scmp.lt.s32.totalorder %s22, 3
      %s283 = scalar_select %p282, %s22, 3
      %p284 = scmp.lt.s32.totalorder %s24, 0
      %s285 = scalar_select %p284, %s24, 0
      %s286 = sadd.s32 %s285, %s283
      %s287 = smul.addr %s281, 4
      %s288 = sadd.s32 %s286, %s287
      %s289 = smul.addr %s288, 4
      %s290 = scalar_lea.vmem %s1, %s289
      %p291 = pneg %p96
      %p292 = pneg %p93
      %p293 = scmp.lt.s32.totalorder %s21, 1
      %s294 = scalar_select %p293, %s21, 1
      %p295 = scmp.lt.s32.totalorder %s22, 3
      %s296 = scalar_select %p295, %s22, 3
      %p297 = scmp.lt.s32.totalorder %s24, 0
      %s298 = scalar_select %p297, %s24, 0
      %s299 = sadd.s32 %s298, %s296
      %s300 = smul.addr %s294, 4
      %s301 = sadd.s32 %s299, %s300
      %s302 = smul.addr %s301, 4
      %s303 = scalar_lea.vmem %s2, %s302
      %p304 = pneg %p126
      %p305 = pneg %p123
      %p306 = scmp.lt.s32.totalorder %s21, 1
      %s307 = scalar_select %p306, %s21, 1
      %p308 = scmp.lt.s32.totalorder %s23, 0
      %s309 = scalar_select %p308, %s23, 0
      %p310 = scmp.lt.s32.totalorder %s24, 0
      %s311 = scalar_select %p310, %s24, 0
      %s312 = sadd.s32 %s311, %s309
      %s313 = sadd.s32 %s312, %s307
      %s314 = smul.addr %s313, 2
      %s315 = scalar_lea.vmem %s3, %s314
      %p316 = pneg %p156
      %p317 = pneg %p153
      %p318 = pneg %p186
      %p319 = pneg %p183
      %p320 = scmp.lt.s32.totalorder %s21, 1
      %s321 = scalar_select %p320, %s21, 1
      %p322 = scmp.lt.s32.totalorder %s22, 3
      %s323 = scalar_select %p322, %s22, 3
      %p324 = scmp.lt.s32.totalorder %s23, 0
      %s325 = scalar_select %p324, %s23, 0
      %s326 = sadd.s32 %s325, %s323
      %s327 = smul.addr %s321, 4
      %s328 = sadd.s32 %s326, %s327
      %s329 = smul.addr %s328, 4
      %s330 = scalar_lea.vmem %s4, %s329
      %p331 = scmp.lt.s32.totalorder %s21, 1
      %s332 = scalar_select %p331, %s21, 1
      %p333 = scmp.lt.s32.totalorder %s22, 3
      %s334 = scalar_select %p333, %s22, 3
      %p335 = scmp.lt.s32.totalorder %s23, 0
      %s336 = scalar_select %p335, %s23, 0
      %s337 = sadd.s32 %s336, %s334
      %s338 = smul.addr %s332, 4
      %s339 = sadd.s32 %s337, %s338
      %s340 = smul.addr %s339, 4
      %s341 = scalar_lea.vmem %s0, %s340
      %p342 = scmp.lt.s32.totalorder %s21, 1
      %s343 = scalar_select %p342, %s21, 1
      %p344 = scmp.lt.s32.totalorder %s22, 3
      %s345 = scalar_select %p344, %s22, 3
      %p346 = scmp.lt.s32.totalorder %s24, 0
      %s347 = scalar_select %p346, %s24, 0
      %s348 = sadd.s32 %s347, %s345
      %s349 = smul.addr %s343, 4
      %s350 = sadd.s32 %s348, %s349
      %s351 = smul.addr %s350, 4
      %s352 = scalar_lea.vmem %s1, %s351
      %p353 = scmp.lt.s32.totalorder %s21, 1
      %s354 = scalar_select %p353, %s21, 1
      %p355 = scmp.lt.s32.totalorder %s22, 3
      %s356 = scalar_select %p355, %s22, 3
      %p357 = scmp.lt.s32.totalorder %s24, 0
      %s358 = scalar_select %p357, %s24, 0
      %s359 = sadd.s32 %s358, %s356
      %s360 = smul.addr %s354, 4
      %s361 = sadd.s32 %s359, %s360
      %s362 = smul.addr %s361, 4
      %s363 = scalar_lea.vmem %s2, %s362
      %p364 = scmp.lt.s32.totalorder %s21, 1
      %s365 = scalar_select %p364, %s21, 1
      %p366 = scmp.lt.s32.totalorder %s23, 0
      %s367 = scalar_select %p366, %s23, 0
      %p368 = scmp.lt.s32.totalorder %s24, 0
      %s369 = scalar_select %p368, %s24, 0
      %s370 = sadd.s32 %s369, %s367
      %s371 = sadd.s32 %s370, %s365
      %s372 = smul.addr %s371, 2
      %s373 = scalar_lea.vmem %s3, %s372
      %p374 = scmp.lt.s32.totalorder %s21, 1
      %s375 = scalar_select %p374, %s21, 1
      %p376 = scmp.lt.s32.totalorder %s22, 3
      %s377 = scalar_select %p376, %s22, 3
      %p378 = scmp.lt.s32.totalorder %s23, 0
      %s379 = scalar_select %p378, %s23, 0
      %s380 = sadd.s32 %s379, %s377
      %s381 = smul.addr %s375, 4
      %s382 = sadd.s32 %s380, %s381
      %s383 = smul.addr %s382, 4
      %s384 = scalar_lea.vmem %s4, %s383
      %p388 = scmp.eq.s32.totalorder %s24, 0
      // Predicated region
      $region37: #{transformer_forward.36} parent=35 // pred_check
        %p389 = pneg %p388
      $region38: #{transformer_forward.36} parent=35 // pred_check_branch
        %391 = sbr.rel (%p389) target = $region40
      $region39: #{transformer_forward.36} parent=35 // pred_region
        %vm392 = vcmask 7168
        %393 = vst.msk [vmem:[#allocation2] sm:$0xff] %vm392, -inf
        %394 = vst.msk [vmem:[#allocation3] sm:$0xff] %vm392, 0.0
        %vm395 = vcmask 261120
        %396 = vst.msk [vmem:[#allocation4] sm:$0xff] %vm395, 0.0
      $region40: #{transformer_forward.36} parent=35 // pred_fallthru
        _
      %v397 = vld [vmem:[%s341] sm:$0xf]
      %v398 = vld [vmem:[%s352] sm:$0xf]
      %v399 = vld [vmem:[%s363] sm:$0xf]
      %vm400 = vcmask 261120
      %v402 = vsel %vm400, %v397, 0
      %v405 = vsel %vm400, %v398, 0
      %407 = vmatprep.subr.bf16.mxu0 0
      %408 = vmatpush1.bf16.xpose.msra.mxu0 %v405
      %409 = vmatprep.subr.bf16.mxu0 0
      %410 = vmatpush1.bf16.xpose.msra.mxu0 0
      %411 = vmatprep.subr.bf16.mxu0 0
      %412 = vmatpush1.bf16.xpose.msra.mxu0 0
      %413 = vmatprep.subr.bf16.mxu0 0
      %414 = vmatpush1.bf16.xpose.msra.mxu0 0
      %415 = vmatprep.subr.bf16.mxu0 0
      %416 = vmatpush1.bf16.xpose.msra.mxu0 0
      %417 = vmatprep.subr.bf16.mxu0 0
      %418 = vmatpush1.bf16.xpose.msra.mxu0 0
      %419 = vmatprep.subr.bf16.mxu0 0
      %420 = vmatpush1.bf16.xpose.msra.mxu0 0
      %421 = vmatprep.subr.bf16.mxu0 0
      %422 = vmatpush1.bf16.xpose.msra.mxu0 0
      %423 = vmatprep.subr.bf16.mxu0 0
      %424 = vmatpush1.bf16.xpose.msra.mxu0 0
      %425 = vmatprep.subr.bf16.mxu0 0
      %426 = vmatpush1.bf16.xpose.msra.mxu0 0
      %427 = vmatprep.subr.bf16.mxu0 0
      %428 = vmatpush1.bf16.xpose.msra.mxu0 0
      %429 = vmatprep.subr.bf16.mxu0 0
      %430 = vmatpush1.bf16.xpose.msra.mxu0 0
      %431 = vmatprep.subr.bf16.mxu0 0
      %432 = vmatpush1.bf16.xpose.msra.mxu0 0
      %433 = vmatprep.subr.bf16.mxu0 0
      %434 = vmatpush1.bf16.xpose.msra.mxu0 0
      %435 = vmatprep.subr.bf16.mxu0 0
      %436 = vmatpush1.bf16.xpose.msra.mxu0 0
      %437 = vmatprep.subr.bf16.mxu0 0
      %438 = vmatpush1.bf16.xpose.msra.mxu0 0
      %439 = vmatprep.mubr.bf16.mxu0 0
      %440 = vmatmul.mubr.bf16.gmra.mrb[0].mxu0 %v402
      %v441 = vpop.f32.mrb[0].mxu0
      %v442 = vadd.f32 0.0, %v441
      %v443 = vpop.f32.mrb[0].mxu0
      %v444 = vpop.f32.mrb[0].mxu0
      %v445 = vpop.f32.mrb[0].mxu0
      %446 = vdwg.mxu0
      %v447 = vld [vmem:[%s373] sm:$0x3]
      %vm448 = vnez %v447
      %v449 = vsel %vm448, 16843009, 0
      %v450 = vunpack.c.0.s8 %v449
      %vm451 = vcmp.ne.s32.totalorder %v450, 0
      %v452 = vsel %vm451, %v442, -1e+09
      %v453 = vld [vmem:[#allocation2] sm:$0xff]
      %vm454 = vcmask 64512
      %v455 = vsel %vm454, %v452, -inf
      %456 = vmax.xlane.f32.xlu0 %v455
      %v457 = vpop.xlane.xlu0 %456
      %v458 = vmax.f32 %v453, %v457
      %v459 = vsub.f32 %v453, %v458
      %v460 = vmul.f32 %v459, 1.442695
      %v461 = vpow.pop %v460
      %463 = vset.pattern.permute.xlu0 0
      %464 = vperm.xlu0 %463, %v458
      %v465 = vpop.permute.xlu0 %464
      %v467 = vsub.f32 %v452, %v465
      %v468 = vmul.f32 %v467, 1.442695
      %v469 = vpow.pop %v468
      %v470 = vld [vmem:[#allocation3] sm:$0xff]
      %v471 = vmul.f32 %v461, %v470
      %v472 = vsel %vm454, %v469, 0.0
      %473 = vadd.xlane.f32.xlu0 %v472
      %v474 = vpop.xlane.xlu0 %473
      %v475 = vadd.f32 %v471, %v474
      %vm476 = vcmask 7168
      %477 = vst.msk [vmem:[#allocation3] sm:$0xff] %vm476, %v475
      %v478 = vld [vmem:[#allocation4] sm:$0xff]
      %480 = vset.pattern.permute.xlu0 0
      %481 = vperm.xlu0 %480, %v461
      %v482 = vpop.permute.xlu0 %481
      %v484 = vmul.f32 %v482, %v478
      %v485 = vpack.c.bf16 %v469, %v469
      %v487 = vsel %vm454, %v485, 0
      %vm489 = vcmask 1043456
      %v491 = vsel %vm489, %v399, 0
      %493 = vmatprep.subr.bf16.mxu0 0
      %494 = vmatpush1.bf16.msra.mxu0 %v491
      %495 = vmatprep.subr.bf16.mxu0 0
      %496 = vmatpush1.bf16.msra.mxu0 0
      %497 = vmatprep.subr.bf16.mxu0 0
      %498 = vmatpush1.bf16.msra.mxu0 0
      %499 = vmatprep.subr.bf16.mxu0 0
      %500 = vmatpush1.bf16.msra.mxu0 0
      %501 = vmatprep.subr.bf16.mxu0 0
      %502 = vmatpush1.bf16.msra.mxu0 0
      %503 = vmatprep.subr.bf16.mxu0 0
      %504 = vmatpush1.bf16.msra.mxu0 0
      %505 = vmatprep.subr.bf16.mxu0 0
      %506 = vmatpush1.bf16.msra.mxu0 0
      %507 = vmatprep.subr.bf16.mxu0 0
      %508 = vmatpush1.bf16.msra.mxu0 0
      %509 = vmatprep.subr.bf16.mxu0 0
      %510 = vmatpush1.bf16.msra.mxu0 0
      %511 = vmatprep.subr.bf16.mxu0 0
      %512 = vmatpush1.bf16.msra.mxu0 0
      %513 = vmatprep.subr.bf16.mxu0 0
      %514 = vmatpush1.bf16.msra.mxu0 0
      %515 = vmatprep.subr.bf16.mxu0 0
      %516 = vmatpush1.bf16.msra.mxu0 0
      %517 = vmatprep.subr.bf16.mxu0 0
      %518 = vmatpush1.bf16.msra.mxu0 0
      %519 = vmatprep.subr.bf16.mxu0 0
      %520 = vmatpush1.bf16.msra.mxu0 0
      %521 = vmatprep.subr.bf16.mxu0 0
      %522 = vmatpush1.bf16.msra.mxu0 0
      %523 = vmatprep.subr.bf16.mxu0 0
      %524 = vmatpush1.bf16.msra.mxu0 0
      %525 = vmatprep.mubr.bf16.mxu0 0
      %526 = vmatmul.mubr.bf16.gmra.mrb[0].mxu0 %v487
      %v527 = vpop.f32.mrb[0].mxu0
      %v528 = vadd.f32 0.0, %v527
      %v529 = vpop.f32.mrb[0].mxu0
      %v530 = vpop.f32.mrb[0].mxu0
      %v531 = vpop.f32.mrb[0].mxu0
      %532 = vdwg.mxu0
      %v533 = vadd.f32 %v484, %v528
      %534 = vst.msk [vmem:[#allocation4] sm:$0xff] %vm400, %v533
      %535 = vst.msk [vmem:[#allocation2] sm:$0xff] %vm476, %v458
      // Predicated region
      $region41: #{transformer_forward.36} parent=35 // pred_check
        %p536 = pneg %p388
      $region42: #{transformer_forward.36} parent=35 // pred_check_branch
        %538 = sbr.rel (%p536) target = $region44
      $region43: #{transformer_forward.36} parent=35 // pred_region
        %v539 = vld [vmem:[#allocation3] sm:$0xff]
        %v540 = vrcp.pop %v539
        %v541 = vld [vmem:[#allocation4] sm:$0xff]
        %543 = vset.pattern.permute.xlu0 0
        %544 = vperm.xlu0 %543, %v540
        %v545 = vpop.permute.xlu0 %544
        %v547 = vmul.f32 %v541, %v545
        %v548 = vpack.c.bf16 %v547, %v547
        %vm549 = vcmask 257024
        %550 = vst.msk [vmem:[%s384] sm:$0xf] %vm549, %v548
      $region44: #{transformer_forward.36} parent=35 // pred_fallthru
        _
      %p551 = scmp.lt.s32.totalorder %s21, 1
      %s552 = scalar_select %p551, %s21, 1
      %p553 = scmp.lt.s32.totalorder %s22, 3
      %s554 = scalar_select %p553, %s22, 3
      %p555 = scmp.lt.s32.totalorder %s23, 0
      %s556 = scalar_select %p555, %s23, 0
      %s557 = sadd.s32 %s556, %s554
      %s558 = smul.addr %s552, 4
      %s559 = sadd.s32 %s557, %s558
      %s560 = smul.addr %s559, 4
      %s561 = scalar_lea.vmem %s4, %s560
      // Predicated region
      $region45: #{transformer_forward.36} parent=35 // pred_check
        %p562 = pneg %p183
      $region46: #{transformer_forward.36} parent=35 // pred_check_branch
        %564 = sbr.rel (%p562) target = $region48
      $region47: #{transformer_forward.36} parent=35 // pred_region
        _
      $region48: #{transformer_forward.36} parent=35 // pred_fallthru
        _
    $region36: #{transformer_forward.36} parent=5 // pred_fallthru
      _
    %p565 = scmp.le.s32.totalorder 2, %s10
    // Predicated region
    $region49: #{transformer_forward.36} parent=5 // pred_check
      %p566 = pneg %p565
    $region50: #{transformer_forward.36} parent=5 // pred_check_branch
      %568 = sbr.rel (%p566) target = $region52
    $region51: #{transformer_forward.36} parent=5 // pred_region
      %s569 = ssub.s32 %s10, 2
      // Predicated region
      $region53: #{transformer_forward.36} parent=51 // pred_check
        %p570 = pneg %p189
      $region54: #{transformer_forward.36} parent=51 // pred_check_branch
        %572 = sbr.rel (%p570) target = $region56
      $region55: #{transformer_forward.36} parent=51 // pred_region
        %p573 = scmp.lt.s32.totalorder %s25, 1
        %s574 = scalar_select %p573, %s25, 1
        %p575 = scmp.lt.s32.totalorder %s26, 3
        %s576 = scalar_select %p575, %s26, 3
        %p577 = scmp.lt.s32.totalorder %s27, 0
        %s578 = scalar_select %p577, %s27, 0
        %s579 = sadd.s32 %s578, %s576
        %s580 = smul.addr %s574, 4
        %s581 = sadd.s32 %s579, %s580
        %s582 = smul.addr %s581, 4
        %s583 = scalar_lea.vmem %s4, %s582
      $region56: #{transformer_forward.36} parent=51 // pred_fallthru
        _
    $region52: #{transformer_forward.36} parent=5 // pred_fallthru
      _
  $region6: #{transformer_forward.36} parent=0 // loop_footer
    %s14 = sadd.s32 1, %s10
  $region7: #{transformer_forward.36} parent=0 // loop_footer_branch
    %9 = sbr.rel target = $region3
  $region8: #{transformer_forward.36} parent=0 // loop_exit
    _

// kernel: transformer_forward.38
$region0: #{transformer_forward.38}
  #allocation0 [shape = 'u32[]', space=smem, size = 0x4, offset = 0x4, fixed_abs, tag = 'smem constant byte address 0x4 - core index']
  #allocation1 [shape = 'u32[144,128]{1,0:T(1,128)}', space=vmem, size = 0x12000, scoped, tag = 'internal scratch']
  %s0 = inlined_call_operand.vmem [shape: bf16[16,128], index: 0, kind: input, shape index: {}]
  %s1 = inlined_call_operand.vmem [shape: f32[1,128], index: 1, kind: input, shape index: {}]
  %s2 = inlined_call_operand.vmem [shape: f32[1,128], index: 2, kind: input, shape index: {}]
  %s3 = inlined_call_operand.vmem [shape: bf16[128,128], index: 3, kind: input, shape index: {}]
  %s4 = inlined_call_operand.vmem [shape: f32[1,128], index: 4, kind: input, shape index: {}]
  %s5 = inlined_call_operand.vmem [shape: bf16[16,128], index: 5, kind: output, shape index: {}]
  %s6 = sld [smem:[#allocation0]]
  $region30: #{transformer_forward.38} parent=0
    _
  %s8 = ssub.s32 1, %s6
  %s9 = scalar_select 0, %s8, %s6
  // Predicated region
  $region2: #{transformer_forward.38} parent=0 // pred_check
    _
  $region3: #{transformer_forward.38} parent=0 // pred_check_branch
    %11 = sbr.rel (0) target = $region5
  $region4: #{transformer_forward.38} parent=0 // pred_region
    _
  $region5: #{transformer_forward.38} parent=0 // pred_fallthru
    _
  // Predicated region
  $region6: #{transformer_forward.38} parent=0 // pred_check
    _
  $region7: #{transformer_forward.38} parent=0 // pred_check_branch
    %13 = sbr.rel (0) target = $region9
  $region8: #{transformer_forward.38} parent=0 // pred_region
    _
  $region9: #{transformer_forward.38} parent=0 // pred_fallthru
    _
  // Predicated region
  $region10: #{transformer_forward.38} parent=0 // pred_check
    _
  $region11: #{transformer_forward.38} parent=0 // pred_check_branch
    %15 = sbr.rel (0) target = $region13
  $region12: #{transformer_forward.38} parent=0 // pred_region
    _
  $region13: #{transformer_forward.38} parent=0 // pred_fallthru
    _
  // Predicated region
  $region14: #{transformer_forward.38} parent=0 // pred_check
    _
  $region15: #{transformer_forward.38} parent=0 // pred_check_branch
    %17 = sbr.rel (0) target = $region17
  $region16: #{transformer_forward.38} parent=0 // pred_region
    _
  $region17: #{transformer_forward.38} parent=0 // pred_fallthru
    _
  // Predicated region
  $region18: #{transformer_forward.38} parent=0 // pred_check
    _
  $region19: #{transformer_forward.38} parent=0 // pred_check_branch
    %19 = sbr.rel (0) target = $region21
  $region20: #{transformer_forward.38} parent=0 // pred_region
    _
  $region21: #{transformer_forward.38} parent=0 // pred_fallthru
    _
  %v21 = vld [vmem:[%s0] sm:$0xf]
  %v22 = vld [vmem:[%s0 + $0x4] sm:$0xf]
  %v23 = vunpack.c.l.bf16 %v21
  %v24 = vunpack.c.l.bf16 %v22
  %25 = vadd.xlane.f32.xlu0 %v23
  %v26 = vpop.xlane.xlu0 %25
  %27 = vadd.xlane.f32.xlu0 %v24
  %v28 = vpop.xlane.xlu0 %27
  %v29 = vrcp.pop 128.0
  %v30 = vmul.f32 %v26, %v29
  %v31 = vmul.f32 %v28, %v29
  %v32 = vsub.f32 %v23, %v30
  %v33 = vsub.f32 %v24, %v31
  %v34 = vmul.f32 %v32, %v32
  %v35 = vmul.f32 %v33, %v33
  %36 = vadd.xlane.f32.xlu0 %v34
  %v37 = vpop.xlane.xlu0 %36
  %38 = vadd.xlane.f32.xlu0 %v35
  %v39 = vpop.xlane.xlu0 %38
  %v40 = vrcp.pop 127.0
  %v41 = vmul.f32 %v37, %v40
  %v42 = vmul.f32 %v39, %v40
  %v43 = vld [vmem:[%s1] sm:$0x1]
  %v45 = vlaneseq
  %v46 = vshrl.u32 %v45, 7
  %v47 = vsub.s32 0, %v46
  %v48 = vrot.slane %v43, %v47
  %v50 = vmul.f32 %v48, %v32
  %v51 = vmul.f32 %v48, %v33
  %v52 = vrsqrt.pop %v41
  %v53 = vmul.f32 %v41, %v52
  %vm54 = vcmp.eq.f32.partialorder %v41, inf
  %v55 = vsel %vm54, %v41, %v53
  %vm56 = vcmp.eq.f32.partialorder %v41, 0.0
  %v57 = vand.u32 %v41, 2147483648
  %v58 = vsel %vm56, %v57, %v55
  %v59 = vrsqrt.pop %v42
  %v60 = vmul.f32 %v42, %v59
  %vm61 = vcmp.eq.f32.partialorder %v42, inf
  %v62 = vsel %vm61, %v42, %v60
  %vm63 = vcmp.eq.f32.partialorder %v42, 0.0
  %v64 = vand.u32 %v42, 2147483648
  %v65 = vsel %vm63, %v64, %v62
  %v66 = vadd.f32 %v58, 1e-06
  %v67 = vadd.f32 %v65, 1e-06
  %v68 = vrcp.pop %v66
  %v69 = vmul.f32 %v50, %v68
  %v70 = vrcp.pop %v67
  %v71 = vmul.f32 %v51, %v70
  %v72 = vld [vmem:[%s2] sm:$0x1]
  %v74 = vlaneseq
  %v75 = vshrl.u32 %v74, 7
  %v76 = vsub.s32 0, %v75
  %v77 = vrot.slane %v72, %v76
  %v79 = vadd.f32 %v69, %v77
  %v80 = vadd.f32 %v71, %v77
  %v81 = vpack.c.bf16 %v80, %v79
  %v82 = vld [vmem:[%s3] sm:$0xf]
  %v83 = vld [vmem:[%s3 + $0x4] sm:$0xf]
  %v84 = vld [vmem:[%s3 + $0x8] sm:$0xf]
  %v85 = vld [vmem:[%s3 + $0xc] sm:$0xf]
  %v86 = vld [vmem:[%s3 + $0x10] sm:$0xf]
  %v87 = vld [vmem:[%s3 + $0x14] sm:$0xf]
  %v88 = vld [vmem:[%s3 + $0x18] sm:$0xf]
  %v89 = vld [vmem:[%s3 + $0x1c] sm:$0xf]
  %v90 = vld [vmem:[%s3 + $0x20] sm:$0xf]
  %v91 = vld [vmem:[%s3 + $0x24] sm:$0xf]
  %v92 = vld [vmem:[%s3 + $0x28] sm:$0xf]
  %v93 = vld [vmem:[%s3 + $0x2c] sm:$0xf]
  %v94 = vld [vmem:[%s3 + $0x30] sm:$0xf]
  %v95 = vld [vmem:[%s3 + $0x34] sm:$0xf]
  %v96 = vld [vmem:[%s3 + $0x38] sm:$0xf]
  %v97 = vld [vmem:[%s3 + $0x3c] sm:$0xf]
  %v98 = vld [vmem:[%s4] sm:$0x1]
  %v100 = vlaneseq
  %v101 = vshrl.u32 %v100, 7
  %v102 = vsub.s32 0, %v101
  %v103 = vrot.slane %v98, %v102
  %v121 = vunpack.c.l.b16 %v82
  %v122 = vunpack.c.l.b16 %v83
  %v123 = vunpack.c.l.b16 %v84
  %v124 = vunpack.c.l.b16 %v85
  %v125 = vunpack.c.l.b16 %v86
  %v126 = vunpack.c.l.b16 %v87
  %v127 = vunpack.c.l.b16 %v88
  %v128 = vunpack.c.l.b16 %v89
  %v129 = vunpack.c.l.b16 %v90
  %v130 = vunpack.c.l.b16 %v91
  %v131 = vunpack.c.l.b16 %v92
  %v132 = vunpack.c.l.b16 %v93
  %v133 = vunpack.c.l.b16 %v94
  %v134 = vunpack.c.l.b16 %v95
  %v135 = vunpack.c.l.b16 %v96
  %v136 = vunpack.c.l.b16 %v97
  %v137 = vpack.c.b16 %v122, %v121
  %v138 = vpack.c.b16 %v124, %v123
  %v139 = vpack.c.b16 %v126, %v125
  %v140 = vpack.c.b16 %v128, %v127
  %v141 = vpack.c.b16 %v130, %v129
  %v142 = vpack.c.b16 %v132, %v131
  %v143 = vpack.c.b16 %v134, %v133
  %v144 = vpack.c.b16 %v136, %v135
  %153 = vmatprep.subr.bf16.mxu0 0
  %154 = vmatpush1.bf16.msra.mxu0 %v137
  %155 = vmatprep.subr.bf16.mxu0 0
  %156 = vmatpush1.bf16.msra.mxu0 %v138
  %157 = vmatprep.subr.bf16.mxu0 0
  %158 = vmatpush1.bf16.msra.mxu0 %v139
  %159 = vmatprep.subr.bf16.mxu0 0
  %160 = vmatpush1.bf16.msra.mxu0 %v140
  %161 = vmatprep.subr.bf16.mxu0 0
  %162 = vmatpush1.bf16.msra.mxu0 %v141
  %163 = vmatprep.subr.bf16.mxu0 0
  %164 = vmatpush1.bf16.msra.mxu0 %v142
  %165 = vmatprep.subr.bf16.mxu0 0
  %166 = vmatpush1.bf16.msra.mxu0 %v143
  %167 = vmatprep.subr.bf16.mxu0 0
  %168 = vmatpush1.bf16.msra.mxu0 %v144
  %169 = vmatprep.subr.bf16.mxu0 0
  %170 = vmatpush1.bf16.msra.mxu0 0
  %171 = vmatprep.subr.bf16.mxu0 0
  %172 = vmatpush1.bf16.msra.mxu0 0
  %173 = vmatprep.subr.bf16.mxu0 0
  %174 = vmatpush1.bf16.msra.mxu0 0
  %175 = vmatprep.subr.bf16.mxu0 0
  %176 = vmatpush1.bf16.msra.mxu0 0
  %177 = vmatprep.subr.bf16.mxu0 0
  %178 = vmatpush1.bf16.msra.mxu0 0
  %179 = vmatprep.subr.bf16.mxu0 0
  %180 = vmatpush1.bf16.msra.mxu0 0
  %181 = vmatprep.subr.bf16.mxu0 0
  %182 = vmatpush1.bf16.msra.mxu0 0
  %183 = vmatprep.subr.bf16.mxu0 0
  %184 = vmatpush1.bf16.msra.mxu0 0
  %185 = vmatprep.mubr.bf16.mxu0 0
  %186 = vmatmul.mubr.bf16.gmra.mrb[0].mxu0 %v81
  %v187 = vpop.f32.mrb[0].mxu0
  %v188 = vadd.f32 %v103, %v187
  %v189 = vpop.f32.mrb[0].mxu0
  %v190 = vpop.f32.mrb[0].mxu0
  %v191 = vadd.f32 %v103, %v190
  %v192 = vpop.f32.mrb[0].mxu0
  %193 = vdwg.mxu0
  %v194 = vpack.c.bf16 %v191, %v188
  %v196 = vunpack.c.l.b16 %v194
  %v197 = vunpack.c.h.b16 %v194
  %v198 = vpack.c.b16 %v196, %v196
  %v199 = vpack.c.b16 %v197, %v197
  %202 = vst [vmem:[%s5] sm:$0xf] %v198
  %203 = vst [vmem:[%s5 + $0x4] sm:$0xf] %v199
  // Predicated region
  $region22: #{transformer_forward.38} parent=0 // pred_check
    _
  $region23: #{transformer_forward.38} parent=0 // pred_check_branch
    %205 = sbr.rel (0) target = $region25
  $region24: #{transformer_forward.38} parent=0 // pred_region
    _
  $region25: #{transformer_forward.38} parent=0 // pred_fallthru
    _
  // Predicated region
  $region26: #{transformer_forward.38} parent=0 // pred_check
    _
  $region27: #{transformer_forward.38} parent=0 // pred_check_branch
    %207 = sbr.rel (0) target = $region29
  $region28: #{transformer_forward.38} parent=0 // pred_region
    _
  $region29: #{transformer_forward.38} parent=0 // pred_fallthru
    _

// kernel: transformer_forward.34
$region0: #{transformer_forward.34}
  #allocation0 [shape = 'u32[]', space=smem, size = 0x4, offset = 0x4, fixed_abs, tag = 'smem constant byte address 0x4 - core index']
  #allocation1 [shape = 'u32[144,128]{1,0:T(1,128)}', space=vmem, size = 0x12000, scoped, tag = 'internal scratch']
  %s0 = inlined_call_operand.vmem [shape: bf16[16,128], index: 0, kind: input, shape index: {}]
  %s1 = inlined_call_operand.vmem [shape: f32[1,128], index: 1, kind: input, shape index: {}]
  %s2 = inlined_call_operand.vmem [shape: f32[1,128], index: 2, kind: input, shape index: {}]
  %s3 = inlined_call_operand.vmem [shape: bf16[16,128], index: 3, kind: output, shape index: {}]
  %s4 = sld [smem:[#allocation0]]
  $region22: #{transformer_forward.34} parent=0
    _
  %s6 = ssub.s32 1, %s4
  %s7 = scalar_select 0, %s6, %s4
  // Predicated region
  $region2: #{transformer_forward.34} parent=0 // pred_check
    _
  $region3: #{transformer_forward.34} parent=0 // pred_check_branch
    %9 = sbr.rel (0) target = $region5
  $region4: #{transformer_forward.34} parent=0 // pred_region
    _
  $region5: #{transformer_forward.34} parent=0 // pred_fallthru
    _
  // Predicated region
  $region6: #{transformer_forward.34} parent=0 // pred_check
    _
  $region7: #{transformer_forward.34} parent=0 // pred_check_branch
    %11 = sbr.rel (0) target = $region9
  $region8: #{transformer_forward.34} parent=0 // pred_region
    _
  $region9: #{transformer_forward.34} parent=0 // pred_fallthru
    _
  // Predicated region
  $region10: #{transformer_forward.34} parent=0 // pred_check
    _
  $region11: #{transformer_forward.34} parent=0 // pred_check_branch
    %13 = sbr.rel (0) target = $region13
  $region12: #{transformer_forward.34} parent=0 // pred_region
    _
  $region13: #{transformer_forward.34} parent=0 // pred_fallthru
    _
  %v14 = vld [vmem:[%s0] sm:$0xf]
  %v15 = vld [vmem:[%s0 + $0x4] sm:$0xf]
  %v16 = vunpack.c.l.bf16 %v14
  %v17 = vunpack.c.l.bf16 %v15
  %18 = vadd.xlane.f32.xlu0 %v16
  %v19 = vpop.xlane.xlu0 %18
  %20 = vadd.xlane.f32.xlu0 %v17
  %v21 = vpop.xlane.xlu0 %20
  %v22 = vrcp.pop 128.0
  %v23 = vmul.f32 %v19, %v22
  %v24 = vmul.f32 %v21, %v22
  %v25 = vsub.f32 %v16, %v23
  %v26 = vsub.f32 %v17, %v24
  %v27 = vmul.f32 %v25, %v25
  %v28 = vmul.f32 %v26, %v26
  %29 = vadd.xlane.f32.xlu0 %v27
  %v30 = vpop.xlane.xlu0 %29
  %31 = vadd.xlane.f32.xlu0 %v28
  %v32 = vpop.xlane.xlu0 %31
  %v33 = vrcp.pop 127.0
  %v34 = vmul.f32 %v30, %v33
  %v35 = vmul.f32 %v32, %v33
  %v36 = vld [vmem:[%s1] sm:$0x1]
  %v38 = vlaneseq
  %v39 = vshrl.u32 %v38, 7
  %v40 = vsub.s32 0, %v39
  %v41 = vrot.slane %v36, %v40
  %v43 = vmul.f32 %v41, %v25
  %v44 = vmul.f32 %v41, %v26
  %v45 = vrsqrt.pop %v34
  %v46 = vmul.f32 %v34, %v45
  %vm47 = vcmp.eq.f32.partialorder %v34, inf
  %v48 = vsel %vm47, %v34, %v46
  %vm49 = vcmp.eq.f32.partialorder %v34, 0.0
  %v50 = vand.u32 %v34, 2147483648
  %v51 = vsel %vm49, %v50, %v48
  %v52 = vrsqrt.pop %v35
  %v53 = vmul.f32 %v35, %v52
  %vm54 = vcmp.eq.f32.partialorder %v35, inf
  %v55 = vsel %vm54, %v35, %v53
  %vm56 = vcmp.eq.f32.partialorder %v35, 0.0
  %v57 = vand.u32 %v35, 2147483648
  %v58 = vsel %vm56, %v57, %v55
  %v59 = vadd.f32 %v51, 1e-06
  %v60 = vadd.f32 %v58, 1e-06
  %v61 = vrcp.pop %v59
  %v62 = vmul.f32 %v43, %v61
  %v63 = vrcp.pop %v60
  %v64 = vmul.f32 %v44, %v63
  %v65 = vld [vmem:[%s2] sm:$0x1]
  %v67 = vlaneseq
  %v68 = vshrl.u32 %v67, 7
  %v69 = vsub.s32 0, %v68
  %v70 = vrot.slane %v65, %v69
  %v72 = vadd.f32 %v62, %v70
  %v73 = vadd.f32 %v64, %v70
  %v74 = vpack.c.bf16 %v73, %v72
  %v76 = vunpack.c.l.b16 %v74
  %v77 = vunpack.c.h.b16 %v74
  %v78 = vpack.c.b16 %v76, %v76
  %v79 = vpack.c.b16 %v77, %v77
  %82 = vst [vmem:[%s3] sm:$0xf] %v78
  %83 = vst [vmem:[%s3 + $0x4] sm:$0xf] %v79
  // Predicated region
  $region14: #{transformer_forward.34} parent=0 // pred_check
    _
  $region15: #{transformer_forward.34} parent=0 // pred_check_branch
    %85 = sbr.rel (0) target = $region17
  $region16: #{transformer_forward.34} parent=0 // pred_region
    _
  $region17: #{transformer_forward.34} parent=0 // pred_fallthru
    _
  // Predicated region
  $region18: #{transformer_forward.34} parent=0 // pred_check
    _
  $region19: #{transformer_forward.34} parent=0 // pred_check_branch
    %87 = sbr.rel (0) target = $region21
  $region20: #{transformer_forward.34} parent=0 // pred_region
    _
  $region21: #{transformer_forward.34} parent=0 // pred_fallthru
    _

// kernel: transformer_forward.39
$region0: #{transformer_forward.39}
  #allocation0 [shape = 'u32[]', space=smem, size = 0x4, offset = 0x4, fixed_abs, tag = 'smem constant byte address 0x4 - core index']
  #allocation1 [shape = 'u32[144,128]{1,0:T(1,128)}', space=vmem, size = 0x12000, scoped, tag = 'internal scratch']
  %s0 = inlined_call_operand.vmem [shape: bf16[16,128], index: 0, kind: input, shape index: {}]
  %s1 = inlined_call_operand.vmem [shape: bf16[128,256], index: 1, kind: input, shape index: {}]
  %s2 = inlined_call_operand.vmem [shape: f32[1,256], index: 2, kind: input, shape index: {}]
  %s3 = inlined_call_operand.vmem [shape: bf16[16,256], index: 3, kind: output, shape index: {}]
  %s4 = sld [smem:[#allocation0]]
  $region22: #{transformer_forward.39} parent=0
    _
  %s6 = ssub.s32 1, %s4
  %s7 = scalar_select 0, %s6, %s4
  // Predicated region
  $region2: #{transformer_forward.39} parent=0 // pred_check
    _
  $region3: #{transformer_forward.39} parent=0 // pred_check_branch
    %9 = sbr.rel (0) target = $region5
  $region4: #{transformer_forward.39} parent=0 // pred_region
    _
  $region5: #{transformer_forward.39} parent=0 // pred_fallthru
    _
  // Predicated region
  $region6: #{transformer_forward.39} parent=0 // pred_check
    _
  $region7: #{transformer_forward.39} parent=0 // pred_check_branch
    %11 = sbr.rel (0) target = $region9
  $region8: #{transformer_forward.39} parent=0 // pred_region
    _
  $region9: #{transformer_forward.39} parent=0 // pred_fallthru
    _
  // Predicated region
  $region10: #{transformer_forward.39} parent=0 // pred_check
    _
  $region11: #{transformer_forward.39} parent=0 // pred_check_branch
    %13 = sbr.rel (0) target = $region13
  $region12: #{transformer_forward.39} parent=0 // pred_region
    _
  $region13: #{transformer_forward.39} parent=0 // pred_fallthru
    _
  %v15 = vld [vmem:[%s0] sm:$0xf]
  %v16 = vld [vmem:[%s0 + $0x4] sm:$0xf]
  %v17 = vld [vmem:[%s1] sm:$0xff]
  %v18 = vld [vmem:[%s1 + $0x8] sm:$0xff]
  %v19 = vld [vmem:[%s1 + $0x10] sm:$0xff]
  %v20 = vld [vmem:[%s1 + $0x18] sm:$0xff]
  %v21 = vld [vmem:[%s1 + $0x20] sm:$0xff]
  %v22 = vld [vmem:[%s1 + $0x28] sm:$0xff]
  %v23 = vld [vmem:[%s1 + $0x30] sm:$0xff]
  %v24 = vld [vmem:[%s1 + $0x38] sm:$0xff]
  %v25 = vld [vmem:[%s1 + $0x40] sm:$0xff]
  %v26 = vld [vmem:[%s1 + $0x48] sm:$0xff]
  %v27 = vld [vmem:[%s1 + $0x50] sm:$0xff]
  %v28 = vld [vmem:[%s1 + $0x58] sm:$0xff]
  %v29 = vld [vmem:[%s1 + $0x60] sm:$0xff]
  %v30 = vld [vmem:[%s1 + $0x68] sm:$0xff]
  %v31 = vld [vmem:[%s1 + $0x70] sm:$0xff]
  %v32 = vld [vmem:[%s1 + $0x78] sm:$0xff]
  %v33 = vld [vmem:[%s2] sm:$0x3]
  %v35 = vlaneseq
  %v36 = vshrl.u32 %v35, 7
  %v37 = vsub.s32 0, %v36
  %v38 = vrot.slane %v33, %v37
  %v39 = vlaneseq
  %v40 = vshrl.u32 %v39, 7
  %v41 = vsub.s32 1, %v40
  %v42 = vrot.slane %v33, %v41
  %v47 = vunpack.c.l.b16 %v15
  %v48 = vunpack.c.l.b16 %v16
  %v49 = vpack.c.b16 %v48, %v47
  %v67 = vunpack.c.l.b16 %v17
  %v68 = vunpack.c.h.b16 %v17
  %v69 = vunpack.c.l.b16 %v18
  %v70 = vunpack.c.h.b16 %v18
  %v71 = vunpack.c.l.b16 %v19
  %v72 = vunpack.c.h.b16 %v19
  %v73 = vunpack.c.l.b16 %v20
  %v74 = vunpack.c.h.b16 %v20
  %v75 = vunpack.c.l.b16 %v21
  %v76 = vunpack.c.h.b16 %v21
  %v77 = vunpack.c.l.b16 %v22
  %v78 = vunpack.c.h.b16 %v22
  %v79 = vunpack.c.l.b16 %v23
  %v80 = vunpack.c.h.b16 %v23
  %v81 = vunpack.c.l.b16 %v24
  %v82 = vunpack.c.h.b16 %v24
  %v83 = vunpack.c.l.b16 %v25
  %v84 = vunpack.c.h.b16 %v25
  %v85 = vunpack.c.l.b16 %v26
  %v86 = vunpack.c.h.b16 %v26
  %v87 = vunpack.c.l.b16 %v27
  %v88 = vunpack.c.h.b16 %v27
  %v89 = vunpack.c.l.b16 %v28
  %v90 = vunpack.c.h.b16 %v28
  %v91 = vunpack.c.l.b16 %v29
  %v92 = vunpack.c.h.b16 %v29
  %v93 = vunpack.c.l.b16 %v30
  %v94 = vunpack.c.h.b16 %v30
  %v95 = vunpack.c.l.b16 %v31
  %v96 = vunpack.c.h.b16 %v31
  %v97 = vunpack.c.l.b16 %v32
  %v98 = vunpack.c.h.b16 %v32
  %v99 = vpack.c.b16 %v69, %v67
  %v100 = vpack.c.b16 %v70, %v68
  %v101 = vpack.c.b16 %v73, %v71
  %v102 = vpack.c.b16 %v74, %v72
  %v103 = vpack.c.b16 %v77, %v75
  %v104 = vpack.c.b16 %v78, %v76
  %v105 = vpack.c.b16 %v81, %v79
  %v106 = vpack.c.b16 %v82, %v80
  %v107 = vpack.c.b16 %v85, %v83
  %v108 = vpack.c.b16 %v86, %v84
  %v109 = vpack.c.b16 %v89, %v87
  %v110 = vpack.c.b16 %v90, %v88
  %v111 = vpack.c.b16 %v93, %v91
  %v112 = vpack.c.b16 %v94, %v92
  %v113 = vpack.c.b16 %v97, %v95
  %v114 = vpack.c.b16 %v98, %v96
  %131 = vmatprep.subr.bf16.mxu0 %v100
  %132 = vmatpush1.bf16.msra.mxu0 %v99
  %133 = vmatprep.subr.bf16.mxu0 %v102
  %134 = vmatpush1.bf16.msra.mxu0 %v101
  %135 = vmatprep.subr.bf16.mxu0 %v104
  %136 = vmatpush1.bf16.msra.mxu0 %v103
  %137 = vmatprep.subr.bf16.mxu0 %v106
  %138 = vmatpush1.bf16.msra.mxu0 %v105
  %139 = vmatprep.subr.bf16.mxu0 %v108
  %140 = vmatpush1.bf16.msra.mxu0 %v107
  %141 = vmatprep.subr.bf16.mxu0 %v110
  %142 = vmatpush1.bf16.msra.mxu0 %v109
  %143 = vmatprep.subr.bf16.mxu0 %v112
  %144 = vmatpush1.bf16.msra.mxu0 %v111
  %145 = vmatprep.subr.bf16.mxu0 %v114
  %146 = vmatpush1.bf16.msra.mxu0 %v113
  %147 = vmatprep.subr.bf16.mxu0 0
  %148 = vmatpush1.bf16.msra.mxu0 0
  %149 = vmatprep.subr.bf16.mxu0 0
  %150 = vmatpush1.bf16.msra.mxu0 0
  %151 = vmatprep.subr.bf16.mxu0 0
  %152 = vmatpush1.bf16.msra.mxu0 0
  %153 = vmatprep.subr.bf16.mxu0 0
  %154 = vmatpush1.bf16.msra.mxu0 0
  %155 = vmatprep.subr.bf16.mxu0 0
  %156 = vmatpush1.bf16.msra.mxu0 0
  %157 = vmatprep.subr.bf16.mxu0 0
  %158 = vmatpush1.bf16.msra.mxu0 0
  %159 = vmatprep.subr.bf16.mxu0 0
  %160 = vmatpush1.bf16.msra.mxu0 0
  %161 = vmatprep.subr.bf16.mxu0 0
  %162 = vmatpush1.bf16.msra.mxu0 0
  %163 = vmatprep.mubr.bf16.mxu0 0
  %164 = vmatmul.mubr.bf16.gmra.mrb[0].mxu0 %v49
  %v165 = vpop.f32.mrb[0].mxu0
  %v166 = vadd.f32 %v38, %v165
  %v167 = vpop.f32.mrb[0].mxu0
  %v168 = vadd.f32 %v42, %v167
  %v169 = vpop.f32.mrb[0].mxu0
  %v170 = vadd.f32 %v38, %v169
  %v171 = vpop.f32.mrb[0].mxu0
  %v172 = vadd.f32 %v42, %v171
  %173 = vdwg.mxu0
  %v174 = vpack.c.bf16 %v170, %v166
  %v175 = vpack.c.bf16 %v172, %v168
  %v178 = vunpack.c.l.b16 %v174
  %v179 = vunpack.c.l.b16 %v175
  %v180 = vunpack.c.h.b16 %v174
  %v181 = vunpack.c.h.b16 %v175
  %v182 = vpack.c.b16 %v179, %v178
  %v183 = vpack.c.b16 %v181, %v180
  %186 = vst [vmem:[%s3] sm:$0xff] %v182
  %187 = vst [vmem:[%s3 + $0x8] sm:$0xff] %v183
  // Predicated region
  $region14: #{transformer_forward.39} parent=0 // pred_check
    _
  $region15: #{transformer_forward.39} parent=0 // pred_check_branch
    %189 = sbr.rel (0) target = $region17
  $region16: #{transformer_forward.39} parent=0 // pred_region
    _
  $region17: #{transformer_forward.39} parent=0 // pred_fallthru
    _
  // Predicated region
  $region18: #{transformer_forward.39} parent=0 // pred_check
    _
  $region19: #{transformer_forward.39} parent=0 // pred_check_branch
    %191 = sbr.rel (0) target = $region21
  $region20: #{transformer_forward.39} parent=0 // pred_region
    _
  $region21: #{transformer_forward.39} parent=0 // pred_fallthru
    _

// kernel: transformer_forward.27
$region0: #{transformer_forward.27}
  #allocation0 [shape = 'u32[]', space=smem, size = 0x4, offset = 0x4, fixed_abs, tag = 'smem constant byte address 0x4 - core index']
  #allocation1 [shape = 'u32[144,128]{1,0:T(1,128)}', space=vmem, size = 0x12000, scoped, tag = 'internal scratch']
  #allocation2 [shape = 'f32[8,1]{1,0:T(8,128)}', space=vmem, size = 0x1000, scoped, tag = 'scratch operand']
  #allocation3 [shape = 'f32[8,1]{1,0:T(8,128)}', space=vmem, size = 0x1000, scoped, tag = 'scratch operand']
  #allocation4 [shape = 'f32[8,32]{1,0:T(8,128)}', space=vmem, size = 0x1000, scoped, tag = 'scratch operand']
  %s0 = inlined_call_operand.vmem [shape: bf16[2,4,8,32], index: 0, kind: input, shape index: {}]
  %s1 = inlined_call_operand.vmem [shape: bf16[2,4,8,32], index: 1, kind: input, shape index: {}]
  %s2 = inlined_call_operand.vmem [shape: bf16[2,4,8,32], index: 2, kind: input, shape index: {}]
  %s3 = inlined_call_operand.vmem [shape: s8[2,1,8], index: 3, kind: input, shape index: {}]
  %s4 = inlined_call_operand.vmem [shape: bf16[2,4,8,32], index: 4, kind: output, shape index: {}]
  %s5 = sld [smem:[#allocation0]]
  $region57: #{transformer_forward.27} parent=0
    _
  %s7 = ssub.s32 1, %s5
  %s8 = scalar_select 0, %s7, %s5
  loop: start=0, step=1, limit=10
  $region2: #{transformer_forward.27} parent=0 // loop_pre_header
    _
  $region3: #{transformer_forward.27} parent=0 // loop_header
    %s10 = sphi 0, %s14
    %p11 = scmp.ge.s32.totalorder %s10, 10
    %s17 = sphi 0, %s43
    %s18 = sphi 0, %s39
    %s19 = sphi 0, %s35
    %s20 = sphi 0, %s31
    %s21 = sphi 0, %s17
    %s22 = sphi 0, %s18
    %s23 = sphi 0, %s19
    %s24 = sphi 0, %s20
    %s25 = sphi 0, %s21
    %s26 = sphi 0, %s22
    %s27 = sphi 0, %s23
    %s28 = sphi 0, %s24
    %s50 = sphi 0, %s52
    %s53 = sphi 0, %s50
    %s54 = sphi 0, %s53
    %s70 = sphi 0, %s54
    %s80 = sphi 0, %s82
    %s83 = sphi 0, %s80
    %s84 = sphi 0, %s83
    %s100 = sphi 0, %s84
    %s110 = sphi 0, %s112
    %s113 = sphi 0, %s110
    %s114 = sphi 0, %s113
    %s130 = sphi 0, %s114
    %s138 = sphi 0, %s140
    %s141 = sphi 0, %s138
    %s142 = sphi 0, %s141
    %s158 = sphi 0, %s142
    %s168 = sphi 0, %s170
    %s171 = sphi 0, %s168
    %s172 = sphi 0, %s171
    %s188 = sphi 0, %s172
  $region4: #{transformer_forward.27} parent=0 // loop_header_branch
    %13 = sbr.rel (%p11) target = $region8
  $region5: #{transformer_forward.27} parent=0 // loop_body
    %s15 = ssub.s32 %s10, 1
    %s16 = ssub.s32 %s10, 2
    %s29 = sadd.s32 1, %s20
    %p30 = scmp.ge.s32.totalorder %s29, 1
    %s31 = scalar_select %p30, 0, %s29
    %s32 = sadd.s32 1, %s19
    %s33 = scalar_select %p30, %s32, %s19
    %p34 = scmp.ge.s32.totalorder %s33, 1
    %s35 = scalar_select %p34, 0, %s33
    %s36 = sadd.s32 1, %s18
    %s37 = scalar_select %p34, %s36, %s18
    %p38 = scmp.ge.s32.totalorder %s37, 4
    %s39 = scalar_select %p38, 0, %s37
    %s40 = sadd.s32 1, %s17
    %s41 = scalar_select %p38, %s40, %s17
    %p42 = scmp.ge.s32.totalorder %s41, 2
    %s43 = scalar_select %p42, 0, %s41
    %s44 = ssub.s32 %s17, %s43
    %s45 = ssub.s32 %s18, %s39
    %s46 = sor.u32 %s44, %s45
    %s47 = ssub.s32 %s19, %s35
    %s48 = sor.u32 %s46, %s47
    %p49 = scmp.eq.s32.totalorder %s48, 0
    %s51 = sadd.s32 %s50, 1
    %s52 = scalar_select %p49, %s50, %s51
    %p55 = pneg %p49
    %p56 = scmp.eq.s32.totalorder %s10, 7
    %p57 = por %p55, %p56
    %p58 = scmp.ne.s32.totalorder %s50, %s53
    %p59 = scmp.eq.s32.totalorder %s10, 0
    %p60 = por %p58, %p59
    %p61 = scmp.ne.s32.totalorder %s50, %s53
    %p62 = scmp.eq.s32.totalorder %s15, 7
    %p63 = por %p61, %p62
    %p64 = scmp.ne.s32.totalorder %s53, %s54
    %p65 = scmp.eq.s32.totalorder %s15, 0
    %p66 = por %p64, %p65
    %p67 = scmp.ne.s32.totalorder %s53, %s54
    %p68 = scmp.eq.s32.totalorder %s16, 7
    %p69 = por %p67, %p68
    %p71 = scmp.ne.s32.totalorder %s54, %s70
    %p72 = scmp.eq.s32.totalorder %s16, 0
    %p73 = por %p71, %p72
    %s74 = ssub.s32 %s17, %s43
    %s75 = ssub.s32 %s18, %s39
    %s76 = sor.u32 %s74, %s75
    %s77 = ssub.s32 %s20, %s31
    %s78 = sor.u32 %s76, %s77
    %p79 = scmp.eq.s32.totalorder %s78, 0
    %s81 = sadd.s32 %s80, 1
    %s82 = scalar_select %p79, %s80, %s81
    %p85 = pneg %p79
    %p86 = scmp.eq.s32.totalorder %s10, 7
    %p87 = por %p85, %p86
    %p88 = scmp.ne.s32.totalorder %s80, %s83
    %p89 = scmp.eq.s32.totalorder %s10, 0
    %p90 = por %p88, %p89
    %p91 = scmp.ne.s32.totalorder %s80, %s83
    %p92 = scmp.eq.s32.totalorder %s15, 7
    %p93 = por %p91, %p92
    %p94 = scmp.ne.s32.totalorder %s83, %s84
    %p95 = scmp.eq.s32.totalorder %s15, 0
    %p96 = por %p94, %p95
    %p97 = scmp.ne.s32.totalorder %s83, %s84
    %p98 = scmp.eq.s32.totalorder %s16, 7
    %p99 = por %p97, %p98
    %p101 = scmp.ne.s32.totalorder %s84, %s100
    %p102 = scmp.eq.s32.totalorder %s16, 0
    %p103 = por %p101, %p102
    %s104 = ssub.s32 %s17, %s43
    %s105 = ssub.s32 %s18, %s39
    %s106 = sor.u32 %s104, %s105
    %s107 = ssub.s32 %s20, %s31
    %s108 = sor.u32 %s106, %s107
    %p109 = scmp.eq.s32.totalorder %s108, 0
    %s111 = sadd.s32 %s110, 1
    %s112 = scalar_select %p109, %s110, %s111
    %p115 = pneg %p109
    %p116 = scmp.eq.s32.totalorder %s10, 7
    %p117 = por %p115, %p116
    %p118 = scmp.ne.s32.totalorder %s110, %s113
    %p119 = scmp.eq.s32.totalorder %s10, 0
    %p120 = por %p118, %p119
    %p121 = scmp.ne.s32.totalorder %s110, %s113
    %p122 = scmp.eq.s32.totalorder %s15, 7
    %p123 = por %p121, %p122
    %p124 = scmp.ne.s32.totalorder %s113, %s114
    %p125 = scmp.eq.s32.totalorder %s15, 0
    %p126 = por %p124, %p125
    %p127 = scmp.ne.s32.totalorder %s113, %s114
    %p128 = scmp.eq.s32.totalorder %s16, 7
    %p129 = por %p127, %p128
    %p131 = scmp.ne.s32.totalorder %s114, %s130
    %p132 = scmp.eq.s32.totalorder %s16, 0
    %p133 = por %p131, %p132
    %s134 = ssub.s32 %s17, %s43
    %s135 = ssub.s32 %s20, %s31
    %s136 = sor.u32 %s134, %s135
    %p137 = scmp.eq.s32.totalorder %s136, 0
    %s139 = sadd.s32 %s138, 1
    %s140 = scalar_select %p137, %s138, %s139
    %p143 = pneg %p137
    %p144 = scmp.eq.s32.totalorder %s10, 7
    %p145 = por %p143, %p144
    %p146 = scmp.ne.s32.totalorder %s138, %s141
    %p147 = scmp.eq.s32.totalorder %s10, 0
    %p148 = por %p146, %p147
    %p149 = scmp.ne.s32.totalorder %s138, %s141
    %p150 = scmp.eq.s32.totalorder %s15, 7
    %p151 = por %p149, %p150
    %p152 = scmp.ne.s32.totalorder %s141, %s142
    %p153 = scmp.eq.s32.totalorder %s15, 0
    %p154 = por %p152, %p153
    %p155 = scmp.ne.s32.totalorder %s141, %s142
    %p156 = scmp.eq.s32.totalorder %s16, 7
    %p157 = por %p155, %p156
    %p159 = scmp.ne.s32.totalorder %s142, %s158
    %p160 = scmp.eq.s32.totalorder %s16, 0
    %p161 = por %p159, %p160
    %s162 = ssub.s32 %s17, %s43
    %s163 = ssub.s32 %s18, %s39
    %s164 = sor.u32 %s162, %s163
    %s165 = ssub.s32 %s19, %s35
    %s166 = sor.u32 %s164, %s165
    %p167 = scmp.eq.s32.totalorder %s166, 0
    %s169 = sadd.s32 %s168, 1
    %s170 = scalar_select %p167, %s168, %s169
    %p173 = pneg %p167
    %p174 = scmp.eq.s32.totalorder %s10, 7
    %p175 = por %p173, %p174
    %p176 = scmp.ne.s32.totalorder %s168, %s171
    %p177 = scmp.eq.s32.totalorder %s10, 0
    %p178 = por %p176, %p177
    %p179 = scmp.ne.s32.totalorder %s168, %s171
    %p180 = scmp.eq.s32.totalorder %s15, 7
    %p181 = por %p179, %p180
    %p182 = scmp.ne.s32.totalorder %s171, %s172
    %p183 = scmp.eq.s32.totalorder %s15, 0
    %p184 = por %p182, %p183
    %p185 = scmp.ne.s32.totalorder %s171, %s172
    %p186 = scmp.eq.s32.totalorder %s16, 7
    %p187 = por %p185, %p186
    %p189 = scmp.ne.s32.totalorder %s172, %s188
    %p190 = scmp.eq.s32.totalorder %s16, 0
    %p191 = por %p189, %p190
    %p192 = scmp.le.s32.totalorder 1, %s10
    %p193 = scmp.lt.s32.totalorder %s10, 9
    %p194 = pnand %p192, %p193
    %p195 = pneg %p194
    // Predicated region
    $region9: #{transformer_forward.27} parent=5 // pred_check
      _
    $region10: #{transformer_forward.27} parent=5 // pred_check_branch
      %197 = sbr.rel (%p194) target = $region12
    $region11: #{transformer_forward.27} parent=5 // pred_region
      %s198 = ssub.s32 %s10, 1
    $region12: #{transformer_forward.27} parent=5 // pred_fallthru
      _
    %p199 = scmp.lt.s32.totalorder %s10, 8
    // Predicated region
    $region13: #{transformer_forward.27} parent=5 // pred_check
      %p200 = pneg %p199
    $region14: #{transformer_forward.27} parent=5 // pred_check_branch
      %202 = sbr.rel (%p200) target = $region16
    $region15: #{transformer_forward.27} parent=5 // pred_region
      // Predicated region
      $region17: #{transformer_forward.27} parent=15 // pred_check
        %p203 = pneg %p60
      $region18: #{transformer_forward.27} parent=15 // pred_check_branch
        %205 = sbr.rel (%p203) target = $region20
      $region19: #{transformer_forward.27} parent=15 // pred_region
        %p206 = scmp.lt.s32.totalorder %s17, 1
        %s207 = scalar_select %p206, %s17, 1
        %p208 = scmp.lt.s32.totalorder %s18, 3
        %s209 = scalar_select %p208, %s18, 3
        %p210 = scmp.lt.s32.totalorder %s19, 0
        %s211 = scalar_select %p210, %s19, 0
        %s212 = sadd.s32 %s211, %s209
        %s213 = smul.addr %s207, 4
        %s214 = sadd.s32 %s212, %s213
        %s215 = smul.addr %s214, 4
        %s216 = scalar_lea.vmem %s0, %s215
      $region20: #{transformer_forward.27} parent=15 // pred_fallthru
        _
      // Predicated region
      $region21: #{transformer_forward.27} parent=15 // pred_check
        %p217 = pneg %p90
      $region22: #{transformer_forward.27} parent=15 // pred_check_branch
        %219 = sbr.rel (%p217) target = $region24
      $region23: #{transformer_forward.27} parent=15 // pred_region
        %p220 = scmp.lt.s32.totalorder %s17, 1
        %s221 = scalar_select %p220, %s17, 1
        %p222 = scmp.lt.s32.totalorder %s18, 3
        %s223 = scalar_select %p222, %s18, 3
        %p224 = scmp.lt.s32.totalorder %s20, 0
        %s225 = scalar_select %p224, %s20, 0
        %s226 = sadd.s32 %s225, %s223
        %s227 = smul.addr %s221, 4
        %s228 = sadd.s32 %s226, %s227
        %s229 = smul.addr %s228, 4
        %s230 = scalar_lea.vmem %s1, %s229
      $region24: #{transformer_forward.27} parent=15 // pred_fallthru
        _
      // Predicated region
      $region25: #{transformer_forward.27} parent=15 // pred_check
        %p231 = pneg %p120
      $region26: #{transformer_forward.27} parent=15 // pred_check_branch
        %233 = sbr.rel (%p231) target = $region28
      $region27: #{transformer_forward.27} parent=15 // pred_region
        %p234 = scmp.lt.s32.totalorder %s17, 1
        %s235 = scalar_select %p234, %s17, 1
        %p236 = scmp.lt.s32.totalorder %s18, 3
        %s237 = scalar_select %p236, %s18, 3
        %p238 = scmp.lt.s32.totalorder %s20, 0
        %s239 = scalar_select %p238, %s20, 0
        %s240 = sadd.s32 %s239, %s237
        %s241 = smul.addr %s235, 4
        %s242 = sadd.s32 %s240, %s241
        %s243 = smul.addr %s242, 4
        %s244 = scalar_lea.vmem %s2, %s243
      $region28: #{transformer_forward.27} parent=15 // pred_fallthru
        _
      // Predicated region
      $region29: #{transformer_forward.27} parent=15 // pred_check
        %p245 = pneg %p148
      $region30: #{transformer_forward.27} parent=15 // pred_check_branch
        %247 = sbr.rel (%p245) target = $region32
      $region31: #{transformer_forward.27} parent=15 // pred_region
        %p248 = scmp.lt.s32.totalorder %s17, 1
        %s249 = scalar_select %p248, %s17, 1
        %p250 = scmp.lt.s32.totalorder %s20, 0
        %s251 = scalar_select %p250, %s20, 0
        %s252 = sadd.s32 %s251, %s249
        %s253 = scalar_lea.vmem %s3, %s252
      $region32: #{transformer_forward.27} parent=15 // pred_fallthru
        _
    $region16: #{transformer_forward.27} parent=5 // pred_fallthru
      _
    %p254 = scmp.le.s32.totalorder 1, %s10
    %p255 = scmp.lt.s32.totalorder %s10, 9
    %p256 = pnand %p254, %p255
    %p257 = pneg %p256
    // Predicated region
    $region33: #{transformer_forward.27} parent=5 // pred_check
      _
    $region34: #{transformer_forward.27} parent=5 // pred_check_branch
      %259 = sbr.rel (%p256) target = $region36
    $region35: #{transformer_forward.27} parent=5 // pred_region
      %s260 = ssub.s32 %s10, 1
      %p261 = scmp.lt.s32.totalorder %s21, 1
      %s262 = scalar_select %p261, %s21, 1
      %p263 = scmp.lt.s32.totalorder %s22, 3
      %s264 = scalar_select %p263, %s22, 3
      %p265 = scmp.lt.s32.totalorder %s23, 0
      %s266 = scalar_select %p265, %s23, 0
      %s267 = sadd.s32 %s266, %s264
      %s268 = smul.addr %s262, 4
      %s269 = sadd.s32 %s267, %s268
      %s270 = smul.addr %s269, 4
      %s271 = scalar_lea.vmem %s0, %s270
      %p272 = pneg %p66
      %p273 = pneg %p63
      %p274 = scmp.lt.s32.totalorder %s21, 1
      %s275 = scalar_select %p274, %s21, 1
      %p276 = scmp.lt.s32.totalorder %s22, 3
      %s277 = scalar_select %p276, %s22, 3
      %p278 = scmp.lt.s32.totalorder %s24, 0
      %s279 = scalar_select %p278, %s24, 0
      %s280 = sadd.s32 %s279, %s277
      %s281 = smul.addr %s275, 4
      %s282 = sadd.s32 %s280, %s281
      %s283 = smul.addr %s282, 4
      %s284 = scalar_lea.vmem %s1, %s283
      %p285 = pneg %p96
      %p286 = pneg %p93
      %p287 = scmp.lt.s32.totalorder %s21, 1
      %s288 = scalar_select %p287, %s21, 1
      %p289 = scmp.lt.s32.totalorder %s22, 3
      %s290 = scalar_select %p289, %s22, 3
      %p291 = scmp.lt.s32.totalorder %s24, 0
      %s292 = scalar_select %p291, %s24, 0
      %s293 = sadd.s32 %s292, %s290
      %s294 = smul.addr %s288, 4
      %s295 = sadd.s32 %s293, %s294
      %s296 = smul.addr %s295, 4
      %s297 = scalar_lea.vmem %s2, %s296
      %p298 = pneg %p126
      %p299 = pneg %p123
      %p300 = scmp.lt.s32.totalorder %s21, 1
      %s301 = scalar_select %p300, %s21, 1
      %p302 = scmp.lt.s32.totalorder %s24, 0
      %s303 = scalar_select %p302, %s24, 0
      %s304 = sadd.s32 %s303, %s301
      %s305 = scalar_lea.vmem %s3, %s304
      %p306 = pneg %p154
      %p307 = pneg %p151
      %p308 = pneg %p184
      %p309 = pneg %p181
      %p310 = scmp.lt.s32.totalorder %s21, 1
      %s311 = scalar_select %p310, %s21, 1
      %p312 = scmp.lt.s32.totalorder %s22, 3
      %s313 = scalar_select %p312, %s22, 3
      %p314 = scmp.lt.s32.totalorder %s23, 0
      %s315 = scalar_select %p314, %s23, 0
      %s316 = sadd.s32 %s315, %s313
      %s317 = smul.addr %s311, 4
      %s318 = sadd.s32 %s316, %s317
      %s319 = smul.addr %s318, 4
      %s320 = scalar_lea.vmem %s4, %s319
      %p321 = scmp.lt.s32.totalorder %s21, 1
      %s322 = scalar_select %p321, %s21, 1
      %p323 = scmp.lt.s32.totalorder %s22, 3
      %s324 = scalar_select %p323, %s22, 3
      %p325 = scmp.lt.s32.totalorder %s23, 0
      %s326 = scalar_select %p325, %s23, 0
      %s327 = sadd.s32 %s326, %s324
      %s328 = smul.addr %s322, 4
      %s329 = sadd.s32 %s327, %s328
      %s330 = smul.addr %s329, 4
      %s331 = scalar_lea.vmem %s0, %s330
      %p332 = scmp.lt.s32.totalorder %s21, 1
      %s333 = scalar_select %p332, %s21, 1
      %p334 = scmp.lt.s32.totalorder %s22, 3
      %s335 = scalar_select %p334, %s22, 3
      %p336 = scmp.lt.s32.totalorder %s24, 0
      %s337 = scalar_select %p336, %s24, 0
      %s338 = sadd.s32 %s337, %s335
      %s339 = smul.addr %s333, 4
      %s340 = sadd.s32 %s338, %s339
      %s341 = smul.addr %s340, 4
      %s342 = scalar_lea.vmem %s1, %s341
      %p343 = scmp.lt.s32.totalorder %s21, 1
      %s344 = scalar_select %p343, %s21, 1
      %p345 = scmp.lt.s32.totalorder %s22, 3
      %s346 = scalar_select %p345, %s22, 3
      %p347 = scmp.lt.s32.totalorder %s24, 0
      %s348 = scalar_select %p347, %s24, 0
      %s349 = sadd.s32 %s348, %s346
      %s350 = smul.addr %s344, 4
      %s351 = sadd.s32 %s349, %s350
      %s352 = smul.addr %s351, 4
      %s353 = scalar_lea.vmem %s2, %s352
      %p354 = scmp.lt.s32.totalorder %s21, 1
      %s355 = scalar_select %p354, %s21, 1
      %p356 = scmp.lt.s32.totalorder %s24, 0
      %s357 = scalar_select %p356, %s24, 0
      %s358 = sadd.s32 %s357, %s355
      %s359 = scalar_lea.vmem %s3, %s358
      %p360 = scmp.lt.s32.totalorder %s21, 1
      %s361 = scalar_select %p360, %s21, 1
      %p362 = scmp.lt.s32.totalorder %s22, 3
      %s363 = scalar_select %p362, %s22, 3
      %p364 = scmp.lt.s32.totalorder %s23, 0
      %s365 = scalar_select %p364, %s23, 0
      %s366 = sadd.s32 %s365, %s363
      %s367 = smul.addr %s361, 4
      %s368 = sadd.s32 %s366, %s367
      %s369 = smul.addr %s368, 4
      %s370 = scalar_lea.vmem %s4, %s369
      %p374 = scmp.eq.s32.totalorder %s24, 0
      // Predicated region
      $region37: #{transformer_forward.27} parent=35 // pred_check
        %p375 = pneg %p374
      $region38: #{transformer_forward.27} parent=35 // pred_check_branch
        %377 = sbr.rel (%p375) target = $region40
      $region39: #{transformer_forward.27} parent=35 // pred_region
        %vm378 = vcmask 7168
        %379 = vst.msk [vmem:[#allocation2] sm:$0xff] %vm378, -inf
        %380 = vst.msk [vmem:[#allocation3] sm:$0xff] %vm378, 0.0
        %vm381 = vcmask 261120
        %382 = vst.msk [vmem:[#allocation4] sm:$0xff] %vm381, 0.0
      $region40: #{transformer_forward.27} parent=35 // pred_fallthru
        _
      %v383 = vld [vmem:[%s331] sm:$0xf]
      %v384 = vld [vmem:[%s342] sm:$0xf]
      %v385 = vld [vmem:[%s353] sm:$0xf]
      %vm386 = vcmask 261120
      %v388 = vsel %vm386, %v383, 0
      %v391 = vsel %vm386, %v384, 0
      %393 = vmatprep.subr.bf16.mxu0 0
      %394 = vmatpush1.bf16.xpose.msra.mxu0 %v391
      %395 = vmatprep.subr.bf16.mxu0 0
      %396 = vmatpush1.bf16.xpose.msra.mxu0 0
      %397 = vmatprep.subr.bf16.mxu0 0
      %398 = vmatpush1.bf16.xpose.msra.mxu0 0
      %399 = vmatprep.subr.bf16.mxu0 0
      %400 = vmatpush1.bf16.xpose.msra.mxu0 0
      %401 = vmatprep.subr.bf16.mxu0 0
      %402 = vmatpush1.bf16.xpose.msra.mxu0 0
      %403 = vmatprep.subr.bf16.mxu0 0
      %404 = vmatpush1.bf16.xpose.msra.mxu0 0
      %405 = vmatprep.subr.bf16.mxu0 0
      %406 = vmatpush1.bf16.xpose.msra.mxu0 0
      %407 = vmatprep.subr.bf16.mxu0 0
      %408 = vmatpush1.bf16.xpose.msra.mxu0 0
      %409 = vmatprep.subr.bf16.mxu0 0
      %410 = vmatpush1.bf16.xpose.msra.mxu0 0
      %411 = vmatprep.subr.bf16.mxu0 0
      %412 = vmatpush1.bf16.xpose.msra.mxu0 0
      %413 = vmatprep.subr.bf16.mxu0 0
      %414 = vmatpush1.bf16.xpose.msra.mxu0 0
      %415 = vmatprep.subr.bf16.mxu0 0
      %416 = vmatpush1.bf16.xpose.msra.mxu0 0
      %417 = vmatprep.subr.bf16.mxu0 0
      %418 = vmatpush1.bf16.xpose.msra.mxu0 0
      %419 = vmatprep.subr.bf16.mxu0 0
      %420 = vmatpush1.bf16.xpose.msra.mxu0 0
      %421 = vmatprep.subr.bf16.mxu0 0
      %422 = vmatpush1.bf16.xpose.msra.mxu0 0
      %423 = vmatprep.subr.bf16.mxu0 0
      %424 = vmatpush1.bf16.xpose.msra.mxu0 0
      %425 = vmatprep.mubr.bf16.mxu0 0
      %426 = vmatmul.mubr.bf16.gmra.mrb[0].mxu0 %v388
      %v427 = vpop.f32.mrb[0].mxu0
      %v428 = vadd.f32 0.0, %v427
      %v429 = vpop.f32.mrb[0].mxu0
      %v430 = vpop.f32.mrb[0].mxu0
      %v431 = vpop.f32.mrb[0].mxu0
      %432 = vdwg.mxu0
      %v433 = vld [vmem:[%s359] sm:$0x1]
      %vm434 = vnez %v433
      %v435 = vsel %vm434, 16843009, 0
      %v436 = vunpack.c.0.s8 %v435
      %vm437 = vcmp.ne.s32.totalorder %v436, 0
      %v438 = vsel %vm437, 1, 0
      %v439 = vlaneseq
      %v440 = vshrl.u32 %v439, 7
      %v441 = vsub.s32 0, %v440
      %v442 = vrot.slane %v438, %v441
      %vm443 = vcmp.eq.s32.totalorder %v442, 1
      %v444 = vsel %vm443, %v428, -1e+09
      %v445 = vld [vmem:[#allocation2] sm:$0xff]
      %vm446 = vcmask 64512
      %v447 = vsel %vm446, %v444, -inf
      %448 = vmax.xlane.f32.xlu0 %v447
      %v449 = vpop.xlane.xlu0 %448
      %v450 = vmax.f32 %v445, %v449
      %v451 = vsub.f32 %v445, %v450
      %v452 = vmul.f32 %v451, 1.442695
      %v453 = vpow.pop %v452
      %455 = vset.pattern.permute.xlu0 0
      %456 = vperm.xlu0 %455, %v450
      %v457 = vpop.permute.xlu0 %456
      %v459 = vsub.f32 %v444, %v457
      %v460 = vmul.f32 %v459, 1.442695
      %v461 = vpow.pop %v460
      %v462 = vld [vmem:[#allocation3] sm:$0xff]
      %v463 = vmul.f32 %v453, %v462
      %v464 = vsel %vm446, %v461, 0.0
      %465 = vadd.xlane.f32.xlu0 %v464
      %v466 = vpop.xlane.xlu0 %465
      %v467 = vadd.f32 %v463, %v466
      %vm468 = vcmask 7168
      %469 = vst.msk [vmem:[#allocation3] sm:$0xff] %vm468, %v467
      %v470 = vld [vmem:[#allocation4] sm:$0xff]
      %472 = vset.pattern.permute.xlu0 0
      %473 = vperm.xlu0 %472, %v453
      %v474 = vpop.permute.xlu0 %473
      %v476 = vmul.f32 %v474, %v470
      %v477 = vpack.c.bf16 %v461, %v461
      %v479 = vsel %vm446, %v477, 0
      %vm481 = vcmask 1043456
      %v483 = vsel %vm481, %v385, 0
      %485 = vmatprep.subr.bf16.mxu0 0
      %486 = vmatpush1.bf16.msra.mxu0 %v483
      %487 = vmatprep.subr.bf16.mxu0 0
      %488 = vmatpush1.bf16.msra.mxu0 0
      %489 = vmatprep.subr.bf16.mxu0 0
      %490 = vmatpush1.bf16.msra.mxu0 0
      %491 = vmatprep.subr.bf16.mxu0 0
      %492 = vmatpush1.bf16.msra.mxu0 0
      %493 = vmatprep.subr.bf16.mxu0 0
      %494 = vmatpush1.bf16.msra.mxu0 0
      %495 = vmatprep.subr.bf16.mxu0 0
      %496 = vmatpush1.bf16.msra.mxu0 0
      %497 = vmatprep.subr.bf16.mxu0 0
      %498 = vmatpush1.bf16.msra.mxu0 0
      %499 = vmatprep.subr.bf16.mxu0 0
      %500 = vmatpush1.bf16.msra.mxu0 0
      %501 = vmatprep.subr.bf16.mxu0 0
      %502 = vmatpush1.bf16.msra.mxu0 0
      %503 = vmatprep.subr.bf16.mxu0 0
      %504 = vmatpush1.bf16.msra.mxu0 0
      %505 = vmatprep.subr.bf16.mxu0 0
      %506 = vmatpush1.bf16.msra.mxu0 0
      %507 = vmatprep.subr.bf16.mxu0 0
      %508 = vmatpush1.bf16.msra.mxu0 0
      %509 = vmatprep.subr.bf16.mxu0 0
      %510 = vmatpush1.bf16.msra.mxu0 0
      %511 = vmatprep.subr.bf16.mxu0 0
      %512 = vmatpush1.bf16.msra.mxu0 0
      %513 = vmatprep.subr.bf16.mxu0 0
      %514 = vmatpush1.bf16.msra.mxu0 0
      %515 = vmatprep.subr.bf16.mxu0 0
      %516 = vmatpush1.bf16.msra.mxu0 0
      %517 = vmatprep.mubr.bf16.mxu0 0
      %518 = vmatmul.mubr.bf16.gmra.mrb[0].mxu0 %v479
      %v519 = vpop.f32.mrb[0].mxu0
      %v520 = vadd.f32 0.0, %v519
      %v521 = vpop.f32.mrb[0].mxu0
      %v522 = vpop.f32.mrb[0].mxu0
      %v523 = vpop.f32.mrb[0].mxu0
      %524 = vdwg.mxu0
      %v525 = vadd.f32 %v476, %v520
      %526 = vst.msk [vmem:[#allocation4] sm:$0xff] %vm386, %v525
      %527 = vst.msk [vmem:[#allocation2] sm:$0xff] %vm468, %v450
      // Predicated region
      $region41: #{transformer_forward.27} parent=35 // pred_check
        %p528 = pneg %p374
      $region42: #{transformer_forward.27} parent=35 // pred_check_branch
        %530 = sbr.rel (%p528) target = $region44
      $region43: #{transformer_forward.27} parent=35 // pred_region
        %v531 = vld [vmem:[#allocation3] sm:$0xff]
        %v532 = vrcp.pop %v531
        %v533 = vld [vmem:[#allocation4] sm:$0xff]
        %535 = vset.pattern.permute.xlu0 0
        %536 = vperm.xlu0 %535, %v532
        %v537 = vpop.permute.xlu0 %536
        %v539 = vmul.f32 %v533, %v537
        %v540 = vpack.c.bf16 %v539, %v539
        %vm541 = vcmask 257024
        %542 = vst.msk [vmem:[%s370] sm:$0xf] %vm541, %v540
      $region44: #{transformer_forward.27} parent=35 // pred_fallthru
        _
      %p543 = scmp.lt.s32.totalorder %s21, 1
      %s544 = scalar_select %p543, %s21, 1
      %p545 = scmp.lt.s32.totalorder %s22, 3
      %s546 = scalar_select %p545, %s22, 3
      %p547 = scmp.lt.s32.totalorder %s23, 0
      %s548 = scalar_select %p547, %s23, 0
      %s549 = sadd.s32 %s548, %s546
      %s550 = smul.addr %s544, 4
      %s551 = sadd.s32 %s549, %s550
      %s552 = smul.addr %s551, 4
      %s553 = scalar_lea.vmem %s4, %s552
      // Predicated region
      $region45: #{transformer_forward.27} parent=35 // pred_check
        %p554 = pneg %p181
      $region46: #{transformer_forward.27} parent=35 // pred_check_branch
        %556 = sbr.rel (%p554) target = $region48
      $region47: #{transformer_forward.27} parent=35 // pred_region
        _
      $region48: #{transformer_forward.27} parent=35 // pred_fallthru
        _
    $region36: #{transformer_forward.27} parent=5 // pred_fallthru
      _
    %p557 = scmp.le.s32.totalorder 2, %s10
    // Predicated region
    $region49: #{transformer_forward.27} parent=5 // pred_check
      %p558 = pneg %p557
    $region50: #{transformer_forward.27} parent=5 // pred_check_branch
      %560 = sbr.rel (%p558) target = $region52
    $region51: #{transformer_forward.27} parent=5 // pred_region
      %s561 = ssub.s32 %s10, 2
      // Predicated region
      $region53: #{transformer_forward.27} parent=51 // pred_check
        %p562 = pneg %p187
      $region54: #{transformer_forward.27} parent=51 // pred_check_branch
        %564 = sbr.rel (%p562) target = $region56
      $region55: #{transformer_forward.27} parent=51 // pred_region
        %p565 = scmp.lt.s32.totalorder %s25, 1
        %s566 = scalar_select %p565, %s25, 1
        %p567 = scmp.lt.s32.totalorder %s26, 3
        %s568 = scalar_select %p567, %s26, 3
        %p569 = scmp.lt.s32.totalorder %s27, 0
        %s570 = scalar_select %p569, %s27, 0
        %s571 = sadd.s32 %s570, %s568
        %s572 = smul.addr %s566, 4
        %s573 = sadd.s32 %s571, %s572
        %s574 = smul.addr %s573, 4
        %s575 = scalar_lea.vmem %s4, %s574
      $region56: #{transformer_forward.27} parent=51 // pred_fallthru
        _
    $region52: #{transformer_forward.27} parent=5 // pred_fallthru
      _
  $region6: #{transformer_forward.27} parent=0 // loop_footer
    %s14 = sadd.s32 1, %s10
  $region7: #{transformer_forward.27} parent=0 // loop_footer_branch
    %9 = sbr.rel target = $region3
  $region8: #{transformer_forward.27} parent=0 // loop_exit
    _

// kernel: transformer_forward.29
$region0: #{transformer_forward.29}
  #allocation0 [shape = 'u32[]', space=smem, size = 0x4, offset = 0x4, fixed_abs, tag = 'smem constant byte address 0x4 - core index']
  #allocation1 [shape = 'u32[144,128]{1,0:T(1,128)}', space=vmem, size = 0x12000, scoped, tag = 'internal scratch']
  %s0 = inlined_call_operand.vmem [shape: bf16[16,128], index: 0, kind: input, shape index: {}]
  %s1 = inlined_call_operand.vmem [shape: f32[1,128], index: 1, kind: input, shape index: {}]
  %s2 = inlined_call_operand.vmem [shape: f32[1,128], index: 2, kind: input, shape index: {}]
  %s3 = inlined_call_operand.vmem [shape: bf16[128,256], index: 3, kind: input, shape index: {}]
  %s4 = inlined_call_operand.vmem [shape: f32[1,256], index: 4, kind: input, shape index: {}]
  %s5 = inlined_call_operand.vmem [shape: bf16[256,128], index: 5, kind: input, shape index: {}]
  %s6 = inlined_call_operand.vmem [shape: f32[1,128], index: 6, kind: input, shape index: {}]
  %s7 = inlined_call_operand.vmem [shape: bf16[16,128], index: 7, kind: output, shape index: {}]
  %s8 = sld [smem:[#allocation0]]
  $region38: #{transformer_forward.29} parent=0
    _
  %s10 = ssub.s32 1, %s8
  %s11 = scalar_select 0, %s10, %s8
  // Predicated region
  $region2: #{transformer_forward.29} parent=0 // pred_check
    _
  $region3: #{transformer_forward.29} parent=0 // pred_check_branch
    %13 = sbr.rel (0) target = $region5
  $region4: #{transformer_forward.29} parent=0 // pred_region
    _
  $region5: #{transformer_forward.29} parent=0 // pred_fallthru
    _
  // Predicated region
  $region6: #{transformer_forward.29} parent=0 // pred_check
    _
  $region7: #{transformer_forward.29} parent=0 // pred_check_branch
    %15 = sbr.rel (0) target = $region9
  $region8: #{transformer_forward.29} parent=0 // pred_region
    _
  $region9: #{transformer_forward.29} parent=0 // pred_fallthru
    _
  // Predicated region
  $region10: #{transformer_forward.29} parent=0 // pred_check
    _
  $region11: #{transformer_forward.29} parent=0 // pred_check_branch
    %17 = sbr.rel (0) target = $region13
  $region12: #{transformer_forward.29} parent=0 // pred_region
    _
  $region13: #{transformer_forward.29} parent=0 // pred_fallthru
    _
  // Predicated region
  $region14: #{transformer_forward.29} parent=0 // pred_check
    _
  $region15: #{transformer_forward.29} parent=0 // pred_check_branch
    %19 = sbr.rel (0) target = $region17
  $region16: #{transformer_forward.29} parent=0 // pred_region
    _
  $region17: #{transformer_forward.29} parent=0 // pred_fallthru
    _
  // Predicated region
  $region18: #{transformer_forward.29} parent=0 // pred_check
    _
  $region19: #{transformer_forward.29} parent=0 // pred_check_branch
    %21 = sbr.rel (0) target = $region21
  $region20: #{transformer_forward.29} parent=0 // pred_region
    _
  $region21: #{transformer_forward.29} parent=0 // pred_fallthru
    _
  // Predicated region
  $region22: #{transformer_forward.29} parent=0 // pred_check
    _
  $region23: #{transformer_forward.29} parent=0 // pred_check_branch
    %23 = sbr.rel (0) target = $region25
  $region24: #{transformer_forward.29} parent=0 // pred_region
    _
  $region25: #{transformer_forward.29} parent=0 // pred_fallthru
    _
  // Predicated region
  $region26: #{transformer_forward.29} parent=0 // pred_check
    _
  $region27: #{transformer_forward.29} parent=0 // pred_check_branch
    %25 = sbr.rel (0) target = $region29
  $region28: #{transformer_forward.29} parent=0 // pred_region
    _
  $region29: #{transformer_forward.29} parent=0 // pred_fallthru
    _
  %v27 = vld [vmem:[%s0] sm:$0xf]
  %v28 = vld [vmem:[%s0 + $0x4] sm:$0xf]
  %v29 = vunpack.c.l.bf16 %v27
  %v30 = vunpack.c.l.bf16 %v28
  %31 = vadd.xlane.f32.xlu0 %v29
  %v32 = vpop.xlane.xlu0 %31
  %33 = vadd.xlane.f32.xlu0 %v30
  %v34 = vpop.xlane.xlu0 %33
  %v35 = vrcp.pop 128.0
  %v36 = vmul.f32 %v32, %v35
  %v37 = vmul.f32 %v34, %v35
  %v38 = vsub.f32 %v29, %v36
  %v39 = vsub.f32 %v30, %v37
  %v40 = vmul.f32 %v38, %v38
  %v41 = vmul.f32 %v39, %v39
  %42 = vadd.xlane.f32.xlu0 %v40
  %v43 = vpop.xlane.xlu0 %42
  %44 = vadd.xlane.f32.xlu0 %v41
  %v45 = vpop.xlane.xlu0 %44
  %v46 = vrcp.pop 127.0
  %v47 = vmul.f32 %v43, %v46
  %v48 = vmul.f32 %v45, %v46
  %v49 = vld [vmem:[%s1] sm:$0x1]
  %v51 = vlaneseq
  %v52 = vshrl.u32 %v51, 7
  %v53 = vsub.s32 0, %v52
  %v54 = vrot.slane %v49, %v53
  %v56 = vmul.f32 %v54, %v38
  %v57 = vmul.f32 %v54, %v39
  %v58 = vrsqrt.pop %v47
  %v59 = vmul.f32 %v47, %v58
  %vm60 = vcmp.eq.f32.partialorder %v47, inf
  %v61 = vsel %vm60, %v47, %v59
  %vm62 = vcmp.eq.f32.partialorder %v47, 0.0
  %v63 = vand.u32 %v47, 2147483648
  %v64 = vsel %vm62, %v63, %v61
  %v65 = vrsqrt.pop %v48
  %v66 = vmul.f32 %v48, %v65
  %vm67 = vcmp.eq.f32.partialorder %v48, inf
  %v68 = vsel %vm67, %v48, %v66
  %vm69 = vcmp.eq.f32.partialorder %v48, 0.0
  %v70 = vand.u32 %v48, 2147483648
  %v71 = vsel %vm69, %v70, %v68
  %v72 = vadd.f32 %v64, 1e-06
  %v73 = vadd.f32 %v71, 1e-06
  %v74 = vrcp.pop %v72
  %v75 = vmul.f32 %v56, %v74
  %v76 = vrcp.pop %v73
  %v77 = vmul.f32 %v57, %v76
  %v78 = vld [vmem:[%s2] sm:$0x1]
  %v80 = vlaneseq
  %v81 = vshrl.u32 %v80, 7
  %v82 = vsub.s32 0, %v81
  %v83 = vrot.slane %v78, %v82
  %v85 = vadd.f32 %v75, %v83
  %v86 = vadd.f32 %v77, %v83
  %v87 = vpack.c.bf16 %v86, %v85
  %v88 = vld [vmem:[%s3] sm:$0xff]
  %v89 = vld [vmem:[%s3 + $0x8] sm:$0xff]
  %v90 = vld [vmem:[%s3 + $0x10] sm:$0xff]
  %v91 = vld [vmem:[%s3 + $0x18] sm:$0xff]
  %v92 = vld [vmem:[%s3 + $0x20] sm:$0xff]
  %v93 = vld [vmem:[%s3 + $0x28] sm:$0xff]
  %v94 = vld [vmem:[%s3 + $0x30] sm:$0xff]
  %v95 = vld [vmem:[%s3 + $0x38] sm:$0xff]
  %v96 = vld [vmem:[%s3 + $0x40] sm:$0xff]
  %v97 = vld [vmem:[%s3 + $0x48] sm:$0xff]
  %v98 = vld [vmem:[%s3 + $0x50] sm:$0xff]
  %v99 = vld [vmem:[%s3 + $0x58] sm:$0xff]
  %v100 = vld [vmem:[%s3 + $0x60] sm:$0xff]
  %v101 = vld [vmem:[%s3 + $0x68] sm:$0xff]
  %v102 = vld [vmem:[%s3 + $0x70] sm:$0xff]
  %v103 = vld [vmem:[%s3 + $0x78] sm:$0xff]
  %v104 = vld [vmem:[%s4] sm:$0x3]
  %v106 = vlaneseq
  %v107 = vshrl.u32 %v106, 7
  %v108 = vsub.s32 0, %v107
  %v109 = vrot.slane %v104, %v108
  %v110 = vlaneseq
  %v111 = vshrl.u32 %v110, 7
  %v112 = vsub.s32 1, %v111
  %v113 = vrot.slane %v104, %v112
  %v132 = vunpack.c.l.b16 %v88
  %v133 = vunpack.c.h.b16 %v88
  %v134 = vunpack.c.l.b16 %v89
  %v135 = vunpack.c.h.b16 %v89
  %v136 = vunpack.c.l.b16 %v90
  %v137 = vunpack.c.h.b16 %v90
  %v138 = vunpack.c.l.b16 %v91
  %v139 = vunpack.c.h.b16 %v91
  %v140 = vunpack.c.l.b16 %v92
  %v141 = vunpack.c.h.b16 %v92
  %v142 = vunpack.c.l.b16 %v93
  %v143 = vunpack.c.h.b16 %v93
  %v144 = vunpack.c.l.b16 %v94
  %v145 = vunpack.c.h.b16 %v94
  %v146 = vunpack.c.l.b16 %v95
  %v147 = vunpack.c.h.b16 %v95
  %v148 = vunpack.c.l.b16 %v96
  %v149 = vunpack.c.h.b16 %v96
  %v150 = vunpack.c.l.b16 %v97
  %v151 = vunpack.c.h.b16 %v97
  %v152 = vunpack.c.l.b16 %v98
  %v153 = vunpack.c.h.b16 %v98
  %v154 = vunpack.c.l.b16 %v99
  %v155 = vunpack.c.h.b16 %v99
  %v156 = vunpack.c.l.b16 %v100
  %v157 = vunpack.c.h.b16 %v100
  %v158 = vunpack.c.l.b16 %v101
  %v159 = vunpack.c.h.b16 %v101
  %v160 = vunpack.c.l.b16 %v102
  %v161 = vunpack.c.h.b16 %v102
  %v162 = vunpack.c.l.b16 %v103
  %v163 = vunpack.c.h.b16 %v103
  %v164 = vpack.c.b16 %v134, %v132
  %v165 = vpack.c.b16 %v135, %v133
  %v166 = vpack.c.b16 %v138, %v136
  %v167 = vpack.c.b16 %v139, %v137
  %v168 = vpack.c.b16 %v142, %v140
  %v169 = vpack.c.b16 %v143, %v141
  %v170 = vpack.c.b16 %v146, %v144
  %v171 = vpack.c.b16 %v147, %v145
  %v172 = vpack.c.b16 %v150, %v148
  %v173 = vpack.c.b16 %v151, %v149
  %v174 = vpack.c.b16 %v154, %v152
  %v175 = vpack.c.b16 %v155, %v153
  %v176 = vpack.c.b16 %v158, %v156
  %v177 = vpack.c.b16 %v159, %v157
  %v178 = vpack.c.b16 %v162, %v160
  %v179 = vpack.c.b16 %v163, %v161
  %196 = vmatprep.subr.bf16.mxu0 %v165
  %197 = vmatpush1.bf16.msra.mxu0 %v164
  %198 = vmatprep.subr.bf16.mxu0 %v167
  %199 = vmatpush1.bf16.msra.mxu0 %v166
  %200 = vmatprep.subr.bf16.mxu0 %v169
  %201 = vmatpush1.bf16.msra.mxu0 %v168
  %202 = vmatprep.subr.bf16.mxu0 %v171
  %203 = vmatpush1.bf16.msra.mxu0 %v170
  %204 = vmatprep.subr.bf16.mxu0 %v173
  %205 = vmatpush1.bf16.msra.mxu0 %v172
  %206 = vmatprep.subr.bf16.mxu0 %v175
  %207 = vmatpush1.bf16.msra.mxu0 %v174
  %208 = vmatprep.subr.bf16.mxu0 %v177
  %209 = vmatpush1.bf16.msra.mxu0 %v176
  %210 = vmatprep.subr.bf16.mxu0 %v179
  %211 = vmatpush1.bf16.msra.mxu0 %v178
  %212 = vmatprep.subr.bf16.mxu0 0
  %213 = vmatpush1.bf16.msra.mxu0 0
  %214 = vmatprep.subr.bf16.mxu0 0
  %215 = vmatpush1.bf16.msra.mxu0 0
  %216 = vmatprep.subr.bf16.mxu0 0
  %217 = vmatpush1.bf16.msra.mxu0 0
  %218 = vmatprep.subr.bf16.mxu0 0
  %219 = vmatpush1.bf16.msra.mxu0 0
  %220 = vmatprep.subr.bf16.mxu0 0
  %221 = vmatpush1.bf16.msra.mxu0 0
  %222 = vmatprep.subr.bf16.mxu0 0
  %223 = vmatpush1.bf16.msra.mxu0 0
  %224 = vmatprep.subr.bf16.mxu0 0
  %225 = vmatpush1.bf16.msra.mxu0 0
  %226 = vmatprep.subr.bf16.mxu0 0
  %227 = vmatpush1.bf16.msra.mxu0 0
  %228 = vmatprep.mubr.bf16.mxu0 0
  %229 = vmatmul.mubr.bf16.gmra.mrb[0].mxu0 %v87
  %v230 = vpop.f32.mrb[0].mxu0
  %v231 = vadd.f32 %v109, %v230
  %v232 = vpop.f32.mrb[0].mxu0
  %v233 = vadd.f32 %v113, %v232
  %v234 = vpop.f32.mrb[0].mxu0
  %v235 = vadd.f32 %v109, %v234
  %v236 = vpop.f32.mrb[0].mxu0
  %v237 = vadd.f32 %v113, %v236
  %238 = vdwg.mxu0
  %v239 = vmax.f32 %v231, 0.0
  %v240 = vmax.f32 %v233, 0.0
  %v241 = vmax.f32 %v235, 0.0
  %v242 = vmax.f32 %v237, 0.0
  %v243 = vpack.c.bf16 %v241, %v239
  %v244 = vpack.c.bf16 %v242, %v240
  %v245 = vld [vmem:[%s5] sm:$0xf]
  %v246 = vld [vmem:[%s5 + $0x4] sm:$0xf]
  %v247 = vld [vmem:[%s5 + $0x8] sm:$0xf]
  %v248 = vld [vmem:[%s5 + $0xc] sm:$0xf]
  %v249 = vld [vmem:[%s5 + $0x10] sm:$0xf]
  %v250 = vld [vmem:[%s5 + $0x14] sm:$0xf]
  %v251 = vld [vmem:[%s5 + $0x18] sm:$0xf]
  %v252 = vld [vmem:[%s5 + $0x1c] sm:$0xf]
  %v253 = vld [vmem:[%s5 + $0x20] sm:$0xf]
  %v254 = vld [vmem:[%s5 + $0x24] sm:$0xf]
  %v255 = vld [vmem:[%s5 + $0x28] sm:$0xf]
  %v256 = vld [vmem:[%s5 + $0x2c] sm:$0xf]
  %v257 = vld [vmem:[%s5 + $0x30] sm:$0xf]
  %v258 = vld [vmem:[%s5 + $0x34] sm:$0xf]
  %v259 = vld [vmem:[%s5 + $0x38] sm:$0xf]
  %v260 = vld [vmem:[%s5 + $0x3c] sm:$0xf]
  %v261 = vld [vmem:[%s5 + $0x40] sm:$0xf]
  %v262 = vld [vmem:[%s5 + $0x44] sm:$0xf]
  %v263 = vld [vmem:[%s5 + $0x48] sm:$0xf]
  %v264 = vld [vmem:[%s5 + $0x4c] sm:$0xf]
  %v265 = vld [vmem:[%s5 + $0x50] sm:$0xf]
  %v266 = vld [vmem:[%s5 + $0x54] sm:$0xf]
  %v267 = vld [vmem:[%s5 + $0x58] sm:$0xf]
  %v268 = vld [vmem:[%s5 + $0x5c] sm:$0xf]
  %v269 = vld [vmem:[%s5 + $0x60] sm:$0xf]
  %v270 = vld [vmem:[%s5 + $0x64] sm:$0xf]
  %v271 = vld [vmem:[%s5 + $0x68] sm:$0xf]
  %v272 = vld [vmem:[%s5 + $0x6c] sm:$0xf]
  %v273 = vld [vmem:[%s5 + $0x70] sm:$0xf]
  %v274 = vld [vmem:[%s5 + $0x74] sm:$0xf]
  %v275 = vld [vmem:[%s5 + $0x78] sm:$0xf]
  %v276 = vld [vmem:[%s5 + $0x7c] sm:$0xf]
  %v277 = vld [vmem:[%s6] sm:$0x1]
  %v279 = vlaneseq
  %v280 = vshrl.u32 %v279, 7
  %v281 = vsub.s32 0, %v280
  %v282 = vrot.slane %v277, %v281
  %v316 = vunpack.c.l.b16 %v245
  %v317 = vunpack.c.l.b16 %v246
  %v318 = vunpack.c.l.b16 %v247
  %v319 = vunpack.c.l.b16 %v248
  %v320 = vunpack.c.l.b16 %v249
  %v321 = vunpack.c.l.b16 %v250
  %v322 = vunpack.c.l.b16 %v251
  %v323 = vunpack.c.l.b16 %v252
  %v324 = vunpack.c.l.b16 %v253
  %v325 = vunpack.c.l.b16 %v254
  %v326 = vunpack.c.l.b16 %v255
  %v327 = vunpack.c.l.b16 %v256
  %v328 = vunpack.c.l.b16 %v257
  %v329 = vunpack.c.l.b16 %v258
  %v330 = vunpack.c.l.b16 %v259
  %v331 = vunpack.c.l.b16 %v260
  %v332 = vunpack.c.l.b16 %v261
  %v333 = vunpack.c.l.b16 %v262
  %v334 = vunpack.c.l.b16 %v263
  %v335 = vunpack.c.l.b16 %v264
  %v336 = vunpack.c.l.b16 %v265
  %v337 = vunpack.c.l.b16 %v266
  %v338 = vunpack.c.l.b16 %v267
  %v339 = vunpack.c.l.b16 %v268
  %v340 = vunpack.c.l.b16 %v269
  %v341 = vunpack.c.l.b16 %v270
  %v342 = vunpack.c.l.b16 %v271
  %v343 = vunpack.c.l.b16 %v272
  %v344 = vunpack.c.l.b16 %v273
  %v345 = vunpack.c.l.b16 %v274
  %v346 = vunpack.c.l.b16 %v275
  %v347 = vunpack.c.l.b16 %v276
  %v348 = vpack.c.b16 %v317, %v316
  %v349 = vpack.c.b16 %v319, %v318
  %v350 = vpack.c.b16 %v321, %v320
  %v351 = vpack.c.b16 %v323, %v322
  %v352 = vpack.c.b16 %v325, %v324
  %v353 = vpack.c.b16 %v327, %v326
  %v354 = vpack.c.b16 %v329, %v328
  %v355 = vpack.c.b16 %v331, %v330
  %v356 = vpack.c.b16 %v333, %v332
  %v357 = vpack.c.b16 %v335, %v334
  %v358 = vpack.c.b16 %v337, %v336
  %v359 = vpack.c.b16 %v339, %v338
  %v360 = vpack.c.b16 %v341, %v340
  %v361 = vpack.c.b16 %v343, %v342
  %v362 = vpack.c.b16 %v345, %v344
  %v363 = vpack.c.b16 %v347, %v346
  %380 = vmatprep.subr.bf16.mxu0 0
  %381 = vmatpush1.bf16.msra.mxu0 %v348
  %382 = vmatprep.subr.bf16.mxu0 0
  %383 = vmatpush1.bf16.msra.mxu0 %v349
  %384 = vmatprep.subr.bf16.mxu0 0
  %385 = vmatpush1.bf16.msra.mxu0 %v350
  %386 = vmatprep.subr.bf16.mxu0 0
  %387 = vmatpush1.bf16.msra.mxu0 %v351
  %388 = vmatprep.subr.bf16.mxu0 0
  %389 = vmatpush1.bf16.msra.mxu0 %v352
  %390 = vmatprep.subr.bf16.mxu0 0
  %391 = vmatpush1.bf16.msra.mxu0 %v353
  %392 = vmatprep.subr.bf16.mxu0 0
  %393 = vmatpush1.bf16.msra.mxu0 %v354
  %394 = vmatprep.subr.bf16.mxu0 0
  %395 = vmatpush1.bf16.msra.mxu0 %v355
  %396 = vmatprep.subr.bf16.mxu0 0
  %397 = vmatpush1.bf16.msra.mxu0 %v356
  %398 = vmatprep.subr.bf16.mxu0 0
  %399 = vmatpush1.bf16.msra.mxu0 %v357
  %400 = vmatprep.subr.bf16.mxu0 0
  %401 = vmatpush1.bf16.msra.mxu0 %v358
  %402 = vmatprep.subr.bf16.mxu0 0
  %403 = vmatpush1.bf16.msra.mxu0 %v359
  %404 = vmatprep.subr.bf16.mxu0 0
  %405 = vmatpush1.bf16.msra.mxu0 %v360
  %406 = vmatprep.subr.bf16.mxu0 0
  %407 = vmatpush1.bf16.msra.mxu0 %v361
  %408 = vmatprep.subr.bf16.mxu0 0
  %409 = vmatpush1.bf16.msra.mxu0 %v362
  %410 = vmatprep.subr.bf16.mxu0 0
  %411 = vmatpush1.bf16.msra.mxu0 %v363
  %412 = vmatprep.mubr.bf16.mxu0 %v244
  %413 = vmatmul.mubr.bf16.gmra.mrb[0].mxu0 %v243
  %v414 = vpop.f32.mrb[0].mxu0
  %v415 = vadd.f32 %v282, %v414
  %v416 = vpop.f32.mrb[0].mxu0
  %v417 = vpop.f32.mrb[0].mxu0
  %v418 = vadd.f32 %v282, %v417
  %v419 = vpop.f32.mrb[0].mxu0
  %420 = vdwg.mxu0
  %v421 = vadd.f32 %v415, %v29
  %v422 = vadd.f32 %v418, %v30
  %v423 = vpack.c.bf16 %v422, %v421
  %v425 = vunpack.c.l.b16 %v423
  %v426 = vunpack.c.h.b16 %v423
  %v427 = vpack.c.b16 %v425, %v425
  %v428 = vpack.c.b16 %v426, %v426
  %431 = vst [vmem:[%s7] sm:$0xf] %v427
  %432 = vst [vmem:[%s7 + $0x4] sm:$0xf] %v428
  // Predicated region
  $region30: #{transformer_forward.29} parent=0 // pred_check
    _
  $region31: #{transformer_forward.29} parent=0 // pred_check_branch
    %434 = sbr.rel (0) target = $region33
  $region32: #{transformer_forward.29} parent=0 // pred_region
    _
  $region33: #{transformer_forward.29} parent=0 // pred_fallthru
    _
  // Predicated region
  $region34: #{transformer_forward.29} parent=0 // pred_check
    _
  $region35: #{transformer_forward.29} parent=0 // pred_check_branch
    %436 = sbr.rel (0) target = $region37
  $region36: #{transformer_forward.29} parent=0 // pred_region
    _
  $region37: #{transformer_forward.29} parent=0 // pred_fallthru
    _

// kernel: transformer_forward.51
$region0: #{transformer_forward.51}
  #allocation0 [shape = 'u32[]', space=smem, size = 0x4, offset = 0x4, fixed_abs, tag = 'smem constant byte address 0x4 - core index']
  #allocation1 [shape = 'u32[144,128]{1,0:T(1,128)}', space=vmem, size = 0x12000, scoped, tag = 'internal scratch']
  %s0 = inlined_call_operand.vmem [shape: bf16[16,128], index: 0, kind: input, shape index: {}]
  %s1 = inlined_call_operand.vmem [shape: f32[1,128], index: 1, kind: input, shape index: {}]
  %s2 = inlined_call_operand.vmem [shape: f32[1,128], index: 2, kind: input, shape index: {}]
  %s3 = inlined_call_operand.hbm [shape: f32[16,128], index: 3, kind: output, shape index: {}]
  %s4 = sld [smem:[#allocation0]]
  $region22: #{transformer_forward.51} parent=0
    _
  %s6 = ssub.s32 1, %s4
  %s7 = scalar_select 0, %s6, %s4
  $region1: #{transformer_forward.51} parent=0
    #allocation2 [shape = 'u8[8192]{0}', space=vmem, size = 0x2000, scoped, tag = 'output window, operand 0, single buffered']
    #allocation3 [shape = 's32[1]{0}', space=sflag, size = 0x4, scoped, tag = 'scoped memory for transformer_forward.51']
    %8 = vsyncpa [#allocation3], 0
    // Predicated region
    $region2: #{transformer_forward.51} parent=1 // pred_check
      _
    $region3: #{transformer_forward.51} parent=1 // pred_check_branch
      %10 = sbr.rel (0) target = $region5
    $region4: #{transformer_forward.51} parent=1 // pred_region
      _
    $region5: #{transformer_forward.51} parent=1 // pred_fallthru
      _
    // Predicated region
    $region6: #{transformer_forward.51} parent=1 // pred_check
      _
    $region7: #{transformer_forward.51} parent=1 // pred_check_branch
      %12 = sbr.rel (0) target = $region9
    $region8: #{transformer_forward.51} parent=1 // pred_region
      _
    $region9: #{transformer_forward.51} parent=1 // pred_fallthru
      _
    // Predicated region
    $region10: #{transformer_forward.51} parent=1 // pred_check
      _
    $region11: #{transformer_forward.51} parent=1 // pred_check_branch
      %14 = sbr.rel (0) target = $region13
    $region12: #{transformer_forward.51} parent=1 // pred_region
      _
    $region13: #{transformer_forward.51} parent=1 // pred_fallthru
      _
    %v15 = vld [vmem:[%s0] sm:$0xf]
    %v16 = vld [vmem:[%s0 + $0x4] sm:$0xf]
    %v17 = vunpack.c.l.bf16 %v15
    %v18 = vunpack.c.l.bf16 %v16
    %19 = vadd.xlane.f32.xlu0 %v17
    %v20 = vpop.xlane.xlu0 %19
    %21 = vadd.xlane.f32.xlu0 %v18
    %v22 = vpop.xlane.xlu0 %21
    %v23 = vrcp.pop 128.0
    %v24 = vmul.f32 %v20, %v23
    %v25 = vmul.f32 %v22, %v23
    %v26 = vsub.f32 %v17, %v24
    %v27 = vsub.f32 %v18, %v25
    %v28 = vmul.f32 %v26, %v26
    %v29 = vmul.f32 %v27, %v27
    %30 = vadd.xlane.f32.xlu0 %v28
    %v31 = vpop.xlane.xlu0 %30
    %32 = vadd.xlane.f32.xlu0 %v29
    %v33 = vpop.xlane.xlu0 %32
    %v34 = vrcp.pop 127.0
    %v35 = vmul.f32 %v31, %v34
    %v36 = vmul.f32 %v33, %v34
    %v37 = vld [vmem:[%s1] sm:$0x1]
    %v39 = vlaneseq
    %v40 = vshrl.u32 %v39, 7
    %v41 = vsub.s32 0, %v40
    %v42 = vrot.slane %v37, %v41
    %v44 = vmul.f32 %v42, %v26
    %v45 = vmul.f32 %v42, %v27
    %v46 = vrsqrt.pop %v35
    %v47 = vmul.f32 %v35, %v46
    %vm48 = vcmp.eq.f32.partialorder %v35, inf
    %v49 = vsel %vm48, %v35, %v47
    %vm50 = vcmp.eq.f32.partialorder %v35, 0.0
    %v51 = vand.u32 %v35, 2147483648
    %v52 = vsel %vm50, %v51, %v49
    %v53 = vrsqrt.pop %v36
    %v54 = vmul.f32 %v36, %v53
    %vm55 = vcmp.eq.f32.partialorder %v36, inf
    %v56 = vsel %vm55, %v36, %v54
    %vm57 = vcmp.eq.f32.partialorder %v36, 0.0
    %v58 = vand.u32 %v36, 2147483648
    %v59 = vsel %vm57, %v58, %v56
    %v60 = vadd.f32 %v52, 1e-06
    %v61 = vadd.f32 %v59, 1e-06
    %v62 = vrcp.pop %v60
    %v63 = vmul.f32 %v44, %v62
    %v64 = vrcp.pop %v61
    %v65 = vmul.f32 %v45, %v64
    %v66 = vld [vmem:[%s2] sm:$0x1]
    %v68 = vlaneseq
    %v69 = vshrl.u32 %v68, 7
    %v70 = vsub.s32 0, %v69
    %v71 = vrot.slane %v66, %v70
    %v73 = vadd.f32 %v63, %v71
    %v74 = vadd.f32 %v65, %v71
    %75 = vst [vmem:[#allocation2] sm:$0xff] %v73
    %76 = vst [vmem:[#allocation2 + $0x8] sm:$0xff] %v74
    // Predicated region
    $region14: #{transformer_forward.51} parent=1 // pred_check
      _
    $region15: #{transformer_forward.51} parent=1 // pred_check_branch
      %78 = sbr.rel (0) target = $region17
    $region16: #{transformer_forward.51} parent=1 // pred_region
      %s80 = ssub.s32 256, 256
      %81 = vsyncadd [#allocation3], %s80
      %s82 = sshll.u32 [#allocation2], 4
      %s83 = int_to_ptr.vmem [resolvable:$true] %s82
      %88 = dma.vmem_to_hbm [thread:$0]  %s83, 256, %s3, [#allocation3], 128, 128, 8
    $region17: #{transformer_forward.51} parent=1 // pred_fallthru
      _
    // Predicated region
    $region18: #{transformer_forward.51} parent=1 // pred_check
      _
    $region19: #{transformer_forward.51} parent=1 // pred_check_branch
      %90 = sbr.rel (0) target = $region21
    $region20: #{transformer_forward.51} parent=1 // pred_region
      %91 = dma.done [#allocation3], 256
    $region21: #{transformer_forward.51} parent=1 // pred_fallthru
      _
    %92 = vsyncpa [#allocation3], 1

</llo_original>
